<compile_context>
chip_gen: v5e
topology: v5e:2x2
jax: 0.10.0
libtpu: 0.0.40
codegen_flags: <defaults>
</compile_context>

<pallas_src>
import functools

import jax
import jax.numpy as jnp
from jax import lax
from jax.experimental import pallas as pl
from jax.experimental.pallas import tpu as pltpu


# ---------------------------------------------------------------------------
# Fused Bottleneck kernel (one batch element per grid step)
# ---------------------------------------------------------------------------
def _bottleneck_kernel(x_ref,
                       w1_ref, b1_ref,
                       w2_ref, b2_ref,
                       w3_ref, b3_ref,
                       wd_ref, bd_ref,
                       o_ref,
                       o1p_ref, *col_scratch,
                       use_im2col):
    _, H, W, Cin = x_ref.shape
    width = w1_ref.shape[1]
    Cexp = w3_ref.shape[1]
    HW = H * W

    # x tile read once from HBM (already bf16); f32 accumulation on the MXU.
    x = x_ref[...].reshape(HW, Cin).astype(jnp.bfloat16)

    # ---- downsample branch: 1x1 conv (BN scale folded into wd) + bias ----
    ident = jnp.dot(x, wd_ref[...], preferred_element_type=jnp.float32) + bd_ref[...]

    # ---- conv1 + bn1 + relu (1x1; scale folded into w1) ----
    o1 = jnp.dot(x, w1_ref[...], preferred_element_type=jnp.float32)
    o1 = jnp.maximum(o1 + b1_ref[...], 0.0)

    # Zero ONLY the 1-pixel halo border (the interior is overwritten right after,
    # so no full-buffer zero pass is needed).  Scratch is bf16.
    zrow = jnp.zeros((1, W + 2, width), o1p_ref.dtype)
    zcol = jnp.zeros((H + 2, 1, width), o1p_ref.dtype)
    o1p_ref[0:1, :, :] = zrow
    o1p_ref[H + 1:H + 2, :, :] = zrow
    o1p_ref[:, 0:1, :] = zcol
    o1p_ref[:, W + 1:W + 2, :] = zcol
    o1p_ref[1:H + 1, 1:W + 1, :] = o1.reshape(H, W, width).astype(o1p_ref.dtype)

    # ---- conv2 + bn2 + relu (3x3, pad=1) ----
    if use_im2col:
        # Lane-sparse widths: build im2col once, single big-K MXU matmul.
        col_ref = col_scratch[0]
        for kh in range(3):
            for kw in range(3):
                t = kh * 3 + kw
                col_ref[:, t * width:(t + 1) * width] = (
                    o1p_ref[kh:kh + H, kw:kw + W, :].reshape(HW, width))
        o2 = jnp.dot(col_ref[...], w2_ref[...],
                     preferred_element_type=jnp.float32)
    else:
        # Lane-dense widths: 9 shifted matmuls accumulated in f32 — no im2col
        # scratch, no extra VMEM store/reload pass.
        o2 = jnp.zeros((HW, width), jnp.float32)
        for kh in range(3):
            for kw in range(3):
                t = kh * 3 + kw
                o2 = o2 + jnp.dot(
                    o1p_ref[kh:kh + H, kw:kw + W, :].reshape(HW, width),
                    w2_ref[t * width:(t + 1) * width, :],
                    preferred_element_type=jnp.float32)
    o2 = jnp.maximum(o2 + b2_ref[...], 0.0)

    # ---- conv3 + bn3 + residual + relu (1x1, expansion; scale folded into w3) ----
    o3 = jnp.dot(o2.astype(jnp.bfloat16), w3_ref[...],
                 preferred_element_type=jnp.float32)
    o3 = jnp.maximum(o3 + b3_ref[...] + ident, 0.0)

    o_ref[...] = o3.reshape(1, H, W, Cexp).astype(o_ref.dtype)


# ---------------------------------------------------------------------------
# pallas_call wrapper (NHWC end-to-end, bf16 in / bf16 out)
# ---------------------------------------------------------------------------
def bottleneck_forward_nhwc(x_nhwc, p, *, use_im2col=None):
    N, H, W, Cin = x_nhwc.shape
    width = p["w1"].shape[1]
    Cexp = p["w3"].shape[1]
    if use_im2col is None:
        use_im2col = width < 128      # big-K im2col only for lane-sparse widths

    # HWIO (3,3,C,C) -> (9*C, C): contiguous reshape, matches im2col / tap order.
    w2_col = p["w2_hwio"].reshape(9 * width, width)

    inv = lambda n: (0, 0)            # grid-invariant weight / bias blocks
    scratch = [pltpu.VMEM((H + 2, W + 2, width), jnp.bfloat16)]   # padded conv1 out
    if use_im2col:
        scratch.append(pltpu.VMEM((H * W, 9 * width), jnp.bfloat16))  # im2col LHS

    kernel = functools.partial(_bottleneck_kernel, use_im2col=use_im2col)
    return pl.pallas_call(
        kernel,
        out_shape=jax.ShapeDtypeStruct((N, H, W, Cexp), jnp.bfloat16),
        grid_spec=pltpu.PrefetchScalarGridSpec(
            num_scalar_prefetch=0,
            grid=(N,),
            in_specs=[
                pl.BlockSpec((1, H, W, Cin), lambda n: (n, 0, 0, 0)),
                pl.BlockSpec((Cin, width), inv),
                pl.BlockSpec((1, width), inv),
                pl.BlockSpec((9 * width, width), inv),
                pl.BlockSpec((1, width), inv),
                pl.BlockSpec((width, Cexp), inv),
                pl.BlockSpec((1, Cexp), inv),
                pl.BlockSpec((Cin, Cexp), inv),
                pl.BlockSpec((1, Cexp), inv),
            ],
            out_specs=pl.BlockSpec((1, H, W, Cexp), lambda n: (n, 0, 0, 0)),
            scratch_shapes=scratch,
        ),
        compiler_params=pltpu.CompilerParams(
            dimension_semantics=("parallel",)),
    )(x_nhwc, p["w1"], p["b1"], w2_col, p["b2"],
      p["w3"], p["b3"], p["wd"], p["bd"])


def bottleneck_forward(x_nchw, p, *, use_im2col=None):
    """NCHW in / NCHW out wrapper for PyTorch-layout parity only."""
    x = jnp.transpose(x_nchw, (0, 2, 3, 1)).astype(jnp.bfloat16)   # -> NHWC bf16
    o = bottleneck_forward_nhwc(x, p, use_im2col=use_im2col)
    return jnp.transpose(o, (0, 3, 1, 2))                          # -> NCHW bf16


# ---------------------------------------------------------------------------
# Parameter setup / pure-JAX reference
# ---------------------------------------------------------------------------
def fold_bn(c):
    gamma = 1.0 + 0.05 * jnp.arange(c, dtype=jnp.float32)
    beta = 0.02 * jnp.arange(c, dtype=jnp.float32) - 0.1
    mean = 0.01 * jnp.arange(c, dtype=jnp.float32)
    var = 1.0 + 0.03 * jnp.arange(c, dtype=jnp.float32)
    scale = gamma / jnp.sqrt(var + 1e-5)
    bias = beta - mean * scale
    return scale.reshape(1, c), bias.reshape(1, c)


def make_params(key, in_ch, width, expansion=4):
    out_ch = width * expansion
    k1, k2, k3, k4 = jax.random.split(key, 4)
    # PyTorch conv weights are OIHW; convert to matmul / HWIO layouts.
    w1 = (jax.random.normal(k1, (width, in_ch, 1, 1), jnp.float32) * 0.1)[:, :, 0, 0].T
    w2_oihw = jax.random.normal(k2, (width, width, 3, 3), jnp.float32) * 0.1
    w2_hwio = jnp.transpose(w2_oihw, (2, 3, 1, 0))
    w3 = (jax.random.normal(k3, (out_ch, width, 1, 1), jnp.float32) * 0.1)[:, :, 0, 0].T
    wd = (jax.random.normal(k4, (out_ch, in_ch, 1, 1), jnp.float32) * 0.1)[:, :, 0, 0].T
    s1, b1 = fold_bn(width)
    s2, b2 = fold_bn(width)
    s3, b3 = fold_bn(out_ch)
    sd, bd = fold_bn(out_ch)
    bf = jnp.bfloat16
    # Fold BN scales into the conv weights (f32), then cast to bf16 for the MXU.
    return dict(w1=(w1 * s1).astype(bf), b1=b1,
                w2_hwio=(w2_hwio * s2.reshape(1, 1, 1, -1)).astype(bf), b2=b2,
                w3=(w3 * s3).astype(bf), b3=b3,
                wd=(wd * sd).astype(bf), bd=bd)


def reference_forward(x_nchw, p):
    """Pure-JAX (XLA) reference: bf16 operands / f32 accumulation, same folding."""
    x = jnp.transpose(x_nchw, (0, 2, 3, 1)).astype(jnp.bfloat16)
    dn = ("NHWC", "HWIO", "NHWC")
    bf = jnp.bfloat16

    def pw(t, w, b):
        w4 = w.reshape(1, 1, *w.shape)
        y = lax.conv_general_dilated(t.astype(bf), w4, (1, 1), "VALID",
                                     dimension_numbers=dn,
                                     preferred_element_type=jnp.float32)
        return y + b.reshape(1, 1, 1, -1)

    ident = pw(x, p["wd"], p["bd"])
    o = jnp.maximum(pw(x, p["w1"], p["b1"]), 0.0)
    o = lax.conv_general_dilated(o.astype(bf), p["w2_hwio"],
                                 (1, 1), ((1, 1), (1, 1)),
                                 dimension_numbers=dn,
                                 preferred_element_type=jnp.float32)
    o = jnp.maximum(o + p["b2"].reshape(1, 1, 1, -1), 0.0)
    o = jnp.maximum(pw(o, p["w3"], p["b3"]) + ident, 0.0)
    return jnp.transpose(o, (0, 3, 1, 2)).astype(bf)


if __name__ == "__main__":
    key = jax.random.PRNGKey(0)
    kx, kp = jax.random.split(key)

    N, Cin, H, W = 2, 4, 16, 16          # NCHW, like the PyTorch module
    width, expansion = 4, 4              # Bottleneck(in_channel=4, out_channle=4)
    x = jax.random.normal(kx, (N, Cin, H, W), jnp.float32)
    params = make_params(kp, Cin, width, expansion)

    ref = jax.block_until_ready(reference_forward(x, params)).astype(jnp.float32)

    # Exercise and verify BOTH conv2 strategies (im2col for lane-sparse widths,
    # per-tap accumulation used at production widths).
    for im2col in (True, False):
        out = jax.block_until_ready(
            bottleneck_forward(x, params, use_im2col=im2col))
        assert out.shape == (N, width * expansion, H, W)
        out_f32 = out.astype(jnp.float32)
        assert jnp.allclose(out_f32, ref, atol=2e-2, rtol=2e-2), \
            f"im2col={im2col} max err {jnp.max(jnp.abs(out_f32 - ref))}"

    print("KERNEL_OK")
</pallas_src>

<mosaic_0001>
module attributes {stable_mosaic.version = 11 : i64} {
  func.func @_bottleneck_kernel(%arg0: i32, %arg1: memref<1x16x16x4xbf16, #tpu.memory_space<vmem>>, %arg2: memref<4x4xbf16, #tpu.memory_space<vmem>>, %arg3: memref<1x4xf32, #tpu.memory_space<vmem>>, %arg4: memref<36x4xbf16, #tpu.memory_space<vmem>>, %arg5: memref<1x4xf32, #tpu.memory_space<vmem>>, %arg6: memref<4x16xbf16, #tpu.memory_space<vmem>>, %arg7: memref<1x16xf32, #tpu.memory_space<vmem>>, %arg8: memref<4x16xbf16, #tpu.memory_space<vmem>>, %arg9: memref<1x16xf32, #tpu.memory_space<vmem>>, %arg10: memref<1x16x16x16xbf16, #tpu.memory_space<vmem>>, %arg11: memref<18x18x4xbf16, #tpu.memory_space<vmem>>, %arg12: memref<256x36xbf16, #tpu.memory_space<vmem>>) attributes {dimension_semantics = [#tpu.dimension_semantics<parallel>], iteration_bounds = array<i64: 2>, scalar_prefetch = 0 : i64, scratch_operands = 2 : i64, tpu.core_type = #tpu.core_type<tc>, window_params = [{transform_indices = @transform_0, window_bounds = array<i64: 1, 16, 16, 4>}, {pipeline_mode = #tpu.pipeline_mode<synchronous>, transform_indices = @transform_1, window_bounds = array<i64: 4, 4>}, {pipeline_mode = #tpu.pipeline_mode<synchronous>, transform_indices = @transform_2, window_bounds = array<i64: 1, 4>}, {pipeline_mode = #tpu.pipeline_mode<synchronous>, transform_indices = @transform_3, window_bounds = array<i64: 36, 4>}, {pipeline_mode = #tpu.pipeline_mode<synchronous>, transform_indices = @transform_4, window_bounds = array<i64: 1, 4>}, {pipeline_mode = #tpu.pipeline_mode<synchronous>, transform_indices = @transform_5, window_bounds = array<i64: 4, 16>}, {pipeline_mode = #tpu.pipeline_mode<synchronous>, transform_indices = @transform_6, window_bounds = array<i64: 1, 16>}, {pipeline_mode = #tpu.pipeline_mode<synchronous>, transform_indices = @transform_7, window_bounds = array<i64: 4, 16>}, {pipeline_mode = #tpu.pipeline_mode<synchronous>, transform_indices = @transform_8, window_bounds = array<i64: 1, 16>}, {transform_indices = @transform_9, window_bounds = array<i64: 1, 16, 16, 16>}]} {
    %c0 = arith.constant 0 : index
    %c0_0 = arith.constant 0 : index
    %c0_1 = arith.constant 0 : index
    %c0_2 = arith.constant 0 : index
    %0 = vector.load %arg1[%c0, %c0_0, %c0_1, %c0_2] : memref<1x16x16x4xbf16, #tpu.memory_space<vmem>>, vector<1x16x16x4xbf16>
    %1 = vector.shape_cast %0 : vector<1x16x16x4xbf16> to vector<256x4xbf16>
    %c0_3 = arith.constant 0 : index
    %c0_4 = arith.constant 0 : index
    %2 = vector.load %arg8[%c0_3, %c0_4] : memref<4x16xbf16, #tpu.memory_space<vmem>>, vector<4x16xbf16>
    %cst = arith.constant dense<0.000000e+00> : vector<256x16xf32>
    %3 = tpu.matmul %1, %2, %cst {dimension_numbers = #tpu.dot_dimension_numbers<[1], [0], [0], [1], [0, 0, 1, 1], [], []>} : vector<256x4xbf16>, vector<4x16xbf16>, vector<256x16xf32> -> vector<256x16xf32>
    %c0_5 = arith.constant 0 : index
    %c0_6 = arith.constant 0 : index
    %4 = vector.load %arg9[%c0_5, %c0_6] : memref<1x16xf32, #tpu.memory_space<vmem>>, vector<1x16xf32>
    %5 = vector.broadcast %4 : vector<1x16xf32> to vector<256x16xf32>
    %6 = arith.addf %3, %5 : vector<256x16xf32>
    %c0_7 = arith.constant 0 : index
    %c0_8 = arith.constant 0 : index
    %7 = vector.load %arg2[%c0_7, %c0_8] : memref<4x4xbf16, #tpu.memory_space<vmem>>, vector<4x4xbf16>
    %cst_9 = arith.constant dense<0.000000e+00> : vector<256x4xf32>
    %8 = tpu.matmul %1, %7, %cst_9 {dimension_numbers = #tpu.dot_dimension_numbers<[1], [0], [0], [1], [0, 0, 1, 1], [], []>} : vector<256x4xbf16>, vector<4x4xbf16>, vector<256x4xf32> -> vector<256x4xf32>
    %c0_10 = arith.constant 0 : index
    %c0_11 = arith.constant 0 : index
    %9 = vector.load %arg3[%c0_10, %c0_11] : memref<1x4xf32, #tpu.memory_space<vmem>>, vector<1x4xf32>
    %10 = vector.broadcast %9 : vector<1x4xf32> to vector<256x4xf32>
    %11 = arith.addf %8, %10 : vector<256x4xf32>
    %cst_12 = arith.constant 0.000000e+00 : f32
    %12 = vector.broadcast %cst_12 : f32 to vector<256x4xf32>
    %13 = arith.maximumf %11, %12 : vector<256x4xf32>
    %cst_13 = arith.constant 0.000000e+00 : bf16
    %14 = vector.broadcast %cst_13 : bf16 to vector<1x18x4xbf16>
    %cst_14 = arith.constant 0.000000e+00 : bf16
    %15 = vector.broadcast %cst_14 : bf16 to vector<18x1x4xbf16>
    %c0_15 = arith.constant 0 : index
    %c0_16 = arith.constant 0 : index
    %c0_17 = arith.constant 0 : index
    %16 = vector.load %arg11[%c0_15, %c0_16, %c0_17] : memref<18x18x4xbf16, #tpu.memory_space<vmem>>, vector<1x18x4xbf16>
    tpu.vector_store %arg11[%c0_15, %c0_16, %c0_17], %14 {strides = array<i32>} : memref<18x18x4xbf16, #tpu.memory_space<vmem>>, vector<1x18x4xbf16>,
    %c17 = arith.constant 17 : index
    %c0_18 = arith.constant 0 : index
    %c0_19 = arith.constant 0 : index
    %17 = vector.load %arg11[%c17, %c0_18, %c0_19] : memref<18x18x4xbf16, #tpu.memory_space<vmem>>, vector<1x18x4xbf16>
    tpu.vector_store %arg11[%c17, %c0_18, %c0_19], %14 {strides = array<i32>} : memref<18x18x4xbf16, #tpu.memory_space<vmem>>, vector<1x18x4xbf16>,
    %c0_20 = arith.constant 0 : index
    %c0_21 = arith.constant 0 : index
    %c0_22 = arith.constant 0 : index
    %18 = vector.load %arg11[%c0_20, %c0_21, %c0_22] : memref<18x18x4xbf16, #tpu.memory_space<vmem>>, vector<18x1x4xbf16>
    tpu.vector_store %arg11[%c0_20, %c0_21, %c0_22], %15 {strides = array<i32>} : memref<18x18x4xbf16, #tpu.memory_space<vmem>>, vector<18x1x4xbf16>,
    %c0_23 = arith.constant 0 : index
    %c17_24 = arith.constant 17 : index
    %c0_25 = arith.constant 0 : index
    %19 = vector.load %arg11[%c0_23, %c17_24, %c0_25] : memref<18x18x4xbf16, #tpu.memory_space<vmem>>, vector<18x1x4xbf16>
    tpu.vector_store %arg11[%c0_23, %c17_24, %c0_25], %15 {strides = array<i32>} : memref<18x18x4xbf16, #tpu.memory_space<vmem>>, vector<18x1x4xbf16>,
    %20 = vector.shape_cast %13 : vector<256x4xf32> to vector<16x16x4xf32>
    %21 = arith.truncf %20 : vector<16x16x4xf32> to vector<16x16x4xbf16>
    %c1 = arith.constant 1 : index
    %c1_26 = arith.constant 1 : index
    %c0_27 = arith.constant 0 : index
    %22 = vector.load %arg11[%c1, %c1_26, %c0_27] : memref<18x18x4xbf16, #tpu.memory_space<vmem>>, vector<16x16x4xbf16>
    tpu.vector_store %arg11[%c1, %c1_26, %c0_27], %21 {strides = array<i32>} : memref<18x18x4xbf16, #tpu.memory_space<vmem>>, vector<16x16x4xbf16>,
    %c0_28 = arith.constant 0 : index
    %c0_29 = arith.constant 0 : index
    %c0_30 = arith.constant 0 : index
    %23 = vector.load %arg11[%c0_28, %c0_29, %c0_30] : memref<18x18x4xbf16, #tpu.memory_space<vmem>>, vector<16x16x4xbf16>
    %24 = vector.shape_cast %23 : vector<16x16x4xbf16> to vector<256x4xbf16>
    %c0_31 = arith.constant 0 : index
    %c0_32 = arith.constant 0 : index
    %25 = vector.load %arg12[%c0_31, %c0_32] : memref<256x36xbf16, #tpu.memory_space<vmem>>, vector<256x4xbf16>
    tpu.vector_store %arg12[%c0_31, %c0_32], %24 {strides = array<i32>} : memref<256x36xbf16, #tpu.memory_space<vmem>>, vector<256x4xbf16>,
    %c0_33 = arith.constant 0 : index
    %c1_34 = arith.constant 1 : index
    %c0_35 = arith.constant 0 : index
    %26 = vector.load %arg11[%c0_33, %c1_34, %c0_35] : memref<18x18x4xbf16, #tpu.memory_space<vmem>>, vector<16x16x4xbf16>
    %27 = vector.shape_cast %26 : vector<16x16x4xbf16> to vector<256x4xbf16>
    %c0_36 = arith.constant 0 : index
    %c4 = arith.constant 4 : index
    %28 = vector.load %arg12[%c0_36, %c4] : memref<256x36xbf16, #tpu.memory_space<vmem>>, vector<256x4xbf16>
    tpu.vector_store %arg12[%c0_36, %c4], %27 {strides = array<i32>} : memref<256x36xbf16, #tpu.memory_space<vmem>>, vector<256x4xbf16>,
    %c0_37 = arith.constant 0 : index
    %c2 = arith.constant 2 : index
    %c0_38 = arith.constant 0 : index
    %29 = vector.load %arg11[%c0_37, %c2, %c0_38] : memref<18x18x4xbf16, #tpu.memory_space<vmem>>, vector<16x16x4xbf16>
    %30 = vector.shape_cast %29 : vector<16x16x4xbf16> to vector<256x4xbf16>
    %c0_39 = arith.constant 0 : index
    %c8 = arith.constant 8 : index
    %31 = vector.load %arg12[%c0_39, %c8] : memref<256x36xbf16, #tpu.memory_space<vmem>>, vector<256x4xbf16>
    tpu.vector_store %arg12[%c0_39, %c8], %30 {strides = array<i32>} : memref<256x36xbf16, #tpu.memory_space<vmem>>, vector<256x4xbf16>,
    %c1_40 = arith.constant 1 : index
    %c0_41 = arith.constant 0 : index
    %c0_42 = arith.constant 0 : index
    %32 = vector.load %arg11[%c1_40, %c0_41, %c0_42] : memref<18x18x4xbf16, #tpu.memory_space<vmem>>, vector<16x16x4xbf16>
    %33 = vector.shape_cast %32 : vector<16x16x4xbf16> to vector<256x4xbf16>
    %c0_43 = arith.constant 0 : index
    %c12 = arith.constant 12 : index
    %34 = vector.load %arg12[%c0_43, %c12] : memref<256x36xbf16, #tpu.memory_space<vmem>>, vector<256x4xbf16>
    tpu.vector_store %arg12[%c0_43, %c12], %33 {strides = array<i32>} : memref<256x36xbf16, #tpu.memory_space<vmem>>, vector<256x4xbf16>,
    %c1_44 = arith.constant 1 : index
    %c1_45 = arith.constant 1 : index
    %c0_46 = arith.constant 0 : index
    %35 = vector.load %arg11[%c1_44, %c1_45, %c0_46] : memref<18x18x4xbf16, #tpu.memory_space<vmem>>, vector<16x16x4xbf16>
    %36 = vector.shape_cast %35 : vector<16x16x4xbf16> to vector<256x4xbf16>
    %c0_47 = arith.constant 0 : index
    %c16 = arith.constant 16 : index
    %37 = vector.load %arg12[%c0_47, %c16] : memref<256x36xbf16, #tpu.memory_space<vmem>>, vector<256x4xbf16>
    tpu.vector_store %arg12[%c0_47, %c16], %36 {strides = array<i32>} : memref<256x36xbf16, #tpu.memory_space<vmem>>, vector<256x4xbf16>,
    %c1_48 = arith.constant 1 : index
    %c2_49 = arith.constant 2 : index
    %c0_50 = arith.constant 0 : index
    %38 = vector.load %arg11[%c1_48, %c2_49, %c0_50] : memref<18x18x4xbf16, #tpu.memory_space<vmem>>, vector<16x16x4xbf16>
    %39 = vector.shape_cast %38 : vector<16x16x4xbf16> to vector<256x4xbf16>
    %c0_51 = arith.constant 0 : index
    %c20 = arith.constant 20 : index
    %40 = vector.load %arg12[%c0_51, %c20] : memref<256x36xbf16, #tpu.memory_space<vmem>>, vector<256x4xbf16>
    tpu.vector_store %arg12[%c0_51, %c20], %39 {strides = array<i32>} : memref<256x36xbf16, #tpu.memory_space<vmem>>, vector<256x4xbf16>,
    %c2_52 = arith.constant 2 : index
    %c0_53 = arith.constant 0 : index
    %c0_54 = arith.constant 0 : index
    %41 = vector.load %arg11[%c2_52, %c0_53, %c0_54] : memref<18x18x4xbf16, #tpu.memory_space<vmem>>, vector<16x16x4xbf16>
    %42 = vector.shape_cast %41 : vector<16x16x4xbf16> to vector<256x4xbf16>
    %c0_55 = arith.constant 0 : index
    %c24 = arith.constant 24 : index
    %43 = vector.load %arg12[%c0_55, %c24] : memref<256x36xbf16, #tpu.memory_space<vmem>>, vector<256x4xbf16>
    tpu.vector_store %arg12[%c0_55, %c24], %42 {strides = array<i32>} : memref<256x36xbf16, #tpu.memory_space<vmem>>, vector<256x4xbf16>,
    %c2_56 = arith.constant 2 : index
    %c1_57 = arith.constant 1 : index
    %c0_58 = arith.constant 0 : index
    %44 = vector.load %arg11[%c2_56, %c1_57, %c0_58] : memref<18x18x4xbf16, #tpu.memory_space<vmem>>, vector<16x16x4xbf16>
    %45 = vector.shape_cast %44 : vector<16x16x4xbf16> to vector<256x4xbf16>
    %c0_59 = arith.constant 0 : index
    %c28 = arith.constant 28 : index
    %46 = vector.load %arg12[%c0_59, %c28] : memref<256x36xbf16, #tpu.memory_space<vmem>>, vector<256x4xbf16>
    tpu.vector_store %arg12[%c0_59, %c28], %45 {strides = array<i32>} : memref<256x36xbf16, #tpu.memory_space<vmem>>, vector<256x4xbf16>,
    %c2_60 = arith.constant 2 : index
    %c2_61 = arith.constant 2 : index
    %c0_62 = arith.constant 0 : index
    %47 = vector.load %arg11[%c2_60, %c2_61, %c0_62] : memref<18x18x4xbf16, #tpu.memory_space<vmem>>, vector<16x16x4xbf16>
    %48 = vector.shape_cast %47 : vector<16x16x4xbf16> to vector<256x4xbf16>
    %c0_63 = arith.constant 0 : index
    %c32 = arith.constant 32 : index
    %49 = vector.load %arg12[%c0_63, %c32] : memref<256x36xbf16, #tpu.memory_space<vmem>>, vector<256x4xbf16>
    tpu.vector_store %arg12[%c0_63, %c32], %48 {strides = array<i32>} : memref<256x36xbf16, #tpu.memory_space<vmem>>, vector<256x4xbf16>,
    %c0_64 = arith.constant 0 : index
    %c0_65 = arith.constant 0 : index
    %50 = vector.load %arg12[%c0_64, %c0_65] : memref<256x36xbf16, #tpu.memory_space<vmem>>, vector<256x36xbf16>
    %c0_66 = arith.constant 0 : index
    %c0_67 = arith.constant 0 : index
    %51 = vector.load %arg4[%c0_66, %c0_67] : memref<36x4xbf16, #tpu.memory_space<vmem>>, vector<36x4xbf16>
    %cst_68 = arith.constant dense<0.000000e+00> : vector<256x4xf32>
    %52 = tpu.matmul %50, %51, %cst_68 {dimension_numbers = #tpu.dot_dimension_numbers<[1], [0], [0], [1], [0, 0, 1, 1], [], []>} : vector<256x36xbf16>, vector<36x4xbf16>, vector<256x4xf32> -> vector<256x4xf32>
    %c0_69 = arith.constant 0 : index
    %c0_70 = arith.constant 0 : index
    %53 = vector.load %arg5[%c0_69, %c0_70] : memref<1x4xf32, #tpu.memory_space<vmem>>, vector<1x4xf32>
    %54 = vector.broadcast %53 : vector<1x4xf32> to vector<256x4xf32>
    %55 = arith.addf %52, %54 : vector<256x4xf32>
    %cst_71 = arith.constant 0.000000e+00 : f32
    %56 = vector.broadcast %cst_71 : f32 to vector<256x4xf32>
    %57 = arith.maximumf %55, %56 : vector<256x4xf32>
    %58 = arith.truncf %57 : vector<256x4xf32> to vector<256x4xbf16>
    %c0_72 = arith.constant 0 : index
    %c0_73 = arith.constant 0 : index
    %59 = vector.load %arg6[%c0_72, %c0_73] : memref<4x16xbf16, #tpu.memory_space<vmem>>, vector<4x16xbf16>
    %cst_74 = arith.constant dense<0.000000e+00> : vector<256x16xf32>
    %60 = tpu.matmul %58, %59, %cst_74 {dimension_numbers = #tpu.dot_dimension_numbers<[1], [0], [0], [1], [0, 0, 1, 1], [], []>} : vector<256x4xbf16>, vector<4x16xbf16>, vector<256x16xf32> -> vector<256x16xf32>
    %c0_75 = arith.constant 0 : index
    %c0_76 = arith.constant 0 : index
    %61 = vector.load %arg7[%c0_75, %c0_76] : memref<1x16xf32, #tpu.memory_space<vmem>>, vector<1x16xf32>
    %62 = vector.broadcast %61 : vector<1x16xf32> to vector<256x16xf32>
    %63 = arith.addf %60, %62 : vector<256x16xf32>
    %64 = arith.addf %63, %6 : vector<256x16xf32>
    %cst_77 = arith.constant 0.000000e+00 : f32
    %65 = vector.broadcast %cst_77 : f32 to vector<256x16xf32>
    %66 = arith.maximumf %64, %65 : vector<256x16xf32>
    %67 = vector.shape_cast %66 : vector<256x16xf32> to vector<1x16x16x16xf32>
    %68 = arith.truncf %67 : vector<1x16x16x16xf32> to vector<1x16x16x16xbf16>
    %c0_78 = arith.constant 0 : index
    %c0_79 = arith.constant 0 : index
    %c0_80 = arith.constant 0 : index
    %c0_81 = arith.constant 0 : index
    %69 = vector.load %arg10[%c0_78, %c0_79, %c0_80, %c0_81] : memref<1x16x16x16xbf16, #tpu.memory_space<vmem>>, vector<1x16x16x16xbf16>
    tpu.vector_store %arg10[%c0_78, %c0_79, %c0_80, %c0_81], %68 {strides = array<i32>} : memref<1x16x16x16xbf16, #tpu.memory_space<vmem>>, vector<1x16x16x16xbf16>,
    return
  }
  func.func @transform_0(%arg0: i32) -> (i32, i32, i32, i32) {
    %c0_i32 = arith.constant 0 : i32
    %c0_i32_0 = arith.constant 0 : i32
    %c0_i32_1 = arith.constant 0 : i32
    %c0_i32_2 = arith.constant 0 : i32
    return %arg0, %c0_i32, %c0_i32_0, %c0_i32_1 : i32, i32, i32, i32
  }
  func.func @transform_1(%arg0: i32) -> (i32, i32) {
    %c0_i32 = arith.constant 0 : i32
    %c0_i32_0 = arith.constant 0 : i32
    %c0_i32_1 = arith.constant 0 : i32
    return %c0_i32, %c0_i32_0 : i32, i32
  }
  func.func @transform_2(%arg0: i32) -> (i32, i32) {
    %c0_i32 = arith.constant 0 : i32
    %c0_i32_0 = arith.constant 0 : i32
    %c0_i32_1 = arith.constant 0 : i32
    return %c0_i32, %c0_i32_0 : i32, i32
  }
  func.func @transform_3(%arg0: i32) -> (i32, i32) {
    %c0_i32 = arith.constant 0 : i32
    %c0_i32_0 = arith.constant 0 : i32
    %c0_i32_1 = arith.constant 0 : i32
    return %c0_i32, %c0_i32_0 : i32, i32
  }
  func.func @transform_4(%arg0: i32) -> (i32, i32) {
    %c0_i32 = arith.constant 0 : i32
    %c0_i32_0 = arith.constant 0 : i32
    %c0_i32_1 = arith.constant 0 : i32
    return %c0_i32, %c0_i32_0 : i32, i32
  }
  func.func @transform_5(%arg0: i32) -> (i32, i32) {
    %c0_i32 = arith.constant 0 : i32
    %c0_i32_0 = arith.constant 0 : i32
    %c0_i32_1 = arith.constant 0 : i32
    return %c0_i32, %c0_i32_0 : i32, i32
  }
  func.func @transform_6(%arg0: i32) -> (i32, i32) {
    %c0_i32 = arith.constant 0 : i32
    %c0_i32_0 = arith.constant 0 : i32
    %c0_i32_1 = arith.constant 0 : i32
    return %c0_i32, %c0_i32_0 : i32, i32
  }
  func.func @transform_7(%arg0: i32) -> (i32, i32) {
    %c0_i32 = arith.constant 0 : i32
    %c0_i32_0 = arith.constant 0 : i32
    %c0_i32_1 = arith.constant 0 : i32
    return %c0_i32, %c0_i32_0 : i32, i32
  }
  func.func @transform_8(%arg0: i32) -> (i32, i32) {
    %c0_i32 = arith.constant 0 : i32
    %c0_i32_0 = arith.constant 0 : i32
    %c0_i32_1 = arith.constant 0 : i32
    return %c0_i32, %c0_i32_0 : i32, i32
  }
  func.func @transform_9(%arg0: i32) -> (i32, i32, i32, i32) {
    %c0_i32 = arith.constant 0 : i32
    %c0_i32_0 = arith.constant 0 : i32
    %c0_i32_1 = arith.constant 0 : i32
    %c0_i32_2 = arith.constant 0 : i32
    return %arg0, %c0_i32, %c0_i32_0, %c0_i32_1 : i32, i32, i32, i32
  }
}

</mosaic_0001>

<llo_original>
// kernel: tpu_custom_call.1
$region0: #{tpu_custom_call.1}
  #allocation0 [shape = 'u32[]', space=smem, size = 0x4, offset = 0x4, fixed_abs, tag = 'smem constant byte address 0x4 - core index']
  #allocation1 [shape = 'u32[72,128]{1,0:T(1,128)}', space=vmem, size = 0x9000, scoped, tag = 'internal scratch']
  #allocation2 [shape = 'bf16[18,18,4]{2,1,0:T(8,128)(2,1)}', space=vmem, size = 0x1b000, scoped, tag = 'scratch operand']
  #allocation3 [shape = 'bf16[256,36]{1,0:T(8,128)(2,1)}', space=vmem, size = 0x10000, scoped, tag = 'scratch operand']
  %s0 = inlined_call_operand.vmem [shape: bf16[2,16,16,4], index: 0, kind: input, shape index: {}]
  %s1 = inlined_call_operand.vmem [shape: bf16[4,4], index: 1, kind: input, shape index: {}]
  %s2 = inlined_call_operand.vmem [shape: f32[1,4], index: 2, kind: input, shape index: {}]
  %s3 = inlined_call_operand.vmem [shape: bf16[36,4], index: 3, kind: input, shape index: {}]
  %s4 = inlined_call_operand.vmem [shape: f32[1,4], index: 4, kind: input, shape index: {}]
  %s5 = inlined_call_operand.vmem [shape: bf16[4,16], index: 5, kind: input, shape index: {}]
  %s6 = inlined_call_operand.vmem [shape: f32[1,16], index: 6, kind: input, shape index: {}]
  %s7 = inlined_call_operand.vmem [shape: bf16[4,16], index: 7, kind: input, shape index: {}]
  %s8 = inlined_call_operand.vmem [shape: f32[1,16], index: 8, kind: input, shape index: {}]
  %s9 = inlined_call_operand.hbm [shape: bf16[2,16,16,16], index: 9, kind: output, shape index: {}]
  %s10 = sld [smem:[#allocation0]]
  $region69: #{tpu_custom_call.1} parent=0
    _
  %s12 = ssub.s32 1, %s10
  %s13 = scalar_select 0, %s12, %s10
  $region1: #{tpu_custom_call.1} parent=0
    #allocation4 [shape = 'u8[131072]{0}', space=vmem, size = 0x20000, scoped, tag = 'output window, operand 0']
    #allocation5 [shape = 's32[2]{0}', space=sflag, size = 0x8, scoped, tag = 'scoped memory for tpu_custom_call.1']
    %14 = vsyncpa [#allocation5], 0
    %s15 = scalar_lea.sflag [#allocation5], 1
    %16 = vsyncpa %s15, 0
    loop: start=0, step=1, limit=4
    $region2: #{tpu_custom_call.1} parent=1 // loop_pre_header
      _
    $region3: #{tpu_custom_call.1} parent=1 // loop_header
      %s18 = sphi 0, %s22
      %p19 = scmp.ge.s32.totalorder %s18, 4
      %s28 = sphi 0, %s30
      %s31 = sphi 0, %s28
      %s32 = sphi 0, %s31
      %s48 = sphi 0, %s32
      %s52 = sphi 0, %s52
      %s54 = sphi 0, %s52
      %s55 = sphi 0, %s54
      %s69 = sphi 0, %s55
      %s73 = sphi 0, %s73
      %s75 = sphi 0, %s73
      %s76 = sphi 0, %s75
      %s90 = sphi 0, %s76
      %s94 = sphi 0, %s94
      %s96 = sphi 0, %s94
      %s97 = sphi 0, %s96
      %s111 = sphi 0, %s97
      %s115 = sphi 0, %s115
      %s117 = sphi 0, %s115
      %s118 = sphi 0, %s117
      %s132 = sphi 0, %s118
      %s136 = sphi 0, %s136
      %s138 = sphi 0, %s136
      %s139 = sphi 0, %s138
      %s153 = sphi 0, %s139
      %s157 = sphi 0, %s157
      %s159 = sphi 0, %s157
      %s160 = sphi 0, %s159
      %s174 = sphi 0, %s160
      %s178 = sphi 0, %s178
      %s180 = sphi 0, %s178
      %s181 = sphi 0, %s180
      %s195 = sphi 0, %s181
      %s199 = sphi 0, %s199
      %s201 = sphi 0, %s199
      %s202 = sphi 0, %s201
      %s216 = sphi 0, %s202
      %s222 = sphi 0, %s224
      %s225 = sphi 0, %s222
      %s226 = sphi 0, %s225
      %s242 = sphi 0, %s226
    $region4: #{tpu_custom_call.1} parent=1 // loop_header_branch
      %21 = sbr.rel (%p19) target = $region8
    $region5: #{tpu_custom_call.1} parent=1 // loop_body
      %s23 = ssub.s32 %s18, 1
      %s24 = ssub.s32 %s18, 2
      %s25 = sadd.s32 %s18, 1
      %s26 = ssub.s32 %s18, %s25
      %p27 = scmp.eq.s32.totalorder %s26, 0
      %s29 = sadd.s32 %s28, 1
      %s30 = scalar_select %p27, %s28, %s29
      %p33 = pneg %p27
      %p34 = scmp.eq.s32.totalorder %s18, 1
      %p35 = por %p33, %p34
      %p36 = scmp.ne.s32.totalorder %s28, %s31
      %p37 = scmp.eq.s32.totalorder %s18, 0
      %p38 = por %p36, %p37
      %p39 = scmp.ne.s32.totalorder %s28, %s31
      %p40 = scmp.eq.s32.totalorder %s23, 1
      %p41 = por %p39, %p40
      %p42 = scmp.ne.s32.totalorder %s31, %s32
      %p43 = scmp.eq.s32.totalorder %s23, 0
      %p44 = por %p42, %p43
      %p45 = scmp.ne.s32.totalorder %s31, %s32
      %p46 = scmp.eq.s32.totalorder %s24, 1
      %p47 = por %p45, %p46
      %p49 = scmp.ne.s32.totalorder %s32, %s48
      %p50 = scmp.eq.s32.totalorder %s24, 0
      %p51 = por %p49, %p50
      %s53 = sadd.s32 %s52, 1
      %p56 = scmp.eq.s32.totalorder %s18, 1
      %p57 = scmp.ne.s32.totalorder %s52, %s54
      %p58 = scmp.eq.s32.totalorder %s18, 0
      %p59 = por %p57, %p58
      %p60 = scmp.ne.s32.totalorder %s52, %s54
      %p61 = scmp.eq.s32.totalorder %s23, 1
      %p62 = por %p60, %p61
      %p63 = scmp.ne.s32.totalorder %s54, %s55
      %p64 = scmp.eq.s32.totalorder %s23, 0
      %p65 = por %p63, %p64
      %p66 = scmp.ne.s32.totalorder %s54, %s55
      %p67 = scmp.eq.s32.totalorder %s24, 1
      %p68 = por %p66, %p67
      %p70 = scmp.ne.s32.totalorder %s55, %s69
      %p71 = scmp.eq.s32.totalorder %s24, 0
      %p72 = por %p70, %p71
      %s74 = sadd.s32 %s73, 1
      %p77 = scmp.eq.s32.totalorder %s18, 1
      %p78 = scmp.ne.s32.totalorder %s73, %s75
      %p79 = scmp.eq.s32.totalorder %s18, 0
      %p80 = por %p78, %p79
      %p81 = scmp.ne.s32.totalorder %s73, %s75
      %p82 = scmp.eq.s32.totalorder %s23, 1
      %p83 = por %p81, %p82
      %p84 = scmp.ne.s32.totalorder %s75, %s76
      %p85 = scmp.eq.s32.totalorder %s23, 0
      %p86 = por %p84, %p85
      %p87 = scmp.ne.s32.totalorder %s75, %s76
      %p88 = scmp.eq.s32.totalorder %s24, 1
      %p89 = por %p87, %p88
      %p91 = scmp.ne.s32.totalorder %s76, %s90
      %p92 = scmp.eq.s32.totalorder %s24, 0
      %p93 = por %p91, %p92
      %s95 = sadd.s32 %s94, 1
      %p98 = scmp.eq.s32.totalorder %s18, 1
      %p99 = scmp.ne.s32.totalorder %s94, %s96
      %p100 = scmp.eq.s32.totalorder %s18, 0
      %p101 = por %p99, %p100
      %p102 = scmp.ne.s32.totalorder %s94, %s96
      %p103 = scmp.eq.s32.totalorder %s23, 1
      %p104 = por %p102, %p103
      %p105 = scmp.ne.s32.totalorder %s96, %s97
      %p106 = scmp.eq.s32.totalorder %s23, 0
      %p107 = por %p105, %p106
      %p108 = scmp.ne.s32.totalorder %s96, %s97
      %p109 = scmp.eq.s32.totalorder %s24, 1
      %p110 = por %p108, %p109
      %p112 = scmp.ne.s32.totalorder %s97, %s111
      %p113 = scmp.eq.s32.totalorder %s24, 0
      %p114 = por %p112, %p113
      %s116 = sadd.s32 %s115, 1
      %p119 = scmp.eq.s32.totalorder %s18, 1
      %p120 = scmp.ne.s32.totalorder %s115, %s117
      %p121 = scmp.eq.s32.totalorder %s18, 0
      %p122 = por %p120, %p121
      %p123 = scmp.ne.s32.totalorder %s115, %s117
      %p124 = scmp.eq.s32.totalorder %s23, 1
      %p125 = por %p123, %p124
      %p126 = scmp.ne.s32.totalorder %s117, %s118
      %p127 = scmp.eq.s32.totalorder %s23, 0
      %p128 = por %p126, %p127
      %p129 = scmp.ne.s32.totalorder %s117, %s118
      %p130 = scmp.eq.s32.totalorder %s24, 1
      %p131 = por %p129, %p130
      %p133 = scmp.ne.s32.totalorder %s118, %s132
      %p134 = scmp.eq.s32.totalorder %s24, 0
      %p135 = por %p133, %p134
      %s137 = sadd.s32 %s136, 1
      %p140 = scmp.eq.s32.totalorder %s18, 1
      %p141 = scmp.ne.s32.totalorder %s136, %s138
      %p142 = scmp.eq.s32.totalorder %s18, 0
      %p143 = por %p141, %p142
      %p144 = scmp.ne.s32.totalorder %s136, %s138
      %p145 = scmp.eq.s32.totalorder %s23, 1
      %p146 = por %p144, %p145
      %p147 = scmp.ne.s32.totalorder %s138, %s139
      %p148 = scmp.eq.s32.totalorder %s23, 0
      %p149 = por %p147, %p148
      %p150 = scmp.ne.s32.totalorder %s138, %s139
      %p151 = scmp.eq.s32.totalorder %s24, 1
      %p152 = por %p150, %p151
      %p154 = scmp.ne.s32.totalorder %s139, %s153
      %p155 = scmp.eq.s32.totalorder %s24, 0
      %p156 = por %p154, %p155
      %s158 = sadd.s32 %s157, 1
      %p161 = scmp.eq.s32.totalorder %s18, 1
      %p162 = scmp.ne.s32.totalorder %s157, %s159
      %p163 = scmp.eq.s32.totalorder %s18, 0
      %p164 = por %p162, %p163
      %p165 = scmp.ne.s32.totalorder %s157, %s159
      %p166 = scmp.eq.s32.totalorder %s23, 1
      %p167 = por %p165, %p166
      %p168 = scmp.ne.s32.totalorder %s159, %s160
      %p169 = scmp.eq.s32.totalorder %s23, 0
      %p170 = por %p168, %p169
      %p171 = scmp.ne.s32.totalorder %s159, %s160
      %p172 = scmp.eq.s32.totalorder %s24, 1
      %p173 = por %p171, %p172
      %p175 = scmp.ne.s32.totalorder %s160, %s174
      %p176 = scmp.eq.s32.totalorder %s24, 0
      %p177 = por %p175, %p176
      %s179 = sadd.s32 %s178, 1
      %p182 = scmp.eq.s32.totalorder %s18, 1
      %p183 = scmp.ne.s32.totalorder %s178, %s180
      %p184 = scmp.eq.s32.totalorder %s18, 0
      %p185 = por %p183, %p184
      %p186 = scmp.ne.s32.totalorder %s178, %s180
      %p187 = scmp.eq.s32.totalorder %s23, 1
      %p188 = por %p186, %p187
      %p189 = scmp.ne.s32.totalorder %s180, %s181
      %p190 = scmp.eq.s32.totalorder %s23, 0
      %p191 = por %p189, %p190
      %p192 = scmp.ne.s32.totalorder %s180, %s181
      %p193 = scmp.eq.s32.totalorder %s24, 1
      %p194 = por %p192, %p193
      %p196 = scmp.ne.s32.totalorder %s181, %s195
      %p197 = scmp.eq.s32.totalorder %s24, 0
      %p198 = por %p196, %p197
      %s200 = sadd.s32 %s199, 1
      %p203 = scmp.eq.s32.totalorder %s18, 1
      %p204 = scmp.ne.s32.totalorder %s199, %s201
      %p205 = scmp.eq.s32.totalorder %s18, 0
      %p206 = por %p204, %p205
      %p207 = scmp.ne.s32.totalorder %s199, %s201
      %p208 = scmp.eq.s32.totalorder %s23, 1
      %p209 = por %p207, %p208
      %p210 = scmp.ne.s32.totalorder %s201, %s202
      %p211 = scmp.eq.s32.totalorder %s23, 0
      %p212 = por %p210, %p211
      %p213 = scmp.ne.s32.totalorder %s201, %s202
      %p214 = scmp.eq.s32.totalorder %s24, 1
      %p215 = por %p213, %p214
      %p217 = scmp.ne.s32.totalorder %s202, %s216
      %p218 = scmp.eq.s32.totalorder %s24, 0
      %p219 = por %p217, %p218
      %s220 = ssub.s32 %s18, %s25
      %p221 = scmp.eq.s32.totalorder %s220, 0
      %s223 = sadd.s32 %s222, 1
      %s224 = scalar_select %p221, %s222, %s223
      %p227 = pneg %p221
      %p228 = scmp.eq.s32.totalorder %s18, 1
      %p229 = por %p227, %p228
      %p230 = scmp.ne.s32.totalorder %s222, %s225
      %p231 = scmp.eq.s32.totalorder %s18, 0
      %p232 = por %p230, %p231
      %p233 = scmp.ne.s32.totalorder %s222, %s225
      %p234 = scmp.eq.s32.totalorder %s23, 1
      %p235 = por %p233, %p234
      %p236 = scmp.ne.s32.totalorder %s225, %s226
      %p237 = scmp.eq.s32.totalorder %s23, 0
      %p238 = por %p236, %p237
      %p239 = scmp.ne.s32.totalorder %s225, %s226
      %p240 = scmp.eq.s32.totalorder %s24, 1
      %p241 = por %p239, %p240
      %p243 = scmp.ne.s32.totalorder %s226, %s242
      %p244 = scmp.eq.s32.totalorder %s24, 0
      %p245 = por %p243, %p244
      %p246 = scmp.le.s32.totalorder 1, %s18
      %p247 = scmp.lt.s32.totalorder %s18, 3
      %p248 = pnand %p246, %p247
      %p249 = pneg %p248
      // Predicated region
      $region9: #{tpu_custom_call.1} parent=5 // pred_check
        _
      $region10: #{tpu_custom_call.1} parent=5 // pred_check_branch
        %251 = sbr.rel (%p248) target = $region12
      $region11: #{tpu_custom_call.1} parent=5 // pred_region
        %s252 = ssub.s32 %s18, 1
        // Predicated region
        $region13: #{tpu_custom_call.1} parent=11 // pred_check
          %p253 = pneg %p65
        $region14: #{tpu_custom_call.1} parent=11 // pred_check_branch
          %255 = sbr.rel (%p253) target = $region16
        $region15: #{tpu_custom_call.1} parent=11 // pred_region
          _
        $region16: #{tpu_custom_call.1} parent=11 // pred_fallthru
          _
        // Predicated region
        $region17: #{tpu_custom_call.1} parent=11 // pred_check
          %p256 = pneg %p86
        $region18: #{tpu_custom_call.1} parent=11 // pred_check_branch
          %258 = sbr.rel (%p256) target = $region20
        $region19: #{tpu_custom_call.1} parent=11 // pred_region
          _
        $region20: #{tpu_custom_call.1} parent=11 // pred_fallthru
          _
        // Predicated region
        $region21: #{tpu_custom_call.1} parent=11 // pred_check
          %p259 = pneg %p107
        $region22: #{tpu_custom_call.1} parent=11 // pred_check_branch
          %261 = sbr.rel (%p259) target = $region24
        $region23: #{tpu_custom_call.1} parent=11 // pred_region
          _
        $region24: #{tpu_custom_call.1} parent=11 // pred_fallthru
          _
        // Predicated region
        $region25: #{tpu_custom_call.1} parent=11 // pred_check
          %p262 = pneg %p128
        $region26: #{tpu_custom_call.1} parent=11 // pred_check_branch
          %264 = sbr.rel (%p262) target = $region28
        $region27: #{tpu_custom_call.1} parent=11 // pred_region
          _
        $region28: #{tpu_custom_call.1} parent=11 // pred_fallthru
          _
        // Predicated region
        $region29: #{tpu_custom_call.1} parent=11 // pred_check
          %p265 = pneg %p149
        $region30: #{tpu_custom_call.1} parent=11 // pred_check_branch
          %267 = sbr.rel (%p265) target = $region32
        $region31: #{tpu_custom_call.1} parent=11 // pred_region
          _
        $region32: #{tpu_custom_call.1} parent=11 // pred_fallthru
          _
        // Predicated region
        $region33: #{tpu_custom_call.1} parent=11 // pred_check
          %p268 = pneg %p170
        $region34: #{tpu_custom_call.1} parent=11 // pred_check_branch
          %270 = sbr.rel (%p268) target = $region36
        $region35: #{tpu_custom_call.1} parent=11 // pred_region
          _
        $region36: #{tpu_custom_call.1} parent=11 // pred_fallthru
          _
        // Predicated region
        $region37: #{tpu_custom_call.1} parent=11 // pred_check
          %p271 = pneg %p191
        $region38: #{tpu_custom_call.1} parent=11 // pred_check_branch
          %273 = sbr.rel (%p271) target = $region40
        $region39: #{tpu_custom_call.1} parent=11 // pred_region
          _
        $region40: #{tpu_custom_call.1} parent=11 // pred_fallthru
          _
        // Predicated region
        $region41: #{tpu_custom_call.1} parent=11 // pred_check
          %p274 = pneg %p212
        $region42: #{tpu_custom_call.1} parent=11 // pred_check_branch
          %276 = sbr.rel (%p274) target = $region44
        $region43: #{tpu_custom_call.1} parent=11 // pred_region
          _
        $region44: #{tpu_custom_call.1} parent=11 // pred_fallthru
          _
      $region12: #{tpu_custom_call.1} parent=5 // pred_fallthru
        _
      %p277 = scmp.lt.s32.totalorder %s18, 2
      // Predicated region
      $region45: #{tpu_custom_call.1} parent=5 // pred_check
        %p278 = pneg %p277
      $region46: #{tpu_custom_call.1} parent=5 // pred_check_branch
        %280 = sbr.rel (%p278) target = $region48
      $region47: #{tpu_custom_call.1} parent=5 // pred_region
        // Predicated region
        $region49: #{tpu_custom_call.1} parent=47 // pred_check
          %p281 = pneg %p38
        $region50: #{tpu_custom_call.1} parent=47 // pred_check_branch
          %283 = sbr.rel (%p281) target = $region52
        $region51: #{tpu_custom_call.1} parent=47 // pred_region
          %p284 = scmp.lt.s32.totalorder %s18, 1
          %s285 = scalar_select %p284, %s18, 1
          %s286 = smul.addr %s285, 32
          %s287 = smul.addr %s286, 4
          %s288 = scalar_lea.vmem %s0, %s287
        $region52: #{tpu_custom_call.1} parent=47 // pred_fallthru
          _
      $region48: #{tpu_custom_call.1} parent=5 // pred_fallthru
        _
      %p289 = scmp.le.s32.totalorder 1, %s18
      %p290 = scmp.lt.s32.totalorder %s18, 3
      %p291 = pnand %p289, %p290
      %p292 = pneg %p291
      // Predicated region
      $region53: #{tpu_custom_call.1} parent=5 // pred_check
        _
      $region54: #{tpu_custom_call.1} parent=5 // pred_check_branch
        %294 = sbr.rel (%p291) target = $region56
      $region55: #{tpu_custom_call.1} parent=5 // pred_region
        %s295 = ssub.s32 %s18, 1
        %p296 = scmp.lt.s32.totalorder %s23, 1
        %s297 = scalar_select %p296, %s23, 1
        %s298 = smul.addr %s297, 32
        %s299 = smul.addr %s298, 4
        %s300 = scalar_lea.vmem %s0, %s299
        %p301 = pneg %p44
        %p302 = pneg %p41
        %p303 = pneg %p65
        %p304 = pneg %p62
        %p305 = pneg %p86
        %p306 = pneg %p83
        %p307 = pneg %p107
        %p308 = pneg %p104
        %p309 = pneg %p128
        %p310 = pneg %p125
        %p311 = pneg %p149
        %p312 = pneg %p146
        %p313 = pneg %p170
        %p314 = pneg %p167
        %p315 = pneg %p191
        %p316 = pneg %p188
        %p317 = pneg %p212
        %p318 = pneg %p209
        %p319 = pneg %p238
        %p320 = pneg %p235
        %s321 = sand.u32 %s225, 1
        %s322 = scalar_lea.sflag [#allocation5], %s321
        %s323 = sand.u32 %s225, 1
        %s324 = smul.addr %s323, 128
        %s325 = scalar_lea.vmem [#allocation4], %s324
        %p326 = scmp.lt.s32.totalorder %s23, 1
        %s327 = scalar_select %p326, %s23, 1
        %s328 = smul.addr %s327, 32
        %s329 = smul.addr %s328, 4
        %s330 = scalar_lea.vmem %s0, %s329
        %v332 = vld [vmem:[%s330] sm:$0xf]
        %v333 = vld [vmem:[%s330 + $0x4] sm:$0xf]
        %v334 = vld [vmem:[%s330 + $0x8] sm:$0xf]
        %v335 = vld [vmem:[%s330 + $0xc] sm:$0xf]
        %v336 = vld [vmem:[%s330 + $0x10] sm:$0xf]
        %v337 = vld [vmem:[%s330 + $0x14] sm:$0xf]
        %v338 = vld [vmem:[%s330 + $0x18] sm:$0xf]
        %v339 = vld [vmem:[%s330 + $0x1c] sm:$0xf]
        %v340 = vld [vmem:[%s330 + $0x20] sm:$0xf]
        %v341 = vld [vmem:[%s330 + $0x24] sm:$0xf]
        %v342 = vld [vmem:[%s330 + $0x28] sm:$0xf]
        %v343 = vld [vmem:[%s330 + $0x2c] sm:$0xf]
        %v344 = vld [vmem:[%s330 + $0x30] sm:$0xf]
        %v345 = vld [vmem:[%s330 + $0x34] sm:$0xf]
        %v346 = vld [vmem:[%s330 + $0x38] sm:$0xf]
        %v347 = vld [vmem:[%s330 + $0x3c] sm:$0xf]
        %v348 = vld [vmem:[%s330 + $0x40] sm:$0xf]
        %v349 = vld [vmem:[%s330 + $0x44] sm:$0xf]
        %v350 = vld [vmem:[%s330 + $0x48] sm:$0xf]
        %v351 = vld [vmem:[%s330 + $0x4c] sm:$0xf]
        %v352 = vld [vmem:[%s330 + $0x50] sm:$0xf]
        %v353 = vld [vmem:[%s330 + $0x54] sm:$0xf]
        %v354 = vld [vmem:[%s330 + $0x58] sm:$0xf]
        %v355 = vld [vmem:[%s330 + $0x5c] sm:$0xf]
        %v356 = vld [vmem:[%s330 + $0x60] sm:$0xf]
        %v357 = vld [vmem:[%s330 + $0x64] sm:$0xf]
        %v358 = vld [vmem:[%s330 + $0x68] sm:$0xf]
        %v359 = vld [vmem:[%s330 + $0x6c] sm:$0xf]
        %v360 = vld [vmem:[%s330 + $0x70] sm:$0xf]
        %v361 = vld [vmem:[%s330 + $0x74] sm:$0xf]
        %v362 = vld [vmem:[%s330 + $0x78] sm:$0xf]
        %v363 = vld [vmem:[%s330 + $0x7c] sm:$0xf]
        %v364 = vld [vmem:[%s7] sm:$0x3]
        %v365 = vld [vmem:[%s8] sm:$0x1]
        %v367 = vperm.slane %v365, 0
        %v401 = vunpack.c.l.b16 %v332
        %v402 = vunpack.c.l.b16 %v333
        %v403 = vunpack.c.l.b16 %v334
        %v404 = vunpack.c.l.b16 %v335
        %v405 = vunpack.c.l.b16 %v336
        %v406 = vunpack.c.l.b16 %v337
        %v407 = vunpack.c.l.b16 %v338
        %v408 = vunpack.c.l.b16 %v339
        %v409 = vunpack.c.l.b16 %v340
        %v410 = vunpack.c.l.b16 %v341
        %v411 = vunpack.c.l.b16 %v342
        %v412 = vunpack.c.l.b16 %v343
        %v413 = vunpack.c.l.b16 %v344
        %v414 = vunpack.c.l.b16 %v345
        %v415 = vunpack.c.l.b16 %v346
        %v416 = vunpack.c.l.b16 %v347
        %v417 = vunpack.c.l.b16 %v348
        %v418 = vunpack.c.l.b16 %v349
        %v419 = vunpack.c.l.b16 %v350
        %v420 = vunpack.c.l.b16 %v351
        %v421 = vunpack.c.l.b16 %v352
        %v422 = vunpack.c.l.b16 %v353
        %v423 = vunpack.c.l.b16 %v354
        %v424 = vunpack.c.l.b16 %v355
        %v425 = vunpack.c.l.b16 %v356
        %v426 = vunpack.c.l.b16 %v357
        %v427 = vunpack.c.l.b16 %v358
        %v428 = vunpack.c.l.b16 %v359
        %v429 = vunpack.c.l.b16 %v360
        %v430 = vunpack.c.l.b16 %v361
        %v431 = vunpack.c.l.b16 %v362
        %v432 = vunpack.c.l.b16 %v363
        %v433 = vpack.c.b16 %v402, %v401
        %v434 = vpack.c.b16 %v404, %v403
        %v435 = vpack.c.b16 %v406, %v405
        %v436 = vpack.c.b16 %v408, %v407
        %v437 = vpack.c.b16 %v410, %v409
        %v438 = vpack.c.b16 %v412, %v411
        %v439 = vpack.c.b16 %v414, %v413
        %v440 = vpack.c.b16 %v416, %v415
        %v441 = vpack.c.b16 %v418, %v417
        %v442 = vpack.c.b16 %v420, %v419
        %v443 = vpack.c.b16 %v422, %v421
        %v444 = vpack.c.b16 %v424, %v423
        %v445 = vpack.c.b16 %v426, %v425
        %v446 = vpack.c.b16 %v428, %v427
        %v447 = vpack.c.b16 %v430, %v429
        %v448 = vpack.c.b16 %v432, %v431
        %vm449 = vcmask 31744
        %v451 = vsel %vm449, %v433, 0
        %v454 = vsel %vm449, %v434, 0
        %v457 = vsel %vm449, %v435, 0
        %v460 = vsel %vm449, %v436, 0
        %v463 = vsel %vm449, %v437, 0
        %v466 = vsel %vm449, %v438, 0
        %v469 = vsel %vm449, %v439, 0
        %v472 = vsel %vm449, %v440, 0
        %v475 = vsel %vm449, %v441, 0
        %v478 = vsel %vm449, %v442, 0
        %v481 = vsel %vm449, %v443, 0
        %v484 = vsel %vm449, %v444, 0
        %v487 = vsel %vm449, %v445, 0
        %v490 = vsel %vm449, %v446, 0
        %v493 = vsel %vm449, %v447, 0
        %v496 = vsel %vm449, %v448, 0
        %vm498 = vcmask 1041408
        %v500 = vsel %vm498, %v364, 0
        %502 = vmatpush.bf16.msra.mxu0 0
        %503 = vmatpush.bf16.msra.mxu0 0
        %504 = vmatpush.bf16.msra.mxu0 0
        %505 = vmatpush.bf16.msra.mxu0 0
        %506 = vmatpush.bf16.msra.mxu0 0
        %507 = vmatpush.bf16.msra.mxu0 0
        %508 = vmatpush.bf16.msra.mxu0 0
        %509 = vmatpush.bf16.msra.mxu0 %v500
        %510 = vmatmul.bf16.gmra.mxu0 %v451
        %v511 = vpop.f32.mrf.mxu0
        %v512 = vadd.f32 %v367, %v511
        %v513 = vpop.f32.mrf.mxu0
        %v514 = vadd.f32 %v367, %v513
        %515 = vmatmul.bf16.gmra.mxu0 %v454
        %v516 = vpop.f32.mrf.mxu0
        %v517 = vadd.f32 %v367, %v516
        %v518 = vpop.f32.mrf.mxu0
        %v519 = vadd.f32 %v367, %v518
        %520 = vmatmul.bf16.gmra.mxu0 %v457
        %v521 = vpop.f32.mrf.mxu0
        %v522 = vadd.f32 %v367, %v521
        %v523 = vpop.f32.mrf.mxu0
        %v524 = vadd.f32 %v367, %v523
        %525 = vmatmul.bf16.gmra.mxu0 %v460
        %v526 = vpop.f32.mrf.mxu0
        %v527 = vadd.f32 %v367, %v526
        %v528 = vpop.f32.mrf.mxu0
        %v529 = vadd.f32 %v367, %v528
        %530 = vmatmul.bf16.gmra.mxu0 %v463
        %v531 = vpop.f32.mrf.mxu0
        %v532 = vadd.f32 %v367, %v531
        %v533 = vpop.f32.mrf.mxu0
        %v534 = vadd.f32 %v367, %v533
        %535 = vmatmul.bf16.gmra.mxu0 %v466
        %v536 = vpop.f32.mrf.mxu0
        %v537 = vadd.f32 %v367, %v536
        %v538 = vpop.f32.mrf.mxu0
        %v539 = vadd.f32 %v367, %v538
        %540 = vmatmul.bf16.gmra.mxu0 %v469
        %v541 = vpop.f32.mrf.mxu0
        %v542 = vadd.f32 %v367, %v541
        %v543 = vpop.f32.mrf.mxu0
        %v544 = vadd.f32 %v367, %v543
        %545 = vmatmul.bf16.gmra.mxu0 %v472
        %v546 = vpop.f32.mrf.mxu0
        %v547 = vadd.f32 %v367, %v546
        %v548 = vpop.f32.mrf.mxu0
        %v549 = vadd.f32 %v367, %v548
        %550 = vmatmul.bf16.gmra.mxu0 %v475
        %v551 = vpop.f32.mrf.mxu0
        %v552 = vadd.f32 %v367, %v551
        %v553 = vpop.f32.mrf.mxu0
        %v554 = vadd.f32 %v367, %v553
        %555 = vmatmul.bf16.gmra.mxu0 %v478
        %v556 = vpop.f32.mrf.mxu0
        %v557 = vadd.f32 %v367, %v556
        %v558 = vpop.f32.mrf.mxu0
        %v559 = vadd.f32 %v367, %v558
        %560 = vmatmul.bf16.gmra.mxu0 %v481
        %v561 = vpop.f32.mrf.mxu0
        %v562 = vadd.f32 %v367, %v561
        %v563 = vpop.f32.mrf.mxu0
        %v564 = vadd.f32 %v367, %v563
        %565 = vmatmul.bf16.gmra.mxu0 %v484
        %v566 = vpop.f32.mrf.mxu0
        %v567 = vadd.f32 %v367, %v566
        %v568 = vpop.f32.mrf.mxu0
        %v569 = vadd.f32 %v367, %v568
        %570 = vmatmul.bf16.gmra.mxu0 %v487
        %v571 = vpop.f32.mrf.mxu0
        %v572 = vadd.f32 %v367, %v571
        %v573 = vpop.f32.mrf.mxu0
        %v574 = vadd.f32 %v367, %v573
        %575 = vmatmul.bf16.gmra.mxu0 %v490
        %v576 = vpop.f32.mrf.mxu0
        %v577 = vadd.f32 %v367, %v576
        %v578 = vpop.f32.mrf.mxu0
        %v579 = vadd.f32 %v367, %v578
        %580 = vmatmul.bf16.gmra.mxu0 %v493
        %v581 = vpop.f32.mrf.mxu0
        %v582 = vadd.f32 %v367, %v581
        %v583 = vpop.f32.mrf.mxu0
        %v584 = vadd.f32 %v367, %v583
        %585 = vmatmul.bf16.gmra.mxu0 %v496
        %v586 = vpop.f32.mrf.mxu0
        %v587 = vadd.f32 %v367, %v586
        %v588 = vpop.f32.mrf.mxu0
        %v589 = vadd.f32 %v367, %v588
        %590 = vdwg.mxu0
        %v591 = vld [vmem:[%s1] sm:$0x3]
        %v592 = vld [vmem:[%s2] sm:$0x1]
        %v594 = vperm.slane %v592, 0
        %v597 = vsel %vm498, %v591, 0
        %599 = vmatpush.bf16.msra.mxu0 0
        %600 = vmatpush.bf16.msra.mxu0 0
        %601 = vmatpush.bf16.msra.mxu0 0
        %602 = vmatpush.bf16.msra.mxu0 0
        %603 = vmatpush.bf16.msra.mxu0 0
        %604 = vmatpush.bf16.msra.mxu0 0
        %605 = vmatpush.bf16.msra.mxu0 0
        %606 = vmatpush.bf16.msra.mxu0 %v597
        %607 = vmatmul.bf16.gmra.mxu0 %v451
        %v608 = vpop.f32.mrf.mxu0
        %v609 = vadd.f32 %v594, %v608
        %v610 = vpop.f32.mrf.mxu0
        %v611 = vadd.f32 %v594, %v610
        %612 = vmatmul.bf16.gmra.mxu0 %v454
        %v613 = vpop.f32.mrf.mxu0
        %v614 = vadd.f32 %v594, %v613
        %v615 = vpop.f32.mrf.mxu0
        %v616 = vadd.f32 %v594, %v615
        %617 = vmatmul.bf16.gmra.mxu0 %v457
        %v618 = vpop.f32.mrf.mxu0
        %v619 = vadd.f32 %v594, %v618
        %v620 = vpop.f32.mrf.mxu0
        %v621 = vadd.f32 %v594, %v620
        %622 = vmatmul.bf16.gmra.mxu0 %v460
        %v623 = vpop.f32.mrf.mxu0
        %v624 = vadd.f32 %v594, %v623
        %v625 = vpop.f32.mrf.mxu0
        %v626 = vadd.f32 %v594, %v625
        %627 = vmatmul.bf16.gmra.mxu0 %v463
        %v628 = vpop.f32.mrf.mxu0
        %v629 = vadd.f32 %v594, %v628
        %v630 = vpop.f32.mrf.mxu0
        %v631 = vadd.f32 %v594, %v630
        %632 = vmatmul.bf16.gmra.mxu0 %v466
        %v633 = vpop.f32.mrf.mxu0
        %v634 = vadd.f32 %v594, %v633
        %v635 = vpop.f32.mrf.mxu0
        %v636 = vadd.f32 %v594, %v635
        %637 = vmatmul.bf16.gmra.mxu0 %v469
        %v638 = vpop.f32.mrf.mxu0
        %v639 = vadd.f32 %v594, %v638
        %v640 = vpop.f32.mrf.mxu0
        %v641 = vadd.f32 %v594, %v640
        %642 = vmatmul.bf16.gmra.mxu0 %v472
        %v643 = vpop.f32.mrf.mxu0
        %v644 = vadd.f32 %v594, %v643
        %v645 = vpop.f32.mrf.mxu0
        %v646 = vadd.f32 %v594, %v645
        %647 = vmatmul.bf16.gmra.mxu0 %v475
        %v648 = vpop.f32.mrf.mxu0
        %v649 = vadd.f32 %v594, %v648
        %v650 = vpop.f32.mrf.mxu0
        %v651 = vadd.f32 %v594, %v650
        %652 = vmatmul.bf16.gmra.mxu0 %v478
        %v653 = vpop.f32.mrf.mxu0
        %v654 = vadd.f32 %v594, %v653
        %v655 = vpop.f32.mrf.mxu0
        %v656 = vadd.f32 %v594, %v655
        %657 = vmatmul.bf16.gmra.mxu0 %v481
        %v658 = vpop.f32.mrf.mxu0
        %v659 = vadd.f32 %v594, %v658
        %v660 = vpop.f32.mrf.mxu0
        %v661 = vadd.f32 %v594, %v660
        %662 = vmatmul.bf16.gmra.mxu0 %v484
        %v663 = vpop.f32.mrf.mxu0
        %v664 = vadd.f32 %v594, %v663
        %v665 = vpop.f32.mrf.mxu0
        %v666 = vadd.f32 %v594, %v665
        %667 = vmatmul.bf16.gmra.mxu0 %v487
        %v668 = vpop.f32.mrf.mxu0
        %v669 = vadd.f32 %v594, %v668
        %v670 = vpop.f32.mrf.mxu0
        %v671 = vadd.f32 %v594, %v670
        %672 = vmatmul.bf16.gmra.mxu0 %v490
        %v673 = vpop.f32.mrf.mxu0
        %v674 = vadd.f32 %v594, %v673
        %v675 = vpop.f32.mrf.mxu0
        %v676 = vadd.f32 %v594, %v675
        %677 = vmatmul.bf16.gmra.mxu0 %v493
        %v678 = vpop.f32.mrf.mxu0
        %v679 = vadd.f32 %v594, %v678
        %v680 = vpop.f32.mrf.mxu0
        %v681 = vadd.f32 %v594, %v680
        %682 = vmatmul.bf16.gmra.mxu0 %v496
        %v683 = vpop.f32.mrf.mxu0
        %v684 = vadd.f32 %v594, %v683
        %v685 = vpop.f32.mrf.mxu0
        %v686 = vadd.f32 %v594, %v685
        %687 = vdwg.mxu0
        %v688 = vmax.f32 %v609, 0.0
        %v689 = vmax.f32 %v611, 0.0
        %v690 = vmax.f32 %v614, 0.0
        %v691 = vmax.f32 %v616, 0.0
        %v692 = vmax.f32 %v619, 0.0
        %v693 = vmax.f32 %v621, 0.0
        %v694 = vmax.f32 %v624, 0.0
        %v695 = vmax.f32 %v626, 0.0
        %v696 = vmax.f32 %v629, 0.0
        %v697 = vmax.f32 %v631, 0.0
        %v698 = vmax.f32 %v634, 0.0
        %v699 = vmax.f32 %v636, 0.0
        %v700 = vmax.f32 %v639, 0.0
        %v701 = vmax.f32 %v641, 0.0
        %v702 = vmax.f32 %v644, 0.0
        %v703 = vmax.f32 %v646, 0.0
        %v704 = vmax.f32 %v649, 0.0
        %v705 = vmax.f32 %v651, 0.0
        %v706 = vmax.f32 %v654, 0.0
        %v707 = vmax.f32 %v656, 0.0
        %v708 = vmax.f32 %v659, 0.0
        %v709 = vmax.f32 %v661, 0.0
        %v710 = vmax.f32 %v664, 0.0
        %v711 = vmax.f32 %v666, 0.0
        %v712 = vmax.f32 %v669, 0.0
        %v713 = vmax.f32 %v671, 0.0
        %v714 = vmax.f32 %v674, 0.0
        %v715 = vmax.f32 %v676, 0.0
        %v716 = vmax.f32 %v679, 0.0
        %v717 = vmax.f32 %v681, 0.0
        %v718 = vmax.f32 %v684, 0.0
        %v719 = vmax.f32 %v686, 0.0
        %vm720 = vcmask 27648
        %721 = vst.msk [vmem:[#allocation2] sm:$0xf] %vm720, 0
        %722 = vst.msk [vmem:[#allocation2 + $0x4] sm:$0xf] %vm720, 0
        %vm723 = vcmask 24576
        %724 = vst.msk [vmem:[#allocation2 + $0x8] sm:$0x1] %vm723, 0
        %s725 = scalar_lea.vmem [#allocation2], 204
        %726 = vst.msk [vmem:[%s725] sm:$0xf] %vm720, 0
        %727 = vst.msk [vmem:[%s725 + $0x4] sm:$0xf] %vm720, 0
        %728 = vst.msk [vmem:[%s725 + $0x8] sm:$0x1] %vm723, 0
        %vm729 = vcmask 24576
        %vm730 = vsmask.f32 256
        %vm731 = vmand %vm729, %vm730
        %v732 = vld [vmem:[#allocation2] sm:$0x1]
        %v733 = vsel %vm731, 0, %v732
        %734 = vst [vmem:[#allocation2] sm:$0x1] %v733
        %v735 = vld [vmem:[#allocation2 + $0xc] sm:$0x1]
        %v736 = vsel %vm731, 0, %v735
        %737 = vst [vmem:[#allocation2 + $0xc] sm:$0x1] %v736
        %v738 = vld [vmem:[#allocation2 + $0x18] sm:$0x1]
        %v739 = vsel %vm731, 0, %v738
        %740 = vst [vmem:[#allocation2 + $0x18] sm:$0x1] %v739
        %v741 = vld [vmem:[#allocation2 + $0x24] sm:$0x1]
        %v742 = vsel %vm731, 0, %v741
        %743 = vst [vmem:[#allocation2 + $0x24] sm:$0x1] %v742
        %v744 = vld [vmem:[#allocation2 + $0x30] sm:$0x1]
        %v745 = vsel %vm731, 0, %v744
        %746 = vst [vmem:[#allocation2 + $0x30] sm:$0x1] %v745
        %v747 = vld [vmem:[#allocation2 + $0x3c] sm:$0x1]
        %v748 = vsel %vm731, 0, %v747
        %749 = vst [vmem:[#allocation2 + $0x3c] sm:$0x1] %v748
        %v750 = vld [vmem:[#allocation2 + $0x48] sm:$0x1]
        %v751 = vsel %vm731, 0, %v750
        %752 = vst [vmem:[#allocation2 + $0x48] sm:$0x1] %v751
        %v753 = vld [vmem:[#allocation2 + $0x54] sm:$0x1]
        %v754 = vsel %vm731, 0, %v753
        %755 = vst [vmem:[#allocation2 + $0x54] sm:$0x1] %v754
        %v756 = vld [vmem:[#allocation2 + $0x60] sm:$0x1]
        %v757 = vsel %vm731, 0, %v756
        %758 = vst [vmem:[#allocation2 + $0x60] sm:$0x1] %v757
        %v759 = vld [vmem:[#allocation2 + $0x6c] sm:$0x1]
        %v760 = vsel %vm731, 0, %v759
        %761 = vst [vmem:[#allocation2 + $0x6c] sm:$0x1] %v760
        %v762 = vld [vmem:[#allocation2 + $0x78] sm:$0x1]
        %v763 = vsel %vm731, 0, %v762
        %764 = vst [vmem:[#allocation2 + $0x78] sm:$0x1] %v763
        %v765 = vld [vmem:[#allocation2 + $0x84] sm:$0x1]
        %v766 = vsel %vm731, 0, %v765
        %767 = vst [vmem:[#allocation2 + $0x84] sm:$0x1] %v766
        %v768 = vld [vmem:[#allocation2 + $0x90] sm:$0x1]
        %v769 = vsel %vm731, 0, %v768
        %770 = vst [vmem:[#allocation2 + $0x90] sm:$0x1] %v769
        %v771 = vld [vmem:[#allocation2 + $0x9c] sm:$0x1]
        %v772 = vsel %vm731, 0, %v771
        %773 = vst [vmem:[#allocation2 + $0x9c] sm:$0x1] %v772
        %v774 = vld [vmem:[#allocation2 + $0xa8] sm:$0x1]
        %v775 = vsel %vm731, 0, %v774
        %776 = vst [vmem:[#allocation2 + $0xa8] sm:$0x1] %v775
        %v777 = vld [vmem:[#allocation2 + $0xb4] sm:$0x1]
        %v778 = vsel %vm731, 0, %v777
        %779 = vst [vmem:[#allocation2 + $0xb4] sm:$0x1] %v778
        %v780 = vld [vmem:[#allocation2 + $0xc0] sm:$0x1]
        %v781 = vsel %vm731, 0, %v780
        %782 = vst [vmem:[#allocation2 + $0xc0] sm:$0x1] %v781
        %v783 = vld [vmem:[#allocation2 + $0xcc] sm:$0x1]
        %v784 = vsel %vm731, 0, %v783
        %785 = vst [vmem:[#allocation2 + $0xcc] sm:$0x1] %v784
        %vm786 = vsmask.f32 7938
        %vm787 = vmand %vm729, %vm786
        %v788 = vld [vmem:[#allocation2 + $0x8] sm:$0x1]
        %v789 = vsel %vm787, 0, %v788
        %790 = vst [vmem:[#allocation2 + $0x8] sm:$0x1] %v789
        %v791 = vld [vmem:[#allocation2 + $0x14] sm:$0x1]
        %v792 = vsel %vm787, 0, %v791
        %793 = vst [vmem:[#allocation2 + $0x14] sm:$0x1] %v792
        %v794 = vld [vmem:[#allocation2 + $0x20] sm:$0x1]
        %v795 = vsel %vm787, 0, %v794
        %796 = vst [vmem:[#allocation2 + $0x20] sm:$0x1] %v795
        %v797 = vld [vmem:[#allocation2 + $0x2c] sm:$0x1]
        %v798 = vsel %vm787, 0, %v797
        %799 = vst [vmem:[#allocation2 + $0x2c] sm:$0x1] %v798
        %v800 = vld [vmem:[#allocation2 + $0x38] sm:$0x1]
        %v801 = vsel %vm787, 0, %v800
        %802 = vst [vmem:[#allocation2 + $0x38] sm:$0x1] %v801
        %v803 = vld [vmem:[#allocation2 + $0x44] sm:$0x1]
        %v804 = vsel %vm787, 0, %v803
        %805 = vst [vmem:[#allocation2 + $0x44] sm:$0x1] %v804
        %v806 = vld [vmem:[#allocation2 + $0x50] sm:$0x1]
        %v807 = vsel %vm787, 0, %v806
        %808 = vst [vmem:[#allocation2 + $0x50] sm:$0x1] %v807
        %v809 = vld [vmem:[#allocation2 + $0x5c] sm:$0x1]
        %v810 = vsel %vm787, 0, %v809
        %811 = vst [vmem:[#allocation2 + $0x5c] sm:$0x1] %v810
        %v812 = vld [vmem:[#allocation2 + $0x68] sm:$0x1]
        %v813 = vsel %vm787, 0, %v812
        %814 = vst [vmem:[#allocation2 + $0x68] sm:$0x1] %v813
        %v815 = vld [vmem:[#allocation2 + $0x74] sm:$0x1]
        %v816 = vsel %vm787, 0, %v815
        %817 = vst [vmem:[#allocation2 + $0x74] sm:$0x1] %v816
        %v818 = vld [vmem:[#allocation2 + $0x80] sm:$0x1]
        %v819 = vsel %vm787, 0, %v818
        %820 = vst [vmem:[#allocation2 + $0x80] sm:$0x1] %v819
        %v821 = vld [vmem:[#allocation2 + $0x8c] sm:$0x1]
        %v822 = vsel %vm787, 0, %v821
        %823 = vst [vmem:[#allocation2 + $0x8c] sm:$0x1] %v822
        %v824 = vld [vmem:[#allocation2 + $0x98] sm:$0x1]
        %v825 = vsel %vm787, 0, %v824
        %826 = vst [vmem:[#allocation2 + $0x98] sm:$0x1] %v825
        %v827 = vld [vmem:[#allocation2 + $0xa4] sm:$0x1]
        %v828 = vsel %vm787, 0, %v827
        %829 = vst [vmem:[#allocation2 + $0xa4] sm:$0x1] %v828
        %v830 = vld [vmem:[#allocation2 + $0xb0] sm:$0x1]
        %v831 = vsel %vm787, 0, %v830
        %832 = vst [vmem:[#allocation2 + $0xb0] sm:$0x1] %v831
        %v833 = vld [vmem:[#allocation2 + $0xbc] sm:$0x1]
        %v834 = vsel %vm787, 0, %v833
        %835 = vst [vmem:[#allocation2 + $0xbc] sm:$0x1] %v834
        %v836 = vld [vmem:[#allocation2 + $0xc8] sm:$0x1]
        %v837 = vsel %vm787, 0, %v836
        %838 = vst [vmem:[#allocation2 + $0xc8] sm:$0x1] %v837
        %v839 = vld [vmem:[#allocation2 + $0xd4] sm:$0x1]
        %v840 = vsel %vm787, 0, %v839
        %841 = vst [vmem:[#allocation2 + $0xd4] sm:$0x1] %v840
        %v842 = vpack.c.bf16 %v688, %v688
        %v843 = vpack.c.bf16 %v689, %v689
        %v844 = vpack.c.bf16 %v690, %v690
        %v845 = vpack.c.bf16 %v691, %v691
        %v846 = vpack.c.bf16 %v692, %v692
        %v847 = vpack.c.bf16 %v693, %v693
        %v848 = vpack.c.bf16 %v694, %v694
        %v849 = vpack.c.bf16 %v695, %v695
        %v850 = vpack.c.bf16 %v696, %v696
        %v851 = vpack.c.bf16 %v697, %v697
        %v852 = vpack.c.bf16 %v698, %v698
        %v853 = vpack.c.bf16 %v699, %v699
        %v854 = vpack.c.bf16 %v700, %v700
        %v855 = vpack.c.bf16 %v701, %v701
        %v856 = vpack.c.bf16 %v702, %v702
        %v857 = vpack.c.bf16 %v703, %v703
        %v858 = vpack.c.bf16 %v704, %v704
        %v859 = vpack.c.bf16 %v705, %v705
        %v860 = vpack.c.bf16 %v706, %v706
        %v861 = vpack.c.bf16 %v707, %v707
        %v862 = vpack.c.bf16 %v708, %v708
        %v863 = vpack.c.bf16 %v709, %v709
        %v864 = vpack.c.bf16 %v710, %v710
        %v865 = vpack.c.bf16 %v711, %v711
        %v866 = vpack.c.bf16 %v712, %v712
        %v867 = vpack.c.bf16 %v713, %v713
        %v868 = vpack.c.bf16 %v714, %v714
        %v869 = vpack.c.bf16 %v715, %v715
        %v870 = vpack.c.bf16 %v716, %v716
        %v871 = vpack.c.bf16 %v717, %v717
        %v872 = vpack.c.bf16 %v718, %v718
        %v873 = vpack.c.bf16 %v719, %v719
        %vm874 = vsmask.f32 4368
        %vm875 = vmor %vm730, %vm874
        %v877 = vshrl.u32 %v842, 16
        %v879 = vrot.slane %v877, 7
        %v880 = vshll.u32 %v842, 16
        %v882 = vor.u32 %v879, %v880
        %v883 = vrot.slane %v879, 4
        %v885 = vshrl.u32 %v843, 16
        %v887 = vrot.slane %v885, 7
        %v888 = vshll.u32 %v843, 16
        %v890 = vor.u32 %v887, %v888
        %v891 = vsel %vm875, %v883, %v890
        %v892 = vrot.slane %v887, 4
        %v894 = vshrl.u32 %v844, 16
        %v896 = vrot.slane %v894, 7
        %v897 = vshll.u32 %v844, 16
        %v899 = vor.u32 %v896, %v897
        %v900 = vrot.slane %v896, 4
        %v902 = vshrl.u32 %v845, 16
        %v904 = vrot.slane %v902, 7
        %v905 = vshll.u32 %v845, 16
        %v907 = vor.u32 %v904, %v905
        %v908 = vsel %vm875, %v900, %v907
        %v909 = vrot.slane %v904, 4
        %v911 = vshrl.u32 %v846, 16
        %v913 = vrot.slane %v911, 7
        %v914 = vshll.u32 %v846, 16
        %v916 = vor.u32 %v913, %v914
        %v917 = vrot.slane %v913, 4
        %v919 = vshrl.u32 %v847, 16
        %v921 = vrot.slane %v919, 7
        %v922 = vshll.u32 %v847, 16
        %v924 = vor.u32 %v921, %v922
        %v925 = vsel %vm875, %v917, %v924
        %v926 = vrot.slane %v921, 4
        %v928 = vshrl.u32 %v848, 16
        %v930 = vrot.slane %v928, 7
        %v931 = vshll.u32 %v848, 16
        %v933 = vor.u32 %v930, %v931
        %v934 = vrot.slane %v930, 4
        %v936 = vshrl.u32 %v849, 16
        %v938 = vrot.slane %v936, 7
        %v939 = vshll.u32 %v849, 16
        %v941 = vor.u32 %v938, %v939
        %v942 = vsel %vm875, %v934, %v941
        %v943 = vrot.slane %v938, 4
        %v945 = vshrl.u32 %v850, 16
        %v947 = vrot.slane %v945, 7
        %v948 = vshll.u32 %v850, 16
        %v950 = vor.u32 %v947, %v948
        %v951 = vrot.slane %v947, 4
        %v953 = vshrl.u32 %v851, 16
        %v955 = vrot.slane %v953, 7
        %v956 = vshll.u32 %v851, 16
        %v958 = vor.u32 %v955, %v956
        %v959 = vsel %vm875, %v951, %v958
        %v960 = vrot.slane %v955, 4
        %v962 = vshrl.u32 %v852, 16
        %v964 = vrot.slane %v962, 7
        %v965 = vshll.u32 %v852, 16
        %v967 = vor.u32 %v964, %v965
        %v968 = vrot.slane %v964, 4
        %v970 = vshrl.u32 %v853, 16
        %v972 = vrot.slane %v970, 7
        %v973 = vshll.u32 %v853, 16
        %v975 = vor.u32 %v972, %v973
        %v976 = vsel %vm875, %v968, %v975
        %v977 = vrot.slane %v972, 4
        %v979 = vshrl.u32 %v854, 16
        %v981 = vrot.slane %v979, 7
        %v982 = vshll.u32 %v854, 16
        %v984 = vor.u32 %v981, %v982
        %v985 = vrot.slane %v981, 4
        %v987 = vshrl.u32 %v855, 16
        %v989 = vrot.slane %v987, 7
        %v990 = vshll.u32 %v855, 16
        %v992 = vor.u32 %v989, %v990
        %v993 = vsel %vm875, %v985, %v992
        %v994 = vrot.slane %v989, 4
        %v996 = vshrl.u32 %v856, 16
        %v998 = vrot.slane %v996, 7
        %v999 = vshll.u32 %v856, 16
        %v1001 = vor.u32 %v998, %v999
        %v1002 = vrot.slane %v998, 4
        %v1004 = vshrl.u32 %v857, 16
        %v1006 = vrot.slane %v1004, 7
        %v1007 = vshll.u32 %v857, 16
        %v1009 = vor.u32 %v1006, %v1007
        %v1010 = vsel %vm875, %v1002, %v1009
        %v1011 = vrot.slane %v1006, 4
        %v1013 = vshrl.u32 %v858, 16
        %v1015 = vrot.slane %v1013, 7
        %v1016 = vshll.u32 %v858, 16
        %v1018 = vor.u32 %v1015, %v1016
        %v1019 = vrot.slane %v1015, 4
        %v1021 = vshrl.u32 %v859, 16
        %v1023 = vrot.slane %v1021, 7
        %v1024 = vshll.u32 %v859, 16
        %v1026 = vor.u32 %v1023, %v1024
        %v1027 = vsel %vm875, %v1019, %v1026
        %v1028 = vrot.slane %v1023, 4
        %v1030 = vshrl.u32 %v860, 16
        %v1032 = vrot.slane %v1030, 7
        %v1033 = vshll.u32 %v860, 16
        %v1035 = vor.u32 %v1032, %v1033
        %v1036 = vrot.slane %v1032, 4
        %v1038 = vshrl.u32 %v861, 16
        %v1040 = vrot.slane %v1038, 7
        %v1041 = vshll.u32 %v861, 16
        %v1043 = vor.u32 %v1040, %v1041
        %v1044 = vsel %vm875, %v1036, %v1043
        %v1045 = vrot.slane %v1040, 4
        %v1047 = vshrl.u32 %v862, 16
        %v1049 = vrot.slane %v1047, 7
        %v1050 = vshll.u32 %v862, 16
        %v1052 = vor.u32 %v1049, %v1050
        %v1053 = vrot.slane %v1049, 4
        %v1055 = vshrl.u32 %v863, 16
        %v1057 = vrot.slane %v1055, 7
        %v1058 = vshll.u32 %v863, 16
        %v1060 = vor.u32 %v1057, %v1058
        %v1061 = vsel %vm875, %v1053, %v1060
        %v1062 = vrot.slane %v1057, 4
        %v1064 = vshrl.u32 %v864, 16
        %v1066 = vrot.slane %v1064, 7
        %v1067 = vshll.u32 %v864, 16
        %v1069 = vor.u32 %v1066, %v1067
        %v1070 = vrot.slane %v1066, 4
        %v1072 = vshrl.u32 %v865, 16
        %v1074 = vrot.slane %v1072, 7
        %v1075 = vshll.u32 %v865, 16
        %v1077 = vor.u32 %v1074, %v1075
        %v1078 = vsel %vm875, %v1070, %v1077
        %v1079 = vrot.slane %v1074, 4
        %v1081 = vshrl.u32 %v866, 16
        %v1083 = vrot.slane %v1081, 7
        %v1084 = vshll.u32 %v866, 16
        %v1086 = vor.u32 %v1083, %v1084
        %v1087 = vrot.slane %v1083, 4
        %v1089 = vshrl.u32 %v867, 16
        %v1091 = vrot.slane %v1089, 7
        %v1092 = vshll.u32 %v867, 16
        %v1094 = vor.u32 %v1091, %v1092
        %v1095 = vsel %vm875, %v1087, %v1094
        %v1096 = vrot.slane %v1091, 4
        %v1098 = vshrl.u32 %v868, 16
        %v1100 = vrot.slane %v1098, 7
        %v1101 = vshll.u32 %v868, 16
        %v1103 = vor.u32 %v1100, %v1101
        %v1104 = vrot.slane %v1100, 4
        %v1106 = vshrl.u32 %v869, 16
        %v1108 = vrot.slane %v1106, 7
        %v1109 = vshll.u32 %v869, 16
        %v1111 = vor.u32 %v1108, %v1109
        %v1112 = vsel %vm875, %v1104, %v1111
        %v1113 = vrot.slane %v1108, 4
        %v1115 = vshrl.u32 %v870, 16
        %v1117 = vrot.slane %v1115, 7
        %v1118 = vshll.u32 %v870, 16
        %v1120 = vor.u32 %v1117, %v1118
        %v1121 = vrot.slane %v1117, 4
        %v1123 = vshrl.u32 %v871, 16
        %v1125 = vrot.slane %v1123, 7
        %v1126 = vshll.u32 %v871, 16
        %v1128 = vor.u32 %v1125, %v1126
        %v1129 = vsel %vm875, %v1121, %v1128
        %v1130 = vrot.slane %v1125, 4
        %v1132 = vshrl.u32 %v872, 16
        %v1134 = vrot.slane %v1132, 7
        %v1135 = vshll.u32 %v872, 16
        %v1137 = vor.u32 %v1134, %v1135
        %v1138 = vrot.slane %v1134, 4
        %v1140 = vshrl.u32 %v873, 16
        %v1142 = vrot.slane %v1140, 7
        %v1143 = vshll.u32 %v873, 16
        %v1145 = vor.u32 %v1142, %v1143
        %v1146 = vsel %vm875, %v1138, %v1145
        %v1147 = vrot.slane %v1142, 4
        %s1196 = scalar_lea.vmem [#allocation2], 12
        %vm1197 = vcmask 27648
        %vm1198 = vmand %vm1197, %vm786
        %v1199 = vld [vmem:[%s1196] sm:$0xf]
        %v1200 = vsel %vm1198, %v882, %v1199
        %1201 = vst [vmem:[%s1196] sm:$0xf] %v1200
        %1202 = vst.msk [vmem:[%s1196 + $0x4] sm:$0xf] %vm720, %v891
        %v1203 = vld [vmem:[%s1196 + $0x8] sm:$0x1]
        %v1204 = vsel %vm731, %v892, %v1203
        %1205 = vst [vmem:[%s1196 + $0x8] sm:$0x1] %v1204
        %v1206 = vld [vmem:[%s1196 + $0xc] sm:$0xf]
        %v1207 = vsel %vm1198, %v899, %v1206
        %1208 = vst [vmem:[%s1196 + $0xc] sm:$0xf] %v1207
        %1209 = vst.msk [vmem:[%s1196 + $0x10] sm:$0xf] %vm720, %v908
        %v1210 = vld [vmem:[%s1196 + $0x14] sm:$0x1]
        %v1211 = vsel %vm731, %v909, %v1210
        %1212 = vst [vmem:[%s1196 + $0x14] sm:$0x1] %v1211
        %v1213 = vld [vmem:[%s1196 + $0x18] sm:$0xf]
        %v1214 = vsel %vm1198, %v916, %v1213
        %1215 = vst [vmem:[%s1196 + $0x18] sm:$0xf] %v1214
        %1216 = vst.msk [vmem:[%s1196 + $0x1c] sm:$0xf] %vm720, %v925
        %v1217 = vld [vmem:[%s1196 + $0x20] sm:$0x1]
        %v1218 = vsel %vm731, %v926, %v1217
        %1219 = vst [vmem:[%s1196 + $0x20] sm:$0x1] %v1218
        %v1220 = vld [vmem:[%s1196 + $0x24] sm:$0xf]
        %v1221 = vsel %vm1198, %v933, %v1220
        %1222 = vst [vmem:[%s1196 + $0x24] sm:$0xf] %v1221
        %1223 = vst.msk [vmem:[%s1196 + $0x28] sm:$0xf] %vm720, %v942
        %v1224 = vld [vmem:[%s1196 + $0x2c] sm:$0x1]
        %v1225 = vsel %vm731, %v943, %v1224
        %1226 = vst [vmem:[%s1196 + $0x2c] sm:$0x1] %v1225
        %v1227 = vld [vmem:[%s1196 + $0x30] sm:$0xf]
        %v1228 = vsel %vm1198, %v950, %v1227
        %1229 = vst [vmem:[%s1196 + $0x30] sm:$0xf] %v1228
        %1230 = vst.msk [vmem:[%s1196 + $0x34] sm:$0xf] %vm720, %v959
        %v1231 = vld [vmem:[%s1196 + $0x38] sm:$0x1]
        %v1232 = vsel %vm731, %v960, %v1231
        %1233 = vst [vmem:[%s1196 + $0x38] sm:$0x1] %v1232
        %v1234 = vld [vmem:[%s1196 + $0x3c] sm:$0xf]
        %v1235 = vsel %vm1198, %v967, %v1234
        %1236 = vst [vmem:[%s1196 + $0x3c] sm:$0xf] %v1235
        %1237 = vst.msk [vmem:[%s1196 + $0x40] sm:$0xf] %vm720, %v976
        %v1238 = vld [vmem:[%s1196 + $0x44] sm:$0x1]
        %v1239 = vsel %vm731, %v977, %v1238
        %1240 = vst [vmem:[%s1196 + $0x44] sm:$0x1] %v1239
        %v1241 = vld [vmem:[%s1196 + $0x48] sm:$0xf]
        %v1242 = vsel %vm1198, %v984, %v1241
        %1243 = vst [vmem:[%s1196 + $0x48] sm:$0xf] %v1242
        %1244 = vst.msk [vmem:[%s1196 + $0x4c] sm:$0xf] %vm720, %v993
        %v1245 = vld [vmem:[%s1196 + $0x50] sm:$0x1]
        %v1246 = vsel %vm731, %v994, %v1245
        %1247 = vst [vmem:[%s1196 + $0x50] sm:$0x1] %v1246
        %v1248 = vld [vmem:[%s1196 + $0x54] sm:$0xf]
        %v1249 = vsel %vm1198, %v1001, %v1248
        %1250 = vst [vmem:[%s1196 + $0x54] sm:$0xf] %v1249
        %1251 = vst.msk [vmem:[%s1196 + $0x58] sm:$0xf] %vm720, %v1010
        %v1252 = vld [vmem:[%s1196 + $0x5c] sm:$0x1]
        %v1253 = vsel %vm731, %v1011, %v1252
        %1254 = vst [vmem:[%s1196 + $0x5c] sm:$0x1] %v1253
        %v1255 = vld [vmem:[%s1196 + $0x60] sm:$0xf]
        %v1256 = vsel %vm1198, %v1018, %v1255
        %1257 = vst [vmem:[%s1196 + $0x60] sm:$0xf] %v1256
        %1258 = vst.msk [vmem:[%s1196 + $0x64] sm:$0xf] %vm720, %v1027
        %v1259 = vld [vmem:[%s1196 + $0x68] sm:$0x1]
        %v1260 = vsel %vm731, %v1028, %v1259
        %1261 = vst [vmem:[%s1196 + $0x68] sm:$0x1] %v1260
        %v1262 = vld [vmem:[%s1196 + $0x6c] sm:$0xf]
        %v1263 = vsel %vm1198, %v1035, %v1262
        %1264 = vst [vmem:[%s1196 + $0x6c] sm:$0xf] %v1263
        %1265 = vst.msk [vmem:[%s1196 + $0x70] sm:$0xf] %vm720, %v1044
        %v1266 = vld [vmem:[%s1196 + $0x74] sm:$0x1]
        %v1267 = vsel %vm731, %v1045, %v1266
        %1268 = vst [vmem:[%s1196 + $0x74] sm:$0x1] %v1267
        %v1269 = vld [vmem:[%s1196 + $0x78] sm:$0xf]
        %v1270 = vsel %vm1198, %v1052, %v1269
        %1271 = vst [vmem:[%s1196 + $0x78] sm:$0xf] %v1270
        %1272 = vst.msk [vmem:[%s1196 + $0x7c] sm:$0xf] %vm720, %v1061
        %v1273 = vld [vmem:[%s1196 + $0x80] sm:$0x1]
        %v1274 = vsel %vm731, %v1062, %v1273
        %1275 = vst [vmem:[%s1196 + $0x80] sm:$0x1] %v1274
        %v1276 = vld [vmem:[%s1196 + $0x84] sm:$0xf]
        %v1277 = vsel %vm1198, %v1069, %v1276
        %1278 = vst [vmem:[%s1196 + $0x84] sm:$0xf] %v1277
        %1279 = vst.msk [vmem:[%s1196 + $0x88] sm:$0xf] %vm720, %v1078
        %v1280 = vld [vmem:[%s1196 + $0x8c] sm:$0x1]
        %v1281 = vsel %vm731, %v1079, %v1280
        %1282 = vst [vmem:[%s1196 + $0x8c] sm:$0x1] %v1281
        %v1283 = vld [vmem:[%s1196 + $0x90] sm:$0xf]
        %v1284 = vsel %vm1198, %v1086, %v1283
        %1285 = vst [vmem:[%s1196 + $0x90] sm:$0xf] %v1284
        %1286 = vst.msk [vmem:[%s1196 + $0x94] sm:$0xf] %vm720, %v1095
        %v1287 = vld [vmem:[%s1196 + $0x98] sm:$0x1]
        %v1288 = vsel %vm731, %v1096, %v1287
        %1289 = vst [vmem:[%s1196 + $0x98] sm:$0x1] %v1288
        %v1290 = vld [vmem:[%s1196 + $0x9c] sm:$0xf]
        %v1291 = vsel %vm1198, %v1103, %v1290
        %1292 = vst [vmem:[%s1196 + $0x9c] sm:$0xf] %v1291
        %1293 = vst.msk [vmem:[%s1196 + $0xa0] sm:$0xf] %vm720, %v1112
        %v1294 = vld [vmem:[%s1196 + $0xa4] sm:$0x1]
        %v1295 = vsel %vm731, %v1113, %v1294
        %1296 = vst [vmem:[%s1196 + $0xa4] sm:$0x1] %v1295
        %v1297 = vld [vmem:[%s1196 + $0xa8] sm:$0xf]
        %v1298 = vsel %vm1198, %v1120, %v1297
        %1299 = vst [vmem:[%s1196 + $0xa8] sm:$0xf] %v1298
        %1300 = vst.msk [vmem:[%s1196 + $0xac] sm:$0xf] %vm720, %v1129
        %v1301 = vld [vmem:[%s1196 + $0xb0] sm:$0x1]
        %v1302 = vsel %vm731, %v1130, %v1301
        %1303 = vst [vmem:[%s1196 + $0xb0] sm:$0x1] %v1302
        %v1304 = vld [vmem:[%s1196 + $0xb4] sm:$0xf]
        %v1305 = vsel %vm1198, %v1137, %v1304
        %1306 = vst [vmem:[%s1196 + $0xb4] sm:$0xf] %v1305
        %1307 = vst.msk [vmem:[%s1196 + $0xb8] sm:$0xf] %vm720, %v1146
        %v1308 = vld [vmem:[%s1196 + $0xbc] sm:$0x1]
        %v1309 = vsel %vm731, %v1147, %v1308
        %1310 = vst [vmem:[%s1196 + $0xbc] sm:$0x1] %v1309
        %v1311 = vld [vmem:[#allocation2] sm:$0xf]
        %v1312 = vld [vmem:[#allocation2 + $0x4] sm:$0xf]
        %v1313 = vld [vmem:[#allocation2 + $0xc] sm:$0xf]
        %v1314 = vld [vmem:[#allocation2 + $0x10] sm:$0xf]
        %v1315 = vld [vmem:[#allocation2 + $0x18] sm:$0xf]
        %v1316 = vld [vmem:[#allocation2 + $0x1c] sm:$0xf]
        %v1317 = vld [vmem:[#allocation2 + $0x24] sm:$0xf]
        %v1318 = vld [vmem:[#allocation2 + $0x28] sm:$0xf]
        %v1319 = vld [vmem:[#allocation2 + $0x30] sm:$0xf]
        %v1320 = vld [vmem:[#allocation2 + $0x34] sm:$0xf]
        %v1321 = vld [vmem:[#allocation2 + $0x3c] sm:$0xf]
        %v1322 = vld [vmem:[#allocation2 + $0x40] sm:$0xf]
        %v1323 = vld [vmem:[#allocation2 + $0x48] sm:$0xf]
        %v1324 = vld [vmem:[#allocation2 + $0x4c] sm:$0xf]
        %v1325 = vld [vmem:[#allocation2 + $0x54] sm:$0xf]
        %v1326 = vld [vmem:[#allocation2 + $0x58] sm:$0xf]
        %v1327 = vld [vmem:[#allocation2 + $0x60] sm:$0xf]
        %v1328 = vld [vmem:[#allocation2 + $0x64] sm:$0xf]
        %v1329 = vld [vmem:[#allocation2 + $0x6c] sm:$0xf]
        %v1330 = vld [vmem:[#allocation2 + $0x70] sm:$0xf]
        %v1331 = vld [vmem:[#allocation2 + $0x78] sm:$0xf]
        %v1332 = vld [vmem:[#allocation2 + $0x7c] sm:$0xf]
        %v1333 = vld [vmem:[#allocation2 + $0x84] sm:$0xf]
        %v1334 = vld [vmem:[#allocation2 + $0x88] sm:$0xf]
        %v1335 = vld [vmem:[#allocation2 + $0x90] sm:$0xf]
        %v1336 = vld [vmem:[#allocation2 + $0x94] sm:$0xf]
        %v1337 = vld [vmem:[#allocation2 + $0x9c] sm:$0xf]
        %v1338 = vld [vmem:[#allocation2 + $0xa0] sm:$0xf]
        %v1339 = vld [vmem:[#allocation2 + $0xa8] sm:$0xf]
        %v1340 = vld [vmem:[#allocation2 + $0xac] sm:$0xf]
        %v1341 = vld [vmem:[#allocation2 + $0xb4] sm:$0xf]
        %v1342 = vld [vmem:[#allocation2 + $0xb8] sm:$0xf]
        %1343 = vst.msk [vmem:[#allocation3] sm:$0xf] %vm720, %v1311
        %1344 = vst.msk [vmem:[#allocation3 + $0x4] sm:$0xf] %vm720, %v1312
        %1345 = vst.msk [vmem:[#allocation3 + $0x8] sm:$0xf] %vm720, %v1313
        %1346 = vst.msk [vmem:[#allocation3 + $0xc] sm:$0xf] %vm720, %v1314
        %1347 = vst.msk [vmem:[#allocation3 + $0x10] sm:$0xf] %vm720, %v1315
        %1348 = vst.msk [vmem:[#allocation3 + $0x14] sm:$0xf] %vm720, %v1316
        %1349 = vst.msk [vmem:[#allocation3 + $0x18] sm:$0xf] %vm720, %v1317
        %1350 = vst.msk [vmem:[#allocation3 + $0x1c] sm:$0xf] %vm720, %v1318
        %1351 = vst.msk [vmem:[#allocation3 + $0x20] sm:$0xf] %vm720, %v1319
        %1352 = vst.msk [vmem:[#allocation3 + $0x24] sm:$0xf] %vm720, %v1320
        %1353 = vst.msk [vmem:[#allocation3 + $0x28] sm:$0xf] %vm720, %v1321
        %1354 = vst.msk [vmem:[#allocation3 + $0x2c] sm:$0xf] %vm720, %v1322
        %1355 = vst.msk [vmem:[#allocation3 + $0x30] sm:$0xf] %vm720, %v1323
        %1356 = vst.msk [vmem:[#allocation3 + $0x34] sm:$0xf] %vm720, %v1324
        %1357 = vst.msk [vmem:[#allocation3 + $0x38] sm:$0xf] %vm720, %v1325
        %1358 = vst.msk [vmem:[#allocation3 + $0x3c] sm:$0xf] %vm720, %v1326
        %1359 = vst.msk [vmem:[#allocation3 + $0x40] sm:$0xf] %vm720, %v1327
        %1360 = vst.msk [vmem:[#allocation3 + $0x44] sm:$0xf] %vm720, %v1328
        %1361 = vst.msk [vmem:[#allocation3 + $0x48] sm:$0xf] %vm720, %v1329
        %1362 = vst.msk [vmem:[#allocation3 + $0x4c] sm:$0xf] %vm720, %v1330
        %1363 = vst.msk [vmem:[#allocation3 + $0x50] sm:$0xf] %vm720, %v1331
        %1364 = vst.msk [vmem:[#allocation3 + $0x54] sm:$0xf] %vm720, %v1332
        %1365 = vst.msk [vmem:[#allocation3 + $0x58] sm:$0xf] %vm720, %v1333
        %1366 = vst.msk [vmem:[#allocation3 + $0x5c] sm:$0xf] %vm720, %v1334
        %1367 = vst.msk [vmem:[#allocation3 + $0x60] sm:$0xf] %vm720, %v1335
        %1368 = vst.msk [vmem:[#allocation3 + $0x64] sm:$0xf] %vm720, %v1336
        %1369 = vst.msk [vmem:[#allocation3 + $0x68] sm:$0xf] %vm720, %v1337
        %1370 = vst.msk [vmem:[#allocation3 + $0x6c] sm:$0xf] %vm720, %v1338
        %1371 = vst.msk [vmem:[#allocation3 + $0x70] sm:$0xf] %vm720, %v1339
        %1372 = vst.msk [vmem:[#allocation3 + $0x74] sm:$0xf] %vm720, %v1340
        %1373 = vst.msk [vmem:[#allocation3 + $0x78] sm:$0xf] %vm720, %v1341
        %1374 = vst.msk [vmem:[#allocation3 + $0x7c] sm:$0xf] %vm720, %v1342
        %v1375 = vld [vmem:[#allocation2] sm:$0xf]
        %v1376 = vld [vmem:[#allocation2 + $0x4] sm:$0xf]
        %v1377 = vld [vmem:[#allocation2 + $0x8] sm:$0x1]
        %v1378 = vld [vmem:[#allocation2 + $0xc] sm:$0xf]
        %v1379 = vld [vmem:[#allocation2 + $0x10] sm:$0xf]
        %v1380 = vld [vmem:[#allocation2 + $0x14] sm:$0x1]
        %v1381 = vld [vmem:[#allocation2 + $0x18] sm:$0xf]
        %v1382 = vld [vmem:[#allocation2 + $0x1c] sm:$0xf]
        %v1383 = vld [vmem:[#allocation2 + $0x20] sm:$0x1]
        %v1384 = vld [vmem:[#allocation2 + $0x24] sm:$0xf]
        %v1385 = vld [vmem:[#allocation2 + $0x28] sm:$0xf]
        %v1386 = vld [vmem:[#allocation2 + $0x2c] sm:$0x1]
        %v1387 = vld [vmem:[#allocation2 + $0x30] sm:$0xf]
        %v1388 = vld [vmem:[#allocation2 + $0x34] sm:$0xf]
        %v1389 = vld [vmem:[#allocation2 + $0x38] sm:$0x1]
        %v1390 = vld [vmem:[#allocation2 + $0x3c] sm:$0xf]
        %v1391 = vld [vmem:[#allocation2 + $0x40] sm:$0xf]
        %v1392 = vld [vmem:[#allocation2 + $0x44] sm:$0x1]
        %v1393 = vld [vmem:[#allocation2 + $0x48] sm:$0xf]
        %v1394 = vld [vmem:[#allocation2 + $0x4c] sm:$0xf]
        %v1395 = vld [vmem:[#allocation2 + $0x50] sm:$0x1]
        %v1396 = vld [vmem:[#allocation2 + $0x54] sm:$0xf]
        %v1397 = vld [vmem:[#allocation2 + $0x58] sm:$0xf]
        %v1398 = vld [vmem:[#allocation2 + $0x5c] sm:$0x1]
        %v1399 = vld [vmem:[#allocation2 + $0x60] sm:$0xf]
        %v1400 = vld [vmem:[#allocation2 + $0x64] sm:$0xf]
        %v1401 = vld [vmem:[#allocation2 + $0x68] sm:$0x1]
        %v1402 = vld [vmem:[#allocation2 + $0x6c] sm:$0xf]
        %v1403 = vld [vmem:[#allocation2 + $0x70] sm:$0xf]
        %v1404 = vld [vmem:[#allocation2 + $0x74] sm:$0x1]
        %v1405 = vld [vmem:[#allocation2 + $0x78] sm:$0xf]
        %v1406 = vld [vmem:[#allocation2 + $0x7c] sm:$0xf]
        %v1407 = vld [vmem:[#allocation2 + $0x80] sm:$0x1]
        %v1408 = vld [vmem:[#allocation2 + $0x84] sm:$0xf]
        %v1409 = vld [vmem:[#allocation2 + $0x88] sm:$0xf]
        %v1410 = vld [vmem:[#allocation2 + $0x8c] sm:$0x1]
        %v1411 = vld [vmem:[#allocation2 + $0x90] sm:$0xf]
        %v1412 = vld [vmem:[#allocation2 + $0x94] sm:$0xf]
        %v1413 = vld [vmem:[#allocation2 + $0x98] sm:$0x1]
        %v1414 = vld [vmem:[#allocation2 + $0x9c] sm:$0xf]
        %v1415 = vld [vmem:[#allocation2 + $0xa0] sm:$0xf]
        %v1416 = vld [vmem:[#allocation2 + $0xa4] sm:$0x1]
        %v1417 = vld [vmem:[#allocation2 + $0xa8] sm:$0xf]
        %v1418 = vld [vmem:[#allocation2 + $0xac] sm:$0xf]
        %v1419 = vld [vmem:[#allocation2 + $0xb0] sm:$0x1]
        %v1420 = vld [vmem:[#allocation2 + $0xb4] sm:$0xf]
        %v1421 = vld [vmem:[#allocation2 + $0xb8] sm:$0xf]
        %v1422 = vld [vmem:[#allocation2 + $0xbc] sm:$0x1]
        %vm1423 = vsmask.f32 3328
        %vm1424 = vsmask.f32 7440
        %vm1425 = vmor %vm1423, %vm1424
        %v1427 = vshrl.u32 %v1375, 16
        %v1429 = vrot.slane %v1427, 4
        %v1430 = vshll.u32 %v1375, 16
        %v1432 = vrot.slane %v1430, 5
        %v1433 = vor.u32 %v1429, %v1432
        %v1434 = vrot.slane %v1433, 4
        %v1436 = vshll.u32 %v1376, 16
        %v1438 = vrot.slane %v1436, 5
        %v1439 = vsel %vm1425, %v1434, %v1438
        %v1440 = vshrl.u32 %v1376, 16
        %v1442 = vrot.slane %v1440, 4
        %v1443 = vor.u32 %v1442, %v1438
        %v1444 = vrot.slane %v1443, 4
        %v1446 = vshll.u32 %v1377, 16
        %v1448 = vrot.slane %v1446, 5
        %v1449 = vsel %vm1425, %v1444, %v1448
        %v1451 = vshrl.u32 %v1378, 16
        %v1453 = vrot.slane %v1451, 4
        %v1454 = vshll.u32 %v1378, 16
        %v1456 = vrot.slane %v1454, 5
        %v1457 = vor.u32 %v1453, %v1456
        %v1458 = vrot.slane %v1457, 4
        %v1460 = vshll.u32 %v1379, 16
        %v1462 = vrot.slane %v1460, 5
        %v1463 = vsel %vm1425, %v1458, %v1462
        %v1464 = vshrl.u32 %v1379, 16
        %v1466 = vrot.slane %v1464, 4
        %v1467 = vor.u32 %v1466, %v1462
        %v1468 = vrot.slane %v1467, 4
        %v1470 = vshll.u32 %v1380, 16
        %v1472 = vrot.slane %v1470, 5
        %v1473 = vsel %vm1425, %v1468, %v1472
        %v1475 = vshrl.u32 %v1381, 16
        %v1477 = vrot.slane %v1475, 4
        %v1478 = vshll.u32 %v1381, 16
        %v1480 = vrot.slane %v1478, 5
        %v1481 = vor.u32 %v1477, %v1480
        %v1482 = vrot.slane %v1481, 4
        %v1484 = vshll.u32 %v1382, 16
        %v1486 = vrot.slane %v1484, 5
        %v1487 = vsel %vm1425, %v1482, %v1486
        %v1488 = vshrl.u32 %v1382, 16
        %v1490 = vrot.slane %v1488, 4
        %v1491 = vor.u32 %v1490, %v1486
        %v1492 = vrot.slane %v1491, 4
        %v1494 = vshll.u32 %v1383, 16
        %v1496 = vrot.slane %v1494, 5
        %v1497 = vsel %vm1425, %v1492, %v1496
        %v1499 = vshrl.u32 %v1384, 16
        %v1501 = vrot.slane %v1499, 4
        %v1502 = vshll.u32 %v1384, 16
        %v1504 = vrot.slane %v1502, 5
        %v1505 = vor.u32 %v1501, %v1504
        %v1506 = vrot.slane %v1505, 4
        %v1508 = vshll.u32 %v1385, 16
        %v1510 = vrot.slane %v1508, 5
        %v1511 = vsel %vm1425, %v1506, %v1510
        %v1512 = vshrl.u32 %v1385, 16
        %v1514 = vrot.slane %v1512, 4
        %v1515 = vor.u32 %v1514, %v1510
        %v1516 = vrot.slane %v1515, 4
        %v1518 = vshll.u32 %v1386, 16
        %v1520 = vrot.slane %v1518, 5
        %v1521 = vsel %vm1425, %v1516, %v1520
        %v1523 = vshrl.u32 %v1387, 16
        %v1525 = vrot.slane %v1523, 4
        %v1526 = vshll.u32 %v1387, 16
        %v1528 = vrot.slane %v1526, 5
        %v1529 = vor.u32 %v1525, %v1528
        %v1530 = vrot.slane %v1529, 4
        %v1532 = vshll.u32 %v1388, 16
        %v1534 = vrot.slane %v1532, 5
        %v1535 = vsel %vm1425, %v1530, %v1534
        %v1536 = vshrl.u32 %v1388, 16
        %v1538 = vrot.slane %v1536, 4
        %v1539 = vor.u32 %v1538, %v1534
        %v1540 = vrot.slane %v1539, 4
        %v1542 = vshll.u32 %v1389, 16
        %v1544 = vrot.slane %v1542, 5
        %v1545 = vsel %vm1425, %v1540, %v1544
        %v1547 = vshrl.u32 %v1390, 16
        %v1549 = vrot.slane %v1547, 4
        %v1550 = vshll.u32 %v1390, 16
        %v1552 = vrot.slane %v1550, 5
        %v1553 = vor.u32 %v1549, %v1552
        %v1554 = vrot.slane %v1553, 4
        %v1556 = vshll.u32 %v1391, 16
        %v1558 = vrot.slane %v1556, 5
        %v1559 = vsel %vm1425, %v1554, %v1558
        %v1560 = vshrl.u32 %v1391, 16
        %v1562 = vrot.slane %v1560, 4
        %v1563 = vor.u32 %v1562, %v1558
        %v1564 = vrot.slane %v1563, 4
        %v1566 = vshll.u32 %v1392, 16
        %v1568 = vrot.slane %v1566, 5
        %v1569 = vsel %vm1425, %v1564, %v1568
        %v1571 = vshrl.u32 %v1393, 16
        %v1573 = vrot.slane %v1571, 4
        %v1574 = vshll.u32 %v1393, 16
        %v1576 = vrot.slane %v1574, 5
        %v1577 = vor.u32 %v1573, %v1576
        %v1578 = vrot.slane %v1577, 4
        %v1580 = vshll.u32 %v1394, 16
        %v1582 = vrot.slane %v1580, 5
        %v1583 = vsel %vm1425, %v1578, %v1582
        %v1584 = vshrl.u32 %v1394, 16
        %v1586 = vrot.slane %v1584, 4
        %v1587 = vor.u32 %v1586, %v1582
        %v1588 = vrot.slane %v1587, 4
        %v1590 = vshll.u32 %v1395, 16
        %v1592 = vrot.slane %v1590, 5
        %v1593 = vsel %vm1425, %v1588, %v1592
        %v1595 = vshrl.u32 %v1396, 16
        %v1597 = vrot.slane %v1595, 4
        %v1598 = vshll.u32 %v1396, 16
        %v1600 = vrot.slane %v1598, 5
        %v1601 = vor.u32 %v1597, %v1600
        %v1602 = vrot.slane %v1601, 4
        %v1604 = vshll.u32 %v1397, 16
        %v1606 = vrot.slane %v1604, 5
        %v1607 = vsel %vm1425, %v1602, %v1606
        %v1608 = vshrl.u32 %v1397, 16
        %v1610 = vrot.slane %v1608, 4
        %v1611 = vor.u32 %v1610, %v1606
        %v1612 = vrot.slane %v1611, 4
        %v1614 = vshll.u32 %v1398, 16
        %v1616 = vrot.slane %v1614, 5
        %v1617 = vsel %vm1425, %v1612, %v1616
        %v1619 = vshrl.u32 %v1399, 16
        %v1621 = vrot.slane %v1619, 4
        %v1622 = vshll.u32 %v1399, 16
        %v1624 = vrot.slane %v1622, 5
        %v1625 = vor.u32 %v1621, %v1624
        %v1626 = vrot.slane %v1625, 4
        %v1628 = vshll.u32 %v1400, 16
        %v1630 = vrot.slane %v1628, 5
        %v1631 = vsel %vm1425, %v1626, %v1630
        %v1632 = vshrl.u32 %v1400, 16
        %v1634 = vrot.slane %v1632, 4
        %v1635 = vor.u32 %v1634, %v1630
        %v1636 = vrot.slane %v1635, 4
        %v1638 = vshll.u32 %v1401, 16
        %v1640 = vrot.slane %v1638, 5
        %v1641 = vsel %vm1425, %v1636, %v1640
        %v1643 = vshrl.u32 %v1402, 16
        %v1645 = vrot.slane %v1643, 4
        %v1646 = vshll.u32 %v1402, 16
        %v1648 = vrot.slane %v1646, 5
        %v1649 = vor.u32 %v1645, %v1648
        %v1650 = vrot.slane %v1649, 4
        %v1652 = vshll.u32 %v1403, 16
        %v1654 = vrot.slane %v1652, 5
        %v1655 = vsel %vm1425, %v1650, %v1654
        %v1656 = vshrl.u32 %v1403, 16
        %v1658 = vrot.slane %v1656, 4
        %v1659 = vor.u32 %v1658, %v1654
        %v1660 = vrot.slane %v1659, 4
        %v1662 = vshll.u32 %v1404, 16
        %v1664 = vrot.slane %v1662, 5
        %v1665 = vsel %vm1425, %v1660, %v1664
        %v1667 = vshrl.u32 %v1405, 16
        %v1669 = vrot.slane %v1667, 4
        %v1670 = vshll.u32 %v1405, 16
        %v1672 = vrot.slane %v1670, 5
        %v1673 = vor.u32 %v1669, %v1672
        %v1674 = vrot.slane %v1673, 4
        %v1676 = vshll.u32 %v1406, 16
        %v1678 = vrot.slane %v1676, 5
        %v1679 = vsel %vm1425, %v1674, %v1678
        %v1680 = vshrl.u32 %v1406, 16
        %v1682 = vrot.slane %v1680, 4
        %v1683 = vor.u32 %v1682, %v1678
        %v1684 = vrot.slane %v1683, 4
        %v1686 = vshll.u32 %v1407, 16
        %v1688 = vrot.slane %v1686, 5
        %v1689 = vsel %vm1425, %v1684, %v1688
        %v1691 = vshrl.u32 %v1408, 16
        %v1693 = vrot.slane %v1691, 4
        %v1694 = vshll.u32 %v1408, 16
        %v1696 = vrot.slane %v1694, 5
        %v1697 = vor.u32 %v1693, %v1696
        %v1698 = vrot.slane %v1697, 4
        %v1700 = vshll.u32 %v1409, 16
        %v1702 = vrot.slane %v1700, 5
        %v1703 = vsel %vm1425, %v1698, %v1702
        %v1704 = vshrl.u32 %v1409, 16
        %v1706 = vrot.slane %v1704, 4
        %v1707 = vor.u32 %v1706, %v1702
        %v1708 = vrot.slane %v1707, 4
        %v1710 = vshll.u32 %v1410, 16
        %v1712 = vrot.slane %v1710, 5
        %v1713 = vsel %vm1425, %v1708, %v1712
        %v1715 = vshrl.u32 %v1411, 16
        %v1717 = vrot.slane %v1715, 4
        %v1718 = vshll.u32 %v1411, 16
        %v1720 = vrot.slane %v1718, 5
        %v1721 = vor.u32 %v1717, %v1720
        %v1722 = vrot.slane %v1721, 4
        %v1724 = vshll.u32 %v1412, 16
        %v1726 = vrot.slane %v1724, 5
        %v1727 = vsel %vm1425, %v1722, %v1726
        %v1728 = vshrl.u32 %v1412, 16
        %v1730 = vrot.slane %v1728, 4
        %v1731 = vor.u32 %v1730, %v1726
        %v1732 = vrot.slane %v1731, 4
        %v1734 = vshll.u32 %v1413, 16
        %v1736 = vrot.slane %v1734, 5
        %v1737 = vsel %vm1425, %v1732, %v1736
        %v1739 = vshrl.u32 %v1414, 16
        %v1741 = vrot.slane %v1739, 4
        %v1742 = vshll.u32 %v1414, 16
        %v1744 = vrot.slane %v1742, 5
        %v1745 = vor.u32 %v1741, %v1744
        %v1746 = vrot.slane %v1745, 4
        %v1748 = vshll.u32 %v1415, 16
        %v1750 = vrot.slane %v1748, 5
        %v1751 = vsel %vm1425, %v1746, %v1750
        %v1752 = vshrl.u32 %v1415, 16
        %v1754 = vrot.slane %v1752, 4
        %v1755 = vor.u32 %v1754, %v1750
        %v1756 = vrot.slane %v1755, 4
        %v1758 = vshll.u32 %v1416, 16
        %v1760 = vrot.slane %v1758, 5
        %v1761 = vsel %vm1425, %v1756, %v1760
        %v1763 = vshrl.u32 %v1417, 16
        %v1765 = vrot.slane %v1763, 4
        %v1766 = vshll.u32 %v1417, 16
        %v1768 = vrot.slane %v1766, 5
        %v1769 = vor.u32 %v1765, %v1768
        %v1770 = vrot.slane %v1769, 4
        %v1772 = vshll.u32 %v1418, 16
        %v1774 = vrot.slane %v1772, 5
        %v1775 = vsel %vm1425, %v1770, %v1774
        %v1776 = vshrl.u32 %v1418, 16
        %v1778 = vrot.slane %v1776, 4
        %v1779 = vor.u32 %v1778, %v1774
        %v1780 = vrot.slane %v1779, 4
        %v1782 = vshll.u32 %v1419, 16
        %v1784 = vrot.slane %v1782, 5
        %v1785 = vsel %vm1425, %v1780, %v1784
        %v1787 = vshrl.u32 %v1420, 16
        %v1789 = vrot.slane %v1787, 4
        %v1790 = vshll.u32 %v1420, 16
        %v1792 = vrot.slane %v1790, 5
        %v1793 = vor.u32 %v1789, %v1792
        %v1794 = vrot.slane %v1793, 4
        %v1796 = vshll.u32 %v1421, 16
        %v1798 = vrot.slane %v1796, 5
        %v1799 = vsel %vm1425, %v1794, %v1798
        %v1800 = vshrl.u32 %v1421, 16
        %v1802 = vrot.slane %v1800, 4
        %v1803 = vor.u32 %v1802, %v1798
        %v1804 = vrot.slane %v1803, 4
        %v1806 = vshll.u32 %v1422, 16
        %v1808 = vrot.slane %v1806, 5
        %v1809 = vsel %vm1425, %v1804, %v1808
        %1810 = vrot.lane.b32.xlu0 %v1439, 4
        %v1811 = vpop.permute.xlu0 %1810
        %1812 = vrot.lane.b32.xlu0 %v1449, 4
        %v1813 = vpop.permute.xlu0 %1812
        %1814 = vrot.lane.b32.xlu0 %v1463, 4
        %v1815 = vpop.permute.xlu0 %1814
        %1816 = vrot.lane.b32.xlu0 %v1473, 4
        %v1817 = vpop.permute.xlu0 %1816
        %1818 = vrot.lane.b32.xlu0 %v1487, 4
        %v1819 = vpop.permute.xlu0 %1818
        %1820 = vrot.lane.b32.xlu0 %v1497, 4
        %v1821 = vpop.permute.xlu0 %1820
        %1822 = vrot.lane.b32.xlu0 %v1511, 4
        %v1823 = vpop.permute.xlu0 %1822
        %1824 = vrot.lane.b32.xlu0 %v1521, 4
        %v1825 = vpop.permute.xlu0 %1824
        %1826 = vrot.lane.b32.xlu0 %v1535, 4
        %v1827 = vpop.permute.xlu0 %1826
        %1828 = vrot.lane.b32.xlu0 %v1545, 4
        %v1829 = vpop.permute.xlu0 %1828
        %1830 = vrot.lane.b32.xlu0 %v1559, 4
        %v1831 = vpop.permute.xlu0 %1830
        %1832 = vrot.lane.b32.xlu0 %v1569, 4
        %v1833 = vpop.permute.xlu0 %1832
        %1834 = vrot.lane.b32.xlu0 %v1583, 4
        %v1835 = vpop.permute.xlu0 %1834
        %1836 = vrot.lane.b32.xlu0 %v1593, 4
        %v1837 = vpop.permute.xlu0 %1836
        %1838 = vrot.lane.b32.xlu0 %v1607, 4
        %v1839 = vpop.permute.xlu0 %1838
        %1840 = vrot.lane.b32.xlu0 %v1617, 4
        %v1841 = vpop.permute.xlu0 %1840
        %1842 = vrot.lane.b32.xlu0 %v1631, 4
        %v1843 = vpop.permute.xlu0 %1842
        %1844 = vrot.lane.b32.xlu0 %v1641, 4
        %v1845 = vpop.permute.xlu0 %1844
        %1846 = vrot.lane.b32.xlu0 %v1655, 4
        %v1847 = vpop.permute.xlu0 %1846
        %1848 = vrot.lane.b32.xlu0 %v1665, 4
        %v1849 = vpop.permute.xlu0 %1848
        %1850 = vrot.lane.b32.xlu0 %v1679, 4
        %v1851 = vpop.permute.xlu0 %1850
        %1852 = vrot.lane.b32.xlu0 %v1689, 4
        %v1853 = vpop.permute.xlu0 %1852
        %1854 = vrot.lane.b32.xlu0 %v1703, 4
        %v1855 = vpop.permute.xlu0 %1854
        %1856 = vrot.lane.b32.xlu0 %v1713, 4
        %v1857 = vpop.permute.xlu0 %1856
        %1858 = vrot.lane.b32.xlu0 %v1727, 4
        %v1859 = vpop.permute.xlu0 %1858
        %1860 = vrot.lane.b32.xlu0 %v1737, 4
        %v1861 = vpop.permute.xlu0 %1860
        %1862 = vrot.lane.b32.xlu0 %v1751, 4
        %v1863 = vpop.permute.xlu0 %1862
        %1864 = vrot.lane.b32.xlu0 %v1761, 4
        %v1865 = vpop.permute.xlu0 %1864
        %1866 = vrot.lane.b32.xlu0 %v1775, 4
        %v1867 = vpop.permute.xlu0 %1866
        %1868 = vrot.lane.b32.xlu0 %v1785, 4
        %v1869 = vpop.permute.xlu0 %1868
        %1870 = vrot.lane.b32.xlu0 %v1799, 4
        %v1871 = vpop.permute.xlu0 %1870
        %1872 = vrot.lane.b32.xlu0 %v1809, 4
        %v1873 = vpop.permute.xlu0 %1872
        %vm1906 = vcmask 60448
        %1907 = vst.msk [vmem:[#allocation3] sm:$0xf] %vm1906, %v1811
        %1908 = vst.msk [vmem:[#allocation3 + $0x4] sm:$0xf] %vm1906, %v1813
        %1909 = vst.msk [vmem:[#allocation3 + $0x8] sm:$0xf] %vm1906, %v1815
        %1910 = vst.msk [vmem:[#allocation3 + $0xc] sm:$0xf] %vm1906, %v1817
        %1911 = vst.msk [vmem:[#allocation3 + $0x10] sm:$0xf] %vm1906, %v1819
        %1912 = vst.msk [vmem:[#allocation3 + $0x14] sm:$0xf] %vm1906, %v1821
        %1913 = vst.msk [vmem:[#allocation3 + $0x18] sm:$0xf] %vm1906, %v1823
        %1914 = vst.msk [vmem:[#allocation3 + $0x1c] sm:$0xf] %vm1906, %v1825
        %1915 = vst.msk [vmem:[#allocation3 + $0x20] sm:$0xf] %vm1906, %v1827
        %1916 = vst.msk [vmem:[#allocation3 + $0x24] sm:$0xf] %vm1906, %v1829
        %1917 = vst.msk [vmem:[#allocation3 + $0x28] sm:$0xf] %vm1906, %v1831
        %1918 = vst.msk [vmem:[#allocation3 + $0x2c] sm:$0xf] %vm1906, %v1833
        %1919 = vst.msk [vmem:[#allocation3 + $0x30] sm:$0xf] %vm1906, %v1835
        %1920 = vst.msk [vmem:[#allocation3 + $0x34] sm:$0xf] %vm1906, %v1837
        %1921 = vst.msk [vmem:[#allocation3 + $0x38] sm:$0xf] %vm1906, %v1839
        %1922 = vst.msk [vmem:[#allocation3 + $0x3c] sm:$0xf] %vm1906, %v1841
        %1923 = vst.msk [vmem:[#allocation3 + $0x40] sm:$0xf] %vm1906, %v1843
        %1924 = vst.msk [vmem:[#allocation3 + $0x44] sm:$0xf] %vm1906, %v1845
        %1925 = vst.msk [vmem:[#allocation3 + $0x48] sm:$0xf] %vm1906, %v1847
        %1926 = vst.msk [vmem:[#allocation3 + $0x4c] sm:$0xf] %vm1906, %v1849
        %1927 = vst.msk [vmem:[#allocation3 + $0x50] sm:$0xf] %vm1906, %v1851
        %1928 = vst.msk [vmem:[#allocation3 + $0x54] sm:$0xf] %vm1906, %v1853
        %1929 = vst.msk [vmem:[#allocation3 + $0x58] sm:$0xf] %vm1906, %v1855
        %1930 = vst.msk [vmem:[#allocation3 + $0x5c] sm:$0xf] %vm1906, %v1857
        %1931 = vst.msk [vmem:[#allocation3 + $0x60] sm:$0xf] %vm1906, %v1859
        %1932 = vst.msk [vmem:[#allocation3 + $0x64] sm:$0xf] %vm1906, %v1861
        %1933 = vst.msk [vmem:[#allocation3 + $0x68] sm:$0xf] %vm1906, %v1863
        %1934 = vst.msk [vmem:[#allocation3 + $0x6c] sm:$0xf] %vm1906, %v1865
        %1935 = vst.msk [vmem:[#allocation3 + $0x70] sm:$0xf] %vm1906, %v1867
        %1936 = vst.msk [vmem:[#allocation3 + $0x74] sm:$0xf] %vm1906, %v1869
        %1937 = vst.msk [vmem:[#allocation3 + $0x78] sm:$0xf] %vm1906, %v1871
        %1938 = vst.msk [vmem:[#allocation3 + $0x7c] sm:$0xf] %vm1906, %v1873
        %v1939 = vld [vmem:[#allocation2] sm:$0xe]
        %v1940 = vld [vmem:[#allocation2 + $0x4] sm:$0xf]
        %v1941 = vld [vmem:[#allocation2 + $0x8] sm:$0x1]
        %v1942 = vld [vmem:[#allocation2 + $0xc] sm:$0xe]
        %v1943 = vld [vmem:[#allocation2 + $0x10] sm:$0xf]
        %v1944 = vld [vmem:[#allocation2 + $0x14] sm:$0x1]
        %v1945 = vld [vmem:[#allocation2 + $0x18] sm:$0xe]
        %v1946 = vld [vmem:[#allocation2 + $0x1c] sm:$0xf]
        %v1947 = vld [vmem:[#allocation2 + $0x20] sm:$0x1]
        %v1948 = vld [vmem:[#allocation2 + $0x24] sm:$0xe]
        %v1949 = vld [vmem:[#allocation2 + $0x28] sm:$0xf]
        %v1950 = vld [vmem:[#allocation2 + $0x2c] sm:$0x1]
        %v1951 = vld [vmem:[#allocation2 + $0x30] sm:$0xe]
        %v1952 = vld [vmem:[#allocation2 + $0x34] sm:$0xf]
        %v1953 = vld [vmem:[#allocation2 + $0x38] sm:$0x1]
        %v1954 = vld [vmem:[#allocation2 + $0x3c] sm:$0xe]
        %v1955 = vld [vmem:[#allocation2 + $0x40] sm:$0xf]
        %v1956 = vld [vmem:[#allocation2 + $0x44] sm:$0x1]
        %v1957 = vld [vmem:[#allocation2 + $0x48] sm:$0xe]
        %v1958 = vld [vmem:[#allocation2 + $0x4c] sm:$0xf]
        %v1959 = vld [vmem:[#allocation2 + $0x50] sm:$0x1]
        %v1960 = vld [vmem:[#allocation2 + $0x54] sm:$0xe]
        %v1961 = vld [vmem:[#allocation2 + $0x58] sm:$0xf]
        %v1962 = vld [vmem:[#allocation2 + $0x5c] sm:$0x1]
        %v1963 = vld [vmem:[#allocation2 + $0x60] sm:$0xe]
        %v1964 = vld [vmem:[#allocation2 + $0x64] sm:$0xf]
        %v1965 = vld [vmem:[#allocation2 + $0x68] sm:$0x1]
        %v1966 = vld [vmem:[#allocation2 + $0x6c] sm:$0xe]
        %v1967 = vld [vmem:[#allocation2 + $0x70] sm:$0xf]
        %v1968 = vld [vmem:[#allocation2 + $0x74] sm:$0x1]
        %v1969 = vld [vmem:[#allocation2 + $0x78] sm:$0xe]
        %v1970 = vld [vmem:[#allocation2 + $0x7c] sm:$0xf]
        %v1971 = vld [vmem:[#allocation2 + $0x80] sm:$0x1]
        %v1972 = vld [vmem:[#allocation2 + $0x84] sm:$0xe]
        %v1973 = vld [vmem:[#allocation2 + $0x88] sm:$0xf]
        %v1974 = vld [vmem:[#allocation2 + $0x8c] sm:$0x1]
        %v1975 = vld [vmem:[#allocation2 + $0x90] sm:$0xe]
        %v1976 = vld [vmem:[#allocation2 + $0x94] sm:$0xf]
        %v1977 = vld [vmem:[#allocation2 + $0x98] sm:$0x1]
        %v1978 = vld [vmem:[#allocation2 + $0x9c] sm:$0xe]
        %v1979 = vld [vmem:[#allocation2 + $0xa0] sm:$0xf]
        %v1980 = vld [vmem:[#allocation2 + $0xa4] sm:$0x1]
        %v1981 = vld [vmem:[#allocation2 + $0xa8] sm:$0xe]
        %v1982 = vld [vmem:[#allocation2 + $0xac] sm:$0xf]
        %v1983 = vld [vmem:[#allocation2 + $0xb0] sm:$0x1]
        %v1984 = vld [vmem:[#allocation2 + $0xb4] sm:$0xe]
        %v1985 = vld [vmem:[#allocation2 + $0xb8] sm:$0xf]
        %v1986 = vld [vmem:[#allocation2 + $0xbc] sm:$0x1]
        %vm2035 = vcmask 1042432
        %vm2036 = vcmask 1046532
        %vm2037 = vmor %vm2035, %vm2036
        %v2038 = vrot.slane %v1939, 5
        %v2039 = vrot.slane %v2038, 4
        %v2040 = vrot.slane %v1940, 5
        %v2041 = vsel %vm2037, %v2039, %v2040
        %v2042 = vrot.slane %v2040, 4
        %v2043 = vrot.slane %v1941, 5
        %v2044 = vsel %vm2037, %v2042, %v2043
        %v2045 = vrot.slane %v1942, 5
        %v2046 = vrot.slane %v2045, 4
        %v2047 = vrot.slane %v1943, 5
        %v2048 = vsel %vm2037, %v2046, %v2047
        %v2049 = vrot.slane %v2047, 4
        %v2050 = vrot.slane %v1944, 5
        %v2051 = vsel %vm2037, %v2049, %v2050
        %v2052 = vrot.slane %v1945, 5
        %v2053 = vrot.slane %v2052, 4
        %v2054 = vrot.slane %v1946, 5
        %v2055 = vsel %vm2037, %v2053, %v2054
        %v2056 = vrot.slane %v2054, 4
        %v2057 = vrot.slane %v1947, 5
        %v2058 = vsel %vm2037, %v2056, %v2057
        %v2059 = vrot.slane %v1948, 5
        %v2060 = vrot.slane %v2059, 4
        %v2061 = vrot.slane %v1949, 5
        %v2062 = vsel %vm2037, %v2060, %v2061
        %v2063 = vrot.slane %v2061, 4
        %v2064 = vrot.slane %v1950, 5
        %v2065 = vsel %vm2037, %v2063, %v2064
        %v2066 = vrot.slane %v1951, 5
        %v2067 = vrot.slane %v2066, 4
        %v2068 = vrot.slane %v1952, 5
        %v2069 = vsel %vm2037, %v2067, %v2068
        %v2070 = vrot.slane %v2068, 4
        %v2071 = vrot.slane %v1953, 5
        %v2072 = vsel %vm2037, %v2070, %v2071
        %v2073 = vrot.slane %v1954, 5
        %v2074 = vrot.slane %v2073, 4
        %v2075 = vrot.slane %v1955, 5
        %v2076 = vsel %vm2037, %v2074, %v2075
        %v2077 = vrot.slane %v2075, 4
        %v2078 = vrot.slane %v1956, 5
        %v2079 = vsel %vm2037, %v2077, %v2078
        %v2080 = vrot.slane %v1957, 5
        %v2081 = vrot.slane %v2080, 4
        %v2082 = vrot.slane %v1958, 5
        %v2083 = vsel %vm2037, %v2081, %v2082
        %v2084 = vrot.slane %v2082, 4
        %v2085 = vrot.slane %v1959, 5
        %v2086 = vsel %vm2037, %v2084, %v2085
        %v2087 = vrot.slane %v1960, 5
        %v2088 = vrot.slane %v2087, 4
        %v2089 = vrot.slane %v1961, 5
        %v2090 = vsel %vm2037, %v2088, %v2089
        %v2091 = vrot.slane %v2089, 4
        %v2092 = vrot.slane %v1962, 5
        %v2093 = vsel %vm2037, %v2091, %v2092
        %v2094 = vrot.slane %v1963, 5
        %v2095 = vrot.slane %v2094, 4
        %v2096 = vrot.slane %v1964, 5
        %v2097 = vsel %vm2037, %v2095, %v2096
        %v2098 = vrot.slane %v2096, 4
        %v2099 = vrot.slane %v1965, 5
        %v2100 = vsel %vm2037, %v2098, %v2099
        %v2101 = vrot.slane %v1966, 5
        %v2102 = vrot.slane %v2101, 4
        %v2103 = vrot.slane %v1967, 5
        %v2104 = vsel %vm2037, %v2102, %v2103
        %v2105 = vrot.slane %v2103, 4
        %v2106 = vrot.slane %v1968, 5
        %v2107 = vsel %vm2037, %v2105, %v2106
        %v2108 = vrot.slane %v1969, 5
        %v2109 = vrot.slane %v2108, 4
        %v2110 = vrot.slane %v1970, 5
        %v2111 = vsel %vm2037, %v2109, %v2110
        %v2112 = vrot.slane %v2110, 4
        %v2113 = vrot.slane %v1971, 5
        %v2114 = vsel %vm2037, %v2112, %v2113
        %v2115 = vrot.slane %v1972, 5
        %v2116 = vrot.slane %v2115, 4
        %v2117 = vrot.slane %v1973, 5
        %v2118 = vsel %vm2037, %v2116, %v2117
        %v2119 = vrot.slane %v2117, 4
        %v2120 = vrot.slane %v1974, 5
        %v2121 = vsel %vm2037, %v2119, %v2120
        %v2122 = vrot.slane %v1975, 5
        %v2123 = vrot.slane %v2122, 4
        %v2124 = vrot.slane %v1976, 5
        %v2125 = vsel %vm2037, %v2123, %v2124
        %v2126 = vrot.slane %v2124, 4
        %v2127 = vrot.slane %v1977, 5
        %v2128 = vsel %vm2037, %v2126, %v2127
        %v2129 = vrot.slane %v1978, 5
        %v2130 = vrot.slane %v2129, 4
        %v2131 = vrot.slane %v1979, 5
        %v2132 = vsel %vm2037, %v2130, %v2131
        %v2133 = vrot.slane %v2131, 4
        %v2134 = vrot.slane %v1980, 5
        %v2135 = vsel %vm2037, %v2133, %v2134
        %v2136 = vrot.slane %v1981, 5
        %v2137 = vrot.slane %v2136, 4
        %v2138 = vrot.slane %v1982, 5
        %v2139 = vsel %vm2037, %v2137, %v2138
        %v2140 = vrot.slane %v2138, 4
        %v2141 = vrot.slane %v1983, 5
        %v2142 = vsel %vm2037, %v2140, %v2141
        %v2143 = vrot.slane %v1984, 5
        %v2144 = vrot.slane %v2143, 4
        %v2145 = vrot.slane %v1985, 5
        %v2146 = vsel %vm2037, %v2144, %v2145
        %v2147 = vrot.slane %v2145, 4
        %v2148 = vrot.slane %v1986, 5
        %v2149 = vsel %vm2037, %v2147, %v2148
        %2150 = vrot.lane.b32.xlu0 %v2041, 8
        %v2151 = vpop.permute.xlu0 %2150
        %2152 = vrot.lane.b32.xlu0 %v2044, 8
        %v2153 = vpop.permute.xlu0 %2152
        %2154 = vrot.lane.b32.xlu0 %v2048, 8
        %v2155 = vpop.permute.xlu0 %2154
        %2156 = vrot.lane.b32.xlu0 %v2051, 8
        %v2157 = vpop.permute.xlu0 %2156
        %2158 = vrot.lane.b32.xlu0 %v2055, 8
        %v2159 = vpop.permute.xlu0 %2158
        %2160 = vrot.lane.b32.xlu0 %v2058, 8
        %v2161 = vpop.permute.xlu0 %2160
        %2162 = vrot.lane.b32.xlu0 %v2062, 8
        %v2163 = vpop.permute.xlu0 %2162
        %2164 = vrot.lane.b32.xlu0 %v2065, 8
        %v2165 = vpop.permute.xlu0 %2164
        %2166 = vrot.lane.b32.xlu0 %v2069, 8
        %v2167 = vpop.permute.xlu0 %2166
        %2168 = vrot.lane.b32.xlu0 %v2072, 8
        %v2169 = vpop.permute.xlu0 %2168
        %2170 = vrot.lane.b32.xlu0 %v2076, 8
        %v2171 = vpop.permute.xlu0 %2170
        %2172 = vrot.lane.b32.xlu0 %v2079, 8
        %v2173 = vpop.permute.xlu0 %2172
        %2174 = vrot.lane.b32.xlu0 %v2083, 8
        %v2175 = vpop.permute.xlu0 %2174
        %2176 = vrot.lane.b32.xlu0 %v2086, 8
        %v2177 = vpop.permute.xlu0 %2176
        %2178 = vrot.lane.b32.xlu0 %v2090, 8
        %v2179 = vpop.permute.xlu0 %2178
        %2180 = vrot.lane.b32.xlu0 %v2093, 8
        %v2181 = vpop.permute.xlu0 %2180
        %2182 = vrot.lane.b32.xlu0 %v2097, 8
        %v2183 = vpop.permute.xlu0 %2182
        %2184 = vrot.lane.b32.xlu0 %v2100, 8
        %v2185 = vpop.permute.xlu0 %2184
        %2186 = vrot.lane.b32.xlu0 %v2104, 8
        %v2187 = vpop.permute.xlu0 %2186
        %2188 = vrot.lane.b32.xlu0 %v2107, 8
        %v2189 = vpop.permute.xlu0 %2188
        %2190 = vrot.lane.b32.xlu0 %v2111, 8
        %v2191 = vpop.permute.xlu0 %2190
        %2192 = vrot.lane.b32.xlu0 %v2114, 8
        %v2193 = vpop.permute.xlu0 %2192
        %2194 = vrot.lane.b32.xlu0 %v2118, 8
        %v2195 = vpop.permute.xlu0 %2194
        %2196 = vrot.lane.b32.xlu0 %v2121, 8
        %v2197 = vpop.permute.xlu0 %2196
        %2198 = vrot.lane.b32.xlu0 %v2125, 8
        %v2199 = vpop.permute.xlu0 %2198
        %2200 = vrot.lane.b32.xlu0 %v2128, 8
        %v2201 = vpop.permute.xlu0 %2200
        %2202 = vrot.lane.b32.xlu0 %v2132, 8
        %v2203 = vpop.permute.xlu0 %2202
        %2204 = vrot.lane.b32.xlu0 %v2135, 8
        %v2205 = vpop.permute.xlu0 %2204
        %2206 = vrot.lane.b32.xlu0 %v2139, 8
        %v2207 = vpop.permute.xlu0 %2206
        %2208 = vrot.lane.b32.xlu0 %v2142, 8
        %v2209 = vpop.permute.xlu0 %2208
        %2210 = vrot.lane.b32.xlu0 %v2146, 8
        %v2211 = vpop.permute.xlu0 %2210
        %2212 = vrot.lane.b32.xlu0 %v2149, 8
        %v2213 = vpop.permute.xlu0 %2212
        %vm2246 = vcmask 93248
        %2247 = vst.msk [vmem:[#allocation3] sm:$0xf] %vm2246, %v2151
        %2248 = vst.msk [vmem:[#allocation3 + $0x4] sm:$0xf] %vm2246, %v2153
        %2249 = vst.msk [vmem:[#allocation3 + $0x8] sm:$0xf] %vm2246, %v2155
        %2250 = vst.msk [vmem:[#allocation3 + $0xc] sm:$0xf] %vm2246, %v2157
        %2251 = vst.msk [vmem:[#allocation3 + $0x10] sm:$0xf] %vm2246, %v2159
        %2252 = vst.msk [vmem:[#allocation3 + $0x14] sm:$0xf] %vm2246, %v2161
        %2253 = vst.msk [vmem:[#allocation3 + $0x18] sm:$0xf] %vm2246, %v2163
        %2254 = vst.msk [vmem:[#allocation3 + $0x1c] sm:$0xf] %vm2246, %v2165
        %2255 = vst.msk [vmem:[#allocation3 + $0x20] sm:$0xf] %vm2246, %v2167
        %2256 = vst.msk [vmem:[#allocation3 + $0x24] sm:$0xf] %vm2246, %v2169
        %2257 = vst.msk [vmem:[#allocation3 + $0x28] sm:$0xf] %vm2246, %v2171
        %2258 = vst.msk [vmem:[#allocation3 + $0x2c] sm:$0xf] %vm2246, %v2173
        %2259 = vst.msk [vmem:[#allocation3 + $0x30] sm:$0xf] %vm2246, %v2175
        %2260 = vst.msk [vmem:[#allocation3 + $0x34] sm:$0xf] %vm2246, %v2177
        %2261 = vst.msk [vmem:[#allocation3 + $0x38] sm:$0xf] %vm2246, %v2179
        %2262 = vst.msk [vmem:[#allocation3 + $0x3c] sm:$0xf] %vm2246, %v2181
        %2263 = vst.msk [vmem:[#allocation3 + $0x40] sm:$0xf] %vm2246, %v2183
        %2264 = vst.msk [vmem:[#allocation3 + $0x44] sm:$0xf] %vm2246, %v2185
        %2265 = vst.msk [vmem:[#allocation3 + $0x48] sm:$0xf] %vm2246, %v2187
        %2266 = vst.msk [vmem:[#allocation3 + $0x4c] sm:$0xf] %vm2246, %v2189
        %2267 = vst.msk [vmem:[#allocation3 + $0x50] sm:$0xf] %vm2246, %v2191
        %2268 = vst.msk [vmem:[#allocation3 + $0x54] sm:$0xf] %vm2246, %v2193
        %2269 = vst.msk [vmem:[#allocation3 + $0x58] sm:$0xf] %vm2246, %v2195
        %2270 = vst.msk [vmem:[#allocation3 + $0x5c] sm:$0xf] %vm2246, %v2197
        %2271 = vst.msk [vmem:[#allocation3 + $0x60] sm:$0xf] %vm2246, %v2199
        %2272 = vst.msk [vmem:[#allocation3 + $0x64] sm:$0xf] %vm2246, %v2201
        %2273 = vst.msk [vmem:[#allocation3 + $0x68] sm:$0xf] %vm2246, %v2203
        %2274 = vst.msk [vmem:[#allocation3 + $0x6c] sm:$0xf] %vm2246, %v2205
        %2275 = vst.msk [vmem:[#allocation3 + $0x70] sm:$0xf] %vm2246, %v2207
        %2276 = vst.msk [vmem:[#allocation3 + $0x74] sm:$0xf] %vm2246, %v2209
        %2277 = vst.msk [vmem:[#allocation3 + $0x78] sm:$0xf] %vm2246, %v2211
        %2278 = vst.msk [vmem:[#allocation3 + $0x7c] sm:$0xf] %vm2246, %v2213
        %v2279 = vld [vmem:[%s1196] sm:$0xf]
        %v2280 = vld [vmem:[%s1196 + $0x4] sm:$0xf]
        %v2281 = vld [vmem:[%s1196 + $0xc] sm:$0xf]
        %v2282 = vld [vmem:[%s1196 + $0x10] sm:$0xf]
        %v2283 = vld [vmem:[%s1196 + $0x18] sm:$0xf]
        %v2284 = vld [vmem:[%s1196 + $0x1c] sm:$0xf]
        %v2285 = vld [vmem:[%s1196 + $0x24] sm:$0xf]
        %v2286 = vld [vmem:[%s1196 + $0x28] sm:$0xf]
        %v2287 = vld [vmem:[%s1196 + $0x30] sm:$0xf]
        %v2288 = vld [vmem:[%s1196 + $0x34] sm:$0xf]
        %v2289 = vld [vmem:[%s1196 + $0x3c] sm:$0xf]
        %v2290 = vld [vmem:[%s1196 + $0x40] sm:$0xf]
        %v2291 = vld [vmem:[%s1196 + $0x48] sm:$0xf]
        %v2292 = vld [vmem:[%s1196 + $0x4c] sm:$0xf]
        %v2293 = vld [vmem:[%s1196 + $0x54] sm:$0xf]
        %v2294 = vld [vmem:[%s1196 + $0x58] sm:$0xf]
        %v2295 = vld [vmem:[%s1196 + $0x60] sm:$0xf]
        %v2296 = vld [vmem:[%s1196 + $0x64] sm:$0xf]
        %v2297 = vld [vmem:[%s1196 + $0x6c] sm:$0xf]
        %v2298 = vld [vmem:[%s1196 + $0x70] sm:$0xf]
        %v2299 = vld [vmem:[%s1196 + $0x78] sm:$0xf]
        %v2300 = vld [vmem:[%s1196 + $0x7c] sm:$0xf]
        %v2301 = vld [vmem:[%s1196 + $0x84] sm:$0xf]
        %v2302 = vld [vmem:[%s1196 + $0x88] sm:$0xf]
        %v2303 = vld [vmem:[%s1196 + $0x90] sm:$0xf]
        %v2304 = vld [vmem:[%s1196 + $0x94] sm:$0xf]
        %v2305 = vld [vmem:[%s1196 + $0x9c] sm:$0xf]
        %v2306 = vld [vmem:[%s1196 + $0xa0] sm:$0xf]
        %v2307 = vld [vmem:[%s1196 + $0xa8] sm:$0xf]
        %v2308 = vld [vmem:[%s1196 + $0xac] sm:$0xf]
        %v2309 = vld [vmem:[%s1196 + $0xb4] sm:$0xf]
        %v2310 = vld [vmem:[%s1196 + $0xb8] sm:$0xf]
        %2343 = vrot.lane.b32.xlu0 %v2279, 12
        %v2344 = vpop.permute.xlu0 %2343
        %2345 = vrot.lane.b32.xlu0 %v2280, 12
        %v2346 = vpop.permute.xlu0 %2345
        %2347 = vrot.lane.b32.xlu0 %v2281, 12
        %v2348 = vpop.permute.xlu0 %2347
        %2349 = vrot.lane.b32.xlu0 %v2282, 12
        %v2350 = vpop.permute.xlu0 %2349
        %2351 = vrot.lane.b32.xlu0 %v2283, 12
        %v2352 = vpop.permute.xlu0 %2351
        %2353 = vrot.lane.b32.xlu0 %v2284, 12
        %v2354 = vpop.permute.xlu0 %2353
        %2355 = vrot.lane.b32.xlu0 %v2285, 12
        %v2356 = vpop.permute.xlu0 %2355
        %2357 = vrot.lane.b32.xlu0 %v2286, 12
        %v2358 = vpop.permute.xlu0 %2357
        %2359 = vrot.lane.b32.xlu0 %v2287, 12
        %v2360 = vpop.permute.xlu0 %2359
        %2361 = vrot.lane.b32.xlu0 %v2288, 12
        %v2362 = vpop.permute.xlu0 %2361
        %2363 = vrot.lane.b32.xlu0 %v2289, 12
        %v2364 = vpop.permute.xlu0 %2363
        %2365 = vrot.lane.b32.xlu0 %v2290, 12
        %v2366 = vpop.permute.xlu0 %2365
        %2367 = vrot.lane.b32.xlu0 %v2291, 12
        %v2368 = vpop.permute.xlu0 %2367
        %2369 = vrot.lane.b32.xlu0 %v2292, 12
        %v2370 = vpop.permute.xlu0 %2369
        %2371 = vrot.lane.b32.xlu0 %v2293, 12
        %v2372 = vpop.permute.xlu0 %2371
        %2373 = vrot.lane.b32.xlu0 %v2294, 12
        %v2374 = vpop.permute.xlu0 %2373
        %2375 = vrot.lane.b32.xlu0 %v2295, 12
        %v2376 = vpop.permute.xlu0 %2375
        %2377 = vrot.lane.b32.xlu0 %v2296, 12
        %v2378 = vpop.permute.xlu0 %2377
        %2379 = vrot.lane.b32.xlu0 %v2297, 12
        %v2380 = vpop.permute.xlu0 %2379
        %2381 = vrot.lane.b32.xlu0 %v2298, 12
        %v2382 = vpop.permute.xlu0 %2381
        %2383 = vrot.lane.b32.xlu0 %v2299, 12
        %v2384 = vpop.permute.xlu0 %2383
        %2385 = vrot.lane.b32.xlu0 %v2300, 12
        %v2386 = vpop.permute.xlu0 %2385
        %2387 = vrot.lane.b32.xlu0 %v2301, 12
        %v2388 = vpop.permute.xlu0 %2387
        %2389 = vrot.lane.b32.xlu0 %v2302, 12
        %v2390 = vpop.permute.xlu0 %2389
        %2391 = vrot.lane.b32.xlu0 %v2303, 12
        %v2392 = vpop.permute.xlu0 %2391
        %2393 = vrot.lane.b32.xlu0 %v2304, 12
        %v2394 = vpop.permute.xlu0 %2393
        %2395 = vrot.lane.b32.xlu0 %v2305, 12
        %v2396 = vpop.permute.xlu0 %2395
        %2397 = vrot.lane.b32.xlu0 %v2306, 12
        %v2398 = vpop.permute.xlu0 %2397
        %2399 = vrot.lane.b32.xlu0 %v2307, 12
        %v2400 = vpop.permute.xlu0 %2399
        %2401 = vrot.lane.b32.xlu0 %v2308, 12
        %v2402 = vpop.permute.xlu0 %2401
        %2403 = vrot.lane.b32.xlu0 %v2309, 12
        %v2404 = vpop.permute.xlu0 %2403
        %2405 = vrot.lane.b32.xlu0 %v2310, 12
        %v2406 = vpop.permute.xlu0 %2405
        %vm2439 = vcmask 126048
        %2440 = vst.msk [vmem:[#allocation3] sm:$0xf] %vm2439, %v2344
        %2441 = vst.msk [vmem:[#allocation3 + $0x4] sm:$0xf] %vm2439, %v2346
        %2442 = vst.msk [vmem:[#allocation3 + $0x8] sm:$0xf] %vm2439, %v2348
        %2443 = vst.msk [vmem:[#allocation3 + $0xc] sm:$0xf] %vm2439, %v2350
        %2444 = vst.msk [vmem:[#allocation3 + $0x10] sm:$0xf] %vm2439, %v2352
        %2445 = vst.msk [vmem:[#allocation3 + $0x14] sm:$0xf] %vm2439, %v2354
        %2446 = vst.msk [vmem:[#allocation3 + $0x18] sm:$0xf] %vm2439, %v2356
        %2447 = vst.msk [vmem:[#allocation3 + $0x1c] sm:$0xf] %vm2439, %v2358
        %2448 = vst.msk [vmem:[#allocation3 + $0x20] sm:$0xf] %vm2439, %v2360
        %2449 = vst.msk [vmem:[#allocation3 + $0x24] sm:$0xf] %vm2439, %v2362
        %2450 = vst.msk [vmem:[#allocation3 + $0x28] sm:$0xf] %vm2439, %v2364
        %2451 = vst.msk [vmem:[#allocation3 + $0x2c] sm:$0xf] %vm2439, %v2366
        %2452 = vst.msk [vmem:[#allocation3 + $0x30] sm:$0xf] %vm2439, %v2368
        %2453 = vst.msk [vmem:[#allocation3 + $0x34] sm:$0xf] %vm2439, %v2370
        %2454 = vst.msk [vmem:[#allocation3 + $0x38] sm:$0xf] %vm2439, %v2372
        %2455 = vst.msk [vmem:[#allocation3 + $0x3c] sm:$0xf] %vm2439, %v2374
        %2456 = vst.msk [vmem:[#allocation3 + $0x40] sm:$0xf] %vm2439, %v2376
        %2457 = vst.msk [vmem:[#allocation3 + $0x44] sm:$0xf] %vm2439, %v2378
        %2458 = vst.msk [vmem:[#allocation3 + $0x48] sm:$0xf] %vm2439, %v2380
        %2459 = vst.msk [vmem:[#allocation3 + $0x4c] sm:$0xf] %vm2439, %v2382
        %2460 = vst.msk [vmem:[#allocation3 + $0x50] sm:$0xf] %vm2439, %v2384
        %2461 = vst.msk [vmem:[#allocation3 + $0x54] sm:$0xf] %vm2439, %v2386
        %2462 = vst.msk [vmem:[#allocation3 + $0x58] sm:$0xf] %vm2439, %v2388
        %2463 = vst.msk [vmem:[#allocation3 + $0x5c] sm:$0xf] %vm2439, %v2390
        %2464 = vst.msk [vmem:[#allocation3 + $0x60] sm:$0xf] %vm2439, %v2392
        %2465 = vst.msk [vmem:[#allocation3 + $0x64] sm:$0xf] %vm2439, %v2394
        %2466 = vst.msk [vmem:[#allocation3 + $0x68] sm:$0xf] %vm2439, %v2396
        %2467 = vst.msk [vmem:[#allocation3 + $0x6c] sm:$0xf] %vm2439, %v2398
        %2468 = vst.msk [vmem:[#allocation3 + $0x70] sm:$0xf] %vm2439, %v2400
        %2469 = vst.msk [vmem:[#allocation3 + $0x74] sm:$0xf] %vm2439, %v2402
        %2470 = vst.msk [vmem:[#allocation3 + $0x78] sm:$0xf] %vm2439, %v2404
        %2471 = vst.msk [vmem:[#allocation3 + $0x7c] sm:$0xf] %vm2439, %v2406
        %v2472 = vld [vmem:[%s1196] sm:$0xf]
        %v2473 = vld [vmem:[%s1196 + $0x4] sm:$0xf]
        %v2474 = vld [vmem:[%s1196 + $0x8] sm:$0x1]
        %v2475 = vld [vmem:[%s1196 + $0xc] sm:$0xf]
        %v2476 = vld [vmem:[%s1196 + $0x10] sm:$0xf]
        %v2477 = vld [vmem:[%s1196 + $0x14] sm:$0x1]
        %v2478 = vld [vmem:[%s1196 + $0x18] sm:$0xf]
        %v2479 = vld [vmem:[%s1196 + $0x1c] sm:$0xf]
        %v2480 = vld [vmem:[%s1196 + $0x20] sm:$0x1]
        %v2481 = vld [vmem:[%s1196 + $0x24] sm:$0xf]
        %v2482 = vld [vmem:[%s1196 + $0x28] sm:$0xf]
        %v2483 = vld [vmem:[%s1196 + $0x2c] sm:$0x1]
        %v2484 = vld [vmem:[%s1196 + $0x30] sm:$0xf]
        %v2485 = vld [vmem:[%s1196 + $0x34] sm:$0xf]
        %v2486 = vld [vmem:[%s1196 + $0x38] sm:$0x1]
        %v2487 = vld [vmem:[%s1196 + $0x3c] sm:$0xf]
        %v2488 = vld [vmem:[%s1196 + $0x40] sm:$0xf]
        %v2489 = vld [vmem:[%s1196 + $0x44] sm:$0x1]
        %v2490 = vld [vmem:[%s1196 + $0x48] sm:$0xf]
        %v2491 = vld [vmem:[%s1196 + $0x4c] sm:$0xf]
        %v2492 = vld [vmem:[%s1196 + $0x50] sm:$0x1]
        %v2493 = vld [vmem:[%s1196 + $0x54] sm:$0xf]
        %v2494 = vld [vmem:[%s1196 + $0x58] sm:$0xf]
        %v2495 = vld [vmem:[%s1196 + $0x5c] sm:$0x1]
        %v2496 = vld [vmem:[%s1196 + $0x60] sm:$0xf]
        %v2497 = vld [vmem:[%s1196 + $0x64] sm:$0xf]
        %v2498 = vld [vmem:[%s1196 + $0x68] sm:$0x1]
        %v2499 = vld [vmem:[%s1196 + $0x6c] sm:$0xf]
        %v2500 = vld [vmem:[%s1196 + $0x70] sm:$0xf]
        %v2501 = vld [vmem:[%s1196 + $0x74] sm:$0x1]
        %v2502 = vld [vmem:[%s1196 + $0x78] sm:$0xf]
        %v2503 = vld [vmem:[%s1196 + $0x7c] sm:$0xf]
        %v2504 = vld [vmem:[%s1196 + $0x80] sm:$0x1]
        %v2505 = vld [vmem:[%s1196 + $0x84] sm:$0xf]
        %v2506 = vld [vmem:[%s1196 + $0x88] sm:$0xf]
        %v2507 = vld [vmem:[%s1196 + $0x8c] sm:$0x1]
        %v2508 = vld [vmem:[%s1196 + $0x90] sm:$0xf]
        %v2509 = vld [vmem:[%s1196 + $0x94] sm:$0xf]
        %v2510 = vld [vmem:[%s1196 + $0x98] sm:$0x1]
        %v2511 = vld [vmem:[%s1196 + $0x9c] sm:$0xf]
        %v2512 = vld [vmem:[%s1196 + $0xa0] sm:$0xf]
        %v2513 = vld [vmem:[%s1196 + $0xa4] sm:$0x1]
        %v2514 = vld [vmem:[%s1196 + $0xa8] sm:$0xf]
        %v2515 = vld [vmem:[%s1196 + $0xac] sm:$0xf]
        %v2516 = vld [vmem:[%s1196 + $0xb0] sm:$0x1]
        %v2517 = vld [vmem:[%s1196 + $0xb4] sm:$0xf]
        %v2518 = vld [vmem:[%s1196 + $0xb8] sm:$0xf]
        %v2519 = vld [vmem:[%s1196 + $0xbc] sm:$0x1]
        %v2521 = vshrl.u32 %v2472, 16
        %v2523 = vrot.slane %v2521, 4
        %v2524 = vshll.u32 %v2472, 16
        %v2526 = vrot.slane %v2524, 5
        %v2527 = vor.u32 %v2523, %v2526
        %v2528 = vrot.slane %v2527, 4
        %v2530 = vshll.u32 %v2473, 16
        %v2532 = vrot.slane %v2530, 5
        %v2533 = vsel %vm1425, %v2528, %v2532
        %v2534 = vshrl.u32 %v2473, 16
        %v2536 = vrot.slane %v2534, 4
        %v2537 = vor.u32 %v2536, %v2532
        %v2538 = vrot.slane %v2537, 4
        %v2540 = vshll.u32 %v2474, 16
        %v2542 = vrot.slane %v2540, 5
        %v2543 = vsel %vm1425, %v2538, %v2542
        %v2545 = vshrl.u32 %v2475, 16
        %v2547 = vrot.slane %v2545, 4
        %v2548 = vshll.u32 %v2475, 16
        %v2550 = vrot.slane %v2548, 5
        %v2551 = vor.u32 %v2547, %v2550
        %v2552 = vrot.slane %v2551, 4
        %v2554 = vshll.u32 %v2476, 16
        %v2556 = vrot.slane %v2554, 5
        %v2557 = vsel %vm1425, %v2552, %v2556
        %v2558 = vshrl.u32 %v2476, 16
        %v2560 = vrot.slane %v2558, 4
        %v2561 = vor.u32 %v2560, %v2556
        %v2562 = vrot.slane %v2561, 4
        %v2564 = vshll.u32 %v2477, 16
        %v2566 = vrot.slane %v2564, 5
        %v2567 = vsel %vm1425, %v2562, %v2566
        %v2569 = vshrl.u32 %v2478, 16
        %v2571 = vrot.slane %v2569, 4
        %v2572 = vshll.u32 %v2478, 16
        %v2574 = vrot.slane %v2572, 5
        %v2575 = vor.u32 %v2571, %v2574
        %v2576 = vrot.slane %v2575, 4
        %v2578 = vshll.u32 %v2479, 16
        %v2580 = vrot.slane %v2578, 5
        %v2581 = vsel %vm1425, %v2576, %v2580
        %v2582 = vshrl.u32 %v2479, 16
        %v2584 = vrot.slane %v2582, 4
        %v2585 = vor.u32 %v2584, %v2580
        %v2586 = vrot.slane %v2585, 4
        %v2588 = vshll.u32 %v2480, 16
        %v2590 = vrot.slane %v2588, 5
        %v2591 = vsel %vm1425, %v2586, %v2590
        %v2593 = vshrl.u32 %v2481, 16
        %v2595 = vrot.slane %v2593, 4
        %v2596 = vshll.u32 %v2481, 16
        %v2598 = vrot.slane %v2596, 5
        %v2599 = vor.u32 %v2595, %v2598
        %v2600 = vrot.slane %v2599, 4
        %v2602 = vshll.u32 %v2482, 16
        %v2604 = vrot.slane %v2602, 5
        %v2605 = vsel %vm1425, %v2600, %v2604
        %v2606 = vshrl.u32 %v2482, 16
        %v2608 = vrot.slane %v2606, 4
        %v2609 = vor.u32 %v2608, %v2604
        %v2610 = vrot.slane %v2609, 4
        %v2612 = vshll.u32 %v2483, 16
        %v2614 = vrot.slane %v2612, 5
        %v2615 = vsel %vm1425, %v2610, %v2614
        %v2617 = vshrl.u32 %v2484, 16
        %v2619 = vrot.slane %v2617, 4
        %v2620 = vshll.u32 %v2484, 16
        %v2622 = vrot.slane %v2620, 5
        %v2623 = vor.u32 %v2619, %v2622
        %v2624 = vrot.slane %v2623, 4
        %v2626 = vshll.u32 %v2485, 16
        %v2628 = vrot.slane %v2626, 5
        %v2629 = vsel %vm1425, %v2624, %v2628
        %v2630 = vshrl.u32 %v2485, 16
        %v2632 = vrot.slane %v2630, 4
        %v2633 = vor.u32 %v2632, %v2628
        %v2634 = vrot.slane %v2633, 4
        %v2636 = vshll.u32 %v2486, 16
        %v2638 = vrot.slane %v2636, 5
        %v2639 = vsel %vm1425, %v2634, %v2638
        %v2641 = vshrl.u32 %v2487, 16
        %v2643 = vrot.slane %v2641, 4
        %v2644 = vshll.u32 %v2487, 16
        %v2646 = vrot.slane %v2644, 5
        %v2647 = vor.u32 %v2643, %v2646
        %v2648 = vrot.slane %v2647, 4
        %v2650 = vshll.u32 %v2488, 16
        %v2652 = vrot.slane %v2650, 5
        %v2653 = vsel %vm1425, %v2648, %v2652
        %v2654 = vshrl.u32 %v2488, 16
        %v2656 = vrot.slane %v2654, 4
        %v2657 = vor.u32 %v2656, %v2652
        %v2658 = vrot.slane %v2657, 4
        %v2660 = vshll.u32 %v2489, 16
        %v2662 = vrot.slane %v2660, 5
        %v2663 = vsel %vm1425, %v2658, %v2662
        %v2665 = vshrl.u32 %v2490, 16
        %v2667 = vrot.slane %v2665, 4
        %v2668 = vshll.u32 %v2490, 16
        %v2670 = vrot.slane %v2668, 5
        %v2671 = vor.u32 %v2667, %v2670
        %v2672 = vrot.slane %v2671, 4
        %v2674 = vshll.u32 %v2491, 16
        %v2676 = vrot.slane %v2674, 5
        %v2677 = vsel %vm1425, %v2672, %v2676
        %v2678 = vshrl.u32 %v2491, 16
        %v2680 = vrot.slane %v2678, 4
        %v2681 = vor.u32 %v2680, %v2676
        %v2682 = vrot.slane %v2681, 4
        %v2684 = vshll.u32 %v2492, 16
        %v2686 = vrot.slane %v2684, 5
        %v2687 = vsel %vm1425, %v2682, %v2686
        %v2689 = vshrl.u32 %v2493, 16
        %v2691 = vrot.slane %v2689, 4
        %v2692 = vshll.u32 %v2493, 16
        %v2694 = vrot.slane %v2692, 5
        %v2695 = vor.u32 %v2691, %v2694
        %v2696 = vrot.slane %v2695, 4
        %v2698 = vshll.u32 %v2494, 16
        %v2700 = vrot.slane %v2698, 5
        %v2701 = vsel %vm1425, %v2696, %v2700
        %v2702 = vshrl.u32 %v2494, 16
        %v2704 = vrot.slane %v2702, 4
        %v2705 = vor.u32 %v2704, %v2700
        %v2706 = vrot.slane %v2705, 4
        %v2708 = vshll.u32 %v2495, 16
        %v2710 = vrot.slane %v2708, 5
        %v2711 = vsel %vm1425, %v2706, %v2710
        %v2713 = vshrl.u32 %v2496, 16
        %v2715 = vrot.slane %v2713, 4
        %v2716 = vshll.u32 %v2496, 16
        %v2718 = vrot.slane %v2716, 5
        %v2719 = vor.u32 %v2715, %v2718
        %v2720 = vrot.slane %v2719, 4
        %v2722 = vshll.u32 %v2497, 16
        %v2724 = vrot.slane %v2722, 5
        %v2725 = vsel %vm1425, %v2720, %v2724
        %v2726 = vshrl.u32 %v2497, 16
        %v2728 = vrot.slane %v2726, 4
        %v2729 = vor.u32 %v2728, %v2724
        %v2730 = vrot.slane %v2729, 4
        %v2732 = vshll.u32 %v2498, 16
        %v2734 = vrot.slane %v2732, 5
        %v2735 = vsel %vm1425, %v2730, %v2734
        %v2737 = vshrl.u32 %v2499, 16
        %v2739 = vrot.slane %v2737, 4
        %v2740 = vshll.u32 %v2499, 16
        %v2742 = vrot.slane %v2740, 5
        %v2743 = vor.u32 %v2739, %v2742
        %v2744 = vrot.slane %v2743, 4
        %v2746 = vshll.u32 %v2500, 16
        %v2748 = vrot.slane %v2746, 5
        %v2749 = vsel %vm1425, %v2744, %v2748
        %v2750 = vshrl.u32 %v2500, 16
        %v2752 = vrot.slane %v2750, 4
        %v2753 = vor.u32 %v2752, %v2748
        %v2754 = vrot.slane %v2753, 4
        %v2756 = vshll.u32 %v2501, 16
        %v2758 = vrot.slane %v2756, 5
        %v2759 = vsel %vm1425, %v2754, %v2758
        %v2761 = vshrl.u32 %v2502, 16
        %v2763 = vrot.slane %v2761, 4
        %v2764 = vshll.u32 %v2502, 16
        %v2766 = vrot.slane %v2764, 5
        %v2767 = vor.u32 %v2763, %v2766
        %v2768 = vrot.slane %v2767, 4
        %v2770 = vshll.u32 %v2503, 16
        %v2772 = vrot.slane %v2770, 5
        %v2773 = vsel %vm1425, %v2768, %v2772
        %v2774 = vshrl.u32 %v2503, 16
        %v2776 = vrot.slane %v2774, 4
        %v2777 = vor.u32 %v2776, %v2772
        %v2778 = vrot.slane %v2777, 4
        %v2780 = vshll.u32 %v2504, 16
        %v2782 = vrot.slane %v2780, 5
        %v2783 = vsel %vm1425, %v2778, %v2782
        %v2785 = vshrl.u32 %v2505, 16
        %v2787 = vrot.slane %v2785, 4
        %v2788 = vshll.u32 %v2505, 16
        %v2790 = vrot.slane %v2788, 5
        %v2791 = vor.u32 %v2787, %v2790
        %v2792 = vrot.slane %v2791, 4
        %v2794 = vshll.u32 %v2506, 16
        %v2796 = vrot.slane %v2794, 5
        %v2797 = vsel %vm1425, %v2792, %v2796
        %v2798 = vshrl.u32 %v2506, 16
        %v2800 = vrot.slane %v2798, 4
        %v2801 = vor.u32 %v2800, %v2796
        %v2802 = vrot.slane %v2801, 4
        %v2804 = vshll.u32 %v2507, 16
        %v2806 = vrot.slane %v2804, 5
        %v2807 = vsel %vm1425, %v2802, %v2806
        %v2809 = vshrl.u32 %v2508, 16
        %v2811 = vrot.slane %v2809, 4
        %v2812 = vshll.u32 %v2508, 16
        %v2814 = vrot.slane %v2812, 5
        %v2815 = vor.u32 %v2811, %v2814
        %v2816 = vrot.slane %v2815, 4
        %v2818 = vshll.u32 %v2509, 16
        %v2820 = vrot.slane %v2818, 5
        %v2821 = vsel %vm1425, %v2816, %v2820
        %v2822 = vshrl.u32 %v2509, 16
        %v2824 = vrot.slane %v2822, 4
        %v2825 = vor.u32 %v2824, %v2820
        %v2826 = vrot.slane %v2825, 4
        %v2828 = vshll.u32 %v2510, 16
        %v2830 = vrot.slane %v2828, 5
        %v2831 = vsel %vm1425, %v2826, %v2830
        %v2833 = vshrl.u32 %v2511, 16
        %v2835 = vrot.slane %v2833, 4
        %v2836 = vshll.u32 %v2511, 16
        %v2838 = vrot.slane %v2836, 5
        %v2839 = vor.u32 %v2835, %v2838
        %v2840 = vrot.slane %v2839, 4
        %v2842 = vshll.u32 %v2512, 16
        %v2844 = vrot.slane %v2842, 5
        %v2845 = vsel %vm1425, %v2840, %v2844
        %v2846 = vshrl.u32 %v2512, 16
        %v2848 = vrot.slane %v2846, 4
        %v2849 = vor.u32 %v2848, %v2844
        %v2850 = vrot.slane %v2849, 4
        %v2852 = vshll.u32 %v2513, 16
        %v2854 = vrot.slane %v2852, 5
        %v2855 = vsel %vm1425, %v2850, %v2854
        %v2857 = vshrl.u32 %v2514, 16
        %v2859 = vrot.slane %v2857, 4
        %v2860 = vshll.u32 %v2514, 16
        %v2862 = vrot.slane %v2860, 5
        %v2863 = vor.u32 %v2859, %v2862
        %v2864 = vrot.slane %v2863, 4
        %v2866 = vshll.u32 %v2515, 16
        %v2868 = vrot.slane %v2866, 5
        %v2869 = vsel %vm1425, %v2864, %v2868
        %v2870 = vshrl.u32 %v2515, 16
        %v2872 = vrot.slane %v2870, 4
        %v2873 = vor.u32 %v2872, %v2868
        %v2874 = vrot.slane %v2873, 4
        %v2876 = vshll.u32 %v2516, 16
        %v2878 = vrot.slane %v2876, 5
        %v2879 = vsel %vm1425, %v2874, %v2878
        %v2881 = vshrl.u32 %v2517, 16
        %v2883 = vrot.slane %v2881, 4
        %v2884 = vshll.u32 %v2517, 16
        %v2886 = vrot.slane %v2884, 5
        %v2887 = vor.u32 %v2883, %v2886
        %v2888 = vrot.slane %v2887, 4
        %v2890 = vshll.u32 %v2518, 16
        %v2892 = vrot.slane %v2890, 5
        %v2893 = vsel %vm1425, %v2888, %v2892
        %v2894 = vshrl.u32 %v2518, 16
        %v2896 = vrot.slane %v2894, 4
        %v2897 = vor.u32 %v2896, %v2892
        %v2898 = vrot.slane %v2897, 4
        %v2900 = vshll.u32 %v2519, 16
        %v2902 = vrot.slane %v2900, 5
        %v2903 = vsel %vm1425, %v2898, %v2902
        %2904 = vrot.lane.b32.xlu0 %v2533, 16
        %v2905 = vpop.permute.xlu0 %2904
        %2906 = vrot.lane.b32.xlu0 %v2543, 16
        %v2907 = vpop.permute.xlu0 %2906
        %2908 = vrot.lane.b32.xlu0 %v2557, 16
        %v2909 = vpop.permute.xlu0 %2908
        %2910 = vrot.lane.b32.xlu0 %v2567, 16
        %v2911 = vpop.permute.xlu0 %2910
        %2912 = vrot.lane.b32.xlu0 %v2581, 16
        %v2913 = vpop.permute.xlu0 %2912
        %2914 = vrot.lane.b32.xlu0 %v2591, 16
        %v2915 = vpop.permute.xlu0 %2914
        %2916 = vrot.lane.b32.xlu0 %v2605, 16
        %v2917 = vpop.permute.xlu0 %2916
        %2918 = vrot.lane.b32.xlu0 %v2615, 16
        %v2919 = vpop.permute.xlu0 %2918
        %2920 = vrot.lane.b32.xlu0 %v2629, 16
        %v2921 = vpop.permute.xlu0 %2920
        %2922 = vrot.lane.b32.xlu0 %v2639, 16
        %v2923 = vpop.permute.xlu0 %2922
        %2924 = vrot.lane.b32.xlu0 %v2653, 16
        %v2925 = vpop.permute.xlu0 %2924
        %2926 = vrot.lane.b32.xlu0 %v2663, 16
        %v2927 = vpop.permute.xlu0 %2926
        %2928 = vrot.lane.b32.xlu0 %v2677, 16
        %v2929 = vpop.permute.xlu0 %2928
        %2930 = vrot.lane.b32.xlu0 %v2687, 16
        %v2931 = vpop.permute.xlu0 %2930
        %2932 = vrot.lane.b32.xlu0 %v2701, 16
        %v2933 = vpop.permute.xlu0 %2932
        %2934 = vrot.lane.b32.xlu0 %v2711, 16
        %v2935 = vpop.permute.xlu0 %2934
        %2936 = vrot.lane.b32.xlu0 %v2725, 16
        %v2937 = vpop.permute.xlu0 %2936
        %2938 = vrot.lane.b32.xlu0 %v2735, 16
        %v2939 = vpop.permute.xlu0 %2938
        %2940 = vrot.lane.b32.xlu0 %v2749, 16
        %v2941 = vpop.permute.xlu0 %2940
        %2942 = vrot.lane.b32.xlu0 %v2759, 16
        %v2943 = vpop.permute.xlu0 %2942
        %2944 = vrot.lane.b32.xlu0 %v2773, 16
        %v2945 = vpop.permute.xlu0 %2944
        %2946 = vrot.lane.b32.xlu0 %v2783, 16
        %v2947 = vpop.permute.xlu0 %2946
        %2948 = vrot.lane.b32.xlu0 %v2797, 16
        %v2949 = vpop.permute.xlu0 %2948
        %2950 = vrot.lane.b32.xlu0 %v2807, 16
        %v2951 = vpop.permute.xlu0 %2950
        %2952 = vrot.lane.b32.xlu0 %v2821, 16
        %v2953 = vpop.permute.xlu0 %2952
        %2954 = vrot.lane.b32.xlu0 %v2831, 16
        %v2955 = vpop.permute.xlu0 %2954
        %2956 = vrot.lane.b32.xlu0 %v2845, 16
        %v2957 = vpop.permute.xlu0 %2956
        %2958 = vrot.lane.b32.xlu0 %v2855, 16
        %v2959 = vpop.permute.xlu0 %2958
        %2960 = vrot.lane.b32.xlu0 %v2869, 16
        %v2961 = vpop.permute.xlu0 %2960
        %2962 = vrot.lane.b32.xlu0 %v2879, 16
        %v2963 = vpop.permute.xlu0 %2962
        %2964 = vrot.lane.b32.xlu0 %v2893, 16
        %v2965 = vpop.permute.xlu0 %2964
        %2966 = vrot.lane.b32.xlu0 %v2903, 16
        %v2967 = vpop.permute.xlu0 %2966
        %vm3000 = vcmask 158848
        %3001 = vst.msk [vmem:[#allocation3] sm:$0xf] %vm3000, %v2905
        %3002 = vst.msk [vmem:[#allocation3 + $0x4] sm:$0xf] %vm3000, %v2907
        %3003 = vst.msk [vmem:[#allocation3 + $0x8] sm:$0xf] %vm3000, %v2909
        %3004 = vst.msk [vmem:[#allocation3 + $0xc] sm:$0xf] %vm3000, %v2911
        %3005 = vst.msk [vmem:[#allocation3 + $0x10] sm:$0xf] %vm3000, %v2913
        %3006 = vst.msk [vmem:[#allocation3 + $0x14] sm:$0xf] %vm3000, %v2915
        %3007 = vst.msk [vmem:[#allocation3 + $0x18] sm:$0xf] %vm3000, %v2917
        %3008 = vst.msk [vmem:[#allocation3 + $0x1c] sm:$0xf] %vm3000, %v2919
        %3009 = vst.msk [vmem:[#allocation3 + $0x20] sm:$0xf] %vm3000, %v2921
        %3010 = vst.msk [vmem:[#allocation3 + $0x24] sm:$0xf] %vm3000, %v2923
        %3011 = vst.msk [vmem:[#allocation3 + $0x28] sm:$0xf] %vm3000, %v2925
        %3012 = vst.msk [vmem:[#allocation3 + $0x2c] sm:$0xf] %vm3000, %v2927
        %3013 = vst.msk [vmem:[#allocation3 + $0x30] sm:$0xf] %vm3000, %v2929
        %3014 = vst.msk [vmem:[#allocation3 + $0x34] sm:$0xf] %vm3000, %v2931
        %3015 = vst.msk [vmem:[#allocation3 + $0x38] sm:$0xf] %vm3000, %v2933
        %3016 = vst.msk [vmem:[#allocation3 + $0x3c] sm:$0xf] %vm3000, %v2935
        %3017 = vst.msk [vmem:[#allocation3 + $0x40] sm:$0xf] %vm3000, %v2937
        %3018 = vst.msk [vmem:[#allocation3 + $0x44] sm:$0xf] %vm3000, %v2939
        %3019 = vst.msk [vmem:[#allocation3 + $0x48] sm:$0xf] %vm3000, %v2941
        %3020 = vst.msk [vmem:[#allocation3 + $0x4c] sm:$0xf] %vm3000, %v2943
        %3021 = vst.msk [vmem:[#allocation3 + $0x50] sm:$0xf] %vm3000, %v2945
        %3022 = vst.msk [vmem:[#allocation3 + $0x54] sm:$0xf] %vm3000, %v2947
        %3023 = vst.msk [vmem:[#allocation3 + $0x58] sm:$0xf] %vm3000, %v2949
        %3024 = vst.msk [vmem:[#allocation3 + $0x5c] sm:$0xf] %vm3000, %v2951
        %3025 = vst.msk [vmem:[#allocation3 + $0x60] sm:$0xf] %vm3000, %v2953
        %3026 = vst.msk [vmem:[#allocation3 + $0x64] sm:$0xf] %vm3000, %v2955
        %3027 = vst.msk [vmem:[#allocation3 + $0x68] sm:$0xf] %vm3000, %v2957
        %3028 = vst.msk [vmem:[#allocation3 + $0x6c] sm:$0xf] %vm3000, %v2959
        %3029 = vst.msk [vmem:[#allocation3 + $0x70] sm:$0xf] %vm3000, %v2961
        %3030 = vst.msk [vmem:[#allocation3 + $0x74] sm:$0xf] %vm3000, %v2963
        %3031 = vst.msk [vmem:[#allocation3 + $0x78] sm:$0xf] %vm3000, %v2965
        %3032 = vst.msk [vmem:[#allocation3 + $0x7c] sm:$0xf] %vm3000, %v2967
        %v3033 = vld [vmem:[%s1196] sm:$0xe]
        %v3034 = vld [vmem:[%s1196 + $0x4] sm:$0xf]
        %v3035 = vld [vmem:[%s1196 + $0x8] sm:$0x1]
        %v3036 = vld [vmem:[%s1196 + $0xc] sm:$0xe]
        %v3037 = vld [vmem:[%s1196 + $0x10] sm:$0xf]
        %v3038 = vld [vmem:[%s1196 + $0x14] sm:$0x1]
        %v3039 = vld [vmem:[%s1196 + $0x18] sm:$0xe]
        %v3040 = vld [vmem:[%s1196 + $0x1c] sm:$0xf]
        %v3041 = vld [vmem:[%s1196 + $0x20] sm:$0x1]
        %v3042 = vld [vmem:[%s1196 + $0x24] sm:$0xe]
        %v3043 = vld [vmem:[%s1196 + $0x28] sm:$0xf]
        %v3044 = vld [vmem:[%s1196 + $0x2c] sm:$0x1]
        %v3045 = vld [vmem:[%s1196 + $0x30] sm:$0xe]
        %v3046 = vld [vmem:[%s1196 + $0x34] sm:$0xf]
        %v3047 = vld [vmem:[%s1196 + $0x38] sm:$0x1]
        %v3048 = vld [vmem:[%s1196 + $0x3c] sm:$0xe]
        %v3049 = vld [vmem:[%s1196 + $0x40] sm:$0xf]
        %v3050 = vld [vmem:[%s1196 + $0x44] sm:$0x1]
        %v3051 = vld [vmem:[%s1196 + $0x48] sm:$0xe]
        %v3052 = vld [vmem:[%s1196 + $0x4c] sm:$0xf]
        %v3053 = vld [vmem:[%s1196 + $0x50] sm:$0x1]
        %v3054 = vld [vmem:[%s1196 + $0x54] sm:$0xe]
        %v3055 = vld [vmem:[%s1196 + $0x58] sm:$0xf]
        %v3056 = vld [vmem:[%s1196 + $0x5c] sm:$0x1]
        %v3057 = vld [vmem:[%s1196 + $0x60] sm:$0xe]
        %v3058 = vld [vmem:[%s1196 + $0x64] sm:$0xf]
        %v3059 = vld [vmem:[%s1196 + $0x68] sm:$0x1]
        %v3060 = vld [vmem:[%s1196 + $0x6c] sm:$0xe]
        %v3061 = vld [vmem:[%s1196 + $0x70] sm:$0xf]
        %v3062 = vld [vmem:[%s1196 + $0x74] sm:$0x1]
        %v3063 = vld [vmem:[%s1196 + $0x78] sm:$0xe]
        %v3064 = vld [vmem:[%s1196 + $0x7c] sm:$0xf]
        %v3065 = vld [vmem:[%s1196 + $0x80] sm:$0x1]
        %v3066 = vld [vmem:[%s1196 + $0x84] sm:$0xe]
        %v3067 = vld [vmem:[%s1196 + $0x88] sm:$0xf]
        %v3068 = vld [vmem:[%s1196 + $0x8c] sm:$0x1]
        %v3069 = vld [vmem:[%s1196 + $0x90] sm:$0xe]
        %v3070 = vld [vmem:[%s1196 + $0x94] sm:$0xf]
        %v3071 = vld [vmem:[%s1196 + $0x98] sm:$0x1]
        %v3072 = vld [vmem:[%s1196 + $0x9c] sm:$0xe]
        %v3073 = vld [vmem:[%s1196 + $0xa0] sm:$0xf]
        %v3074 = vld [vmem:[%s1196 + $0xa4] sm:$0x1]
        %v3075 = vld [vmem:[%s1196 + $0xa8] sm:$0xe]
        %v3076 = vld [vmem:[%s1196 + $0xac] sm:$0xf]
        %v3077 = vld [vmem:[%s1196 + $0xb0] sm:$0x1]
        %v3078 = vld [vmem:[%s1196 + $0xb4] sm:$0xe]
        %v3079 = vld [vmem:[%s1196 + $0xb8] sm:$0xf]
        %v3080 = vld [vmem:[%s1196 + $0xbc] sm:$0x1]
        %v3129 = vrot.slane %v3033, 5
        %v3130 = vrot.slane %v3129, 4
        %v3131 = vrot.slane %v3034, 5
        %v3132 = vsel %vm2037, %v3130, %v3131
        %v3133 = vrot.slane %v3131, 4
        %v3134 = vrot.slane %v3035, 5
        %v3135 = vsel %vm2037, %v3133, %v3134
        %v3136 = vrot.slane %v3036, 5
        %v3137 = vrot.slane %v3136, 4
        %v3138 = vrot.slane %v3037, 5
        %v3139 = vsel %vm2037, %v3137, %v3138
        %v3140 = vrot.slane %v3138, 4
        %v3141 = vrot.slane %v3038, 5
        %v3142 = vsel %vm2037, %v3140, %v3141
        %v3143 = vrot.slane %v3039, 5
        %v3144 = vrot.slane %v3143, 4
        %v3145 = vrot.slane %v3040, 5
        %v3146 = vsel %vm2037, %v3144, %v3145
        %v3147 = vrot.slane %v3145, 4
        %v3148 = vrot.slane %v3041, 5
        %v3149 = vsel %vm2037, %v3147, %v3148
        %v3150 = vrot.slane %v3042, 5
        %v3151 = vrot.slane %v3150, 4
        %v3152 = vrot.slane %v3043, 5
        %v3153 = vsel %vm2037, %v3151, %v3152
        %v3154 = vrot.slane %v3152, 4
        %v3155 = vrot.slane %v3044, 5
        %v3156 = vsel %vm2037, %v3154, %v3155
        %v3157 = vrot.slane %v3045, 5
        %v3158 = vrot.slane %v3157, 4
        %v3159 = vrot.slane %v3046, 5
        %v3160 = vsel %vm2037, %v3158, %v3159
        %v3161 = vrot.slane %v3159, 4
        %v3162 = vrot.slane %v3047, 5
        %v3163 = vsel %vm2037, %v3161, %v3162
        %v3164 = vrot.slane %v3048, 5
        %v3165 = vrot.slane %v3164, 4
        %v3166 = vrot.slane %v3049, 5
        %v3167 = vsel %vm2037, %v3165, %v3166
        %v3168 = vrot.slane %v3166, 4
        %v3169 = vrot.slane %v3050, 5
        %v3170 = vsel %vm2037, %v3168, %v3169
        %v3171 = vrot.slane %v3051, 5
        %v3172 = vrot.slane %v3171, 4
        %v3173 = vrot.slane %v3052, 5
        %v3174 = vsel %vm2037, %v3172, %v3173
        %v3175 = vrot.slane %v3173, 4
        %v3176 = vrot.slane %v3053, 5
        %v3177 = vsel %vm2037, %v3175, %v3176
        %v3178 = vrot.slane %v3054, 5
        %v3179 = vrot.slane %v3178, 4
        %v3180 = vrot.slane %v3055, 5
        %v3181 = vsel %vm2037, %v3179, %v3180
        %v3182 = vrot.slane %v3180, 4
        %v3183 = vrot.slane %v3056, 5
        %v3184 = vsel %vm2037, %v3182, %v3183
        %v3185 = vrot.slane %v3057, 5
        %v3186 = vrot.slane %v3185, 4
        %v3187 = vrot.slane %v3058, 5
        %v3188 = vsel %vm2037, %v3186, %v3187
        %v3189 = vrot.slane %v3187, 4
        %v3190 = vrot.slane %v3059, 5
        %v3191 = vsel %vm2037, %v3189, %v3190
        %v3192 = vrot.slane %v3060, 5
        %v3193 = vrot.slane %v3192, 4
        %v3194 = vrot.slane %v3061, 5
        %v3195 = vsel %vm2037, %v3193, %v3194
        %v3196 = vrot.slane %v3194, 4
        %v3197 = vrot.slane %v3062, 5
        %v3198 = vsel %vm2037, %v3196, %v3197
        %v3199 = vrot.slane %v3063, 5
        %v3200 = vrot.slane %v3199, 4
        %v3201 = vrot.slane %v3064, 5
        %v3202 = vsel %vm2037, %v3200, %v3201
        %v3203 = vrot.slane %v3201, 4
        %v3204 = vrot.slane %v3065, 5
        %v3205 = vsel %vm2037, %v3203, %v3204
        %v3206 = vrot.slane %v3066, 5
        %v3207 = vrot.slane %v3206, 4
        %v3208 = vrot.slane %v3067, 5
        %v3209 = vsel %vm2037, %v3207, %v3208
        %v3210 = vrot.slane %v3208, 4
        %v3211 = vrot.slane %v3068, 5
        %v3212 = vsel %vm2037, %v3210, %v3211
        %v3213 = vrot.slane %v3069, 5
        %v3214 = vrot.slane %v3213, 4
        %v3215 = vrot.slane %v3070, 5
        %v3216 = vsel %vm2037, %v3214, %v3215
        %v3217 = vrot.slane %v3215, 4
        %v3218 = vrot.slane %v3071, 5
        %v3219 = vsel %vm2037, %v3217, %v3218
        %v3220 = vrot.slane %v3072, 5
        %v3221 = vrot.slane %v3220, 4
        %v3222 = vrot.slane %v3073, 5
        %v3223 = vsel %vm2037, %v3221, %v3222
        %v3224 = vrot.slane %v3222, 4
        %v3225 = vrot.slane %v3074, 5
        %v3226 = vsel %vm2037, %v3224, %v3225
        %v3227 = vrot.slane %v3075, 5
        %v3228 = vrot.slane %v3227, 4
        %v3229 = vrot.slane %v3076, 5
        %v3230 = vsel %vm2037, %v3228, %v3229
        %v3231 = vrot.slane %v3229, 4
        %v3232 = vrot.slane %v3077, 5
        %v3233 = vsel %vm2037, %v3231, %v3232
        %v3234 = vrot.slane %v3078, 5
        %v3235 = vrot.slane %v3234, 4
        %v3236 = vrot.slane %v3079, 5
        %v3237 = vsel %vm2037, %v3235, %v3236
        %v3238 = vrot.slane %v3236, 4
        %v3239 = vrot.slane %v3080, 5
        %v3240 = vsel %vm2037, %v3238, %v3239
        %3241 = vrot.lane.b32.xlu0 %v3132, 20
        %v3242 = vpop.permute.xlu0 %3241
        %3243 = vrot.lane.b32.xlu0 %v3135, 20
        %v3244 = vpop.permute.xlu0 %3243
        %3245 = vrot.lane.b32.xlu0 %v3139, 20
        %v3246 = vpop.permute.xlu0 %3245
        %3247 = vrot.lane.b32.xlu0 %v3142, 20
        %v3248 = vpop.permute.xlu0 %3247
        %3249 = vrot.lane.b32.xlu0 %v3146, 20
        %v3250 = vpop.permute.xlu0 %3249
        %3251 = vrot.lane.b32.xlu0 %v3149, 20
        %v3252 = vpop.permute.xlu0 %3251
        %3253 = vrot.lane.b32.xlu0 %v3153, 20
        %v3254 = vpop.permute.xlu0 %3253
        %3255 = vrot.lane.b32.xlu0 %v3156, 20
        %v3256 = vpop.permute.xlu0 %3255
        %3257 = vrot.lane.b32.xlu0 %v3160, 20
        %v3258 = vpop.permute.xlu0 %3257
        %3259 = vrot.lane.b32.xlu0 %v3163, 20
        %v3260 = vpop.permute.xlu0 %3259
        %3261 = vrot.lane.b32.xlu0 %v3167, 20
        %v3262 = vpop.permute.xlu0 %3261
        %3263 = vrot.lane.b32.xlu0 %v3170, 20
        %v3264 = vpop.permute.xlu0 %3263
        %3265 = vrot.lane.b32.xlu0 %v3174, 20
        %v3266 = vpop.permute.xlu0 %3265
        %3267 = vrot.lane.b32.xlu0 %v3177, 20
        %v3268 = vpop.permute.xlu0 %3267
        %3269 = vrot.lane.b32.xlu0 %v3181, 20
        %v3270 = vpop.permute.xlu0 %3269
        %3271 = vrot.lane.b32.xlu0 %v3184, 20
        %v3272 = vpop.permute.xlu0 %3271
        %3273 = vrot.lane.b32.xlu0 %v3188, 20
        %v3274 = vpop.permute.xlu0 %3273
        %3275 = vrot.lane.b32.xlu0 %v3191, 20
        %v3276 = vpop.permute.xlu0 %3275
        %3277 = vrot.lane.b32.xlu0 %v3195, 20
        %v3278 = vpop.permute.xlu0 %3277
        %3279 = vrot.lane.b32.xlu0 %v3198, 20
        %v3280 = vpop.permute.xlu0 %3279
        %3281 = vrot.lane.b32.xlu0 %v3202, 20
        %v3282 = vpop.permute.xlu0 %3281
        %3283 = vrot.lane.b32.xlu0 %v3205, 20
        %v3284 = vpop.permute.xlu0 %3283
        %3285 = vrot.lane.b32.xlu0 %v3209, 20
        %v3286 = vpop.permute.xlu0 %3285
        %3287 = vrot.lane.b32.xlu0 %v3212, 20
        %v3288 = vpop.permute.xlu0 %3287
        %3289 = vrot.lane.b32.xlu0 %v3216, 20
        %v3290 = vpop.permute.xlu0 %3289
        %3291 = vrot.lane.b32.xlu0 %v3219, 20
        %v3292 = vpop.permute.xlu0 %3291
        %3293 = vrot.lane.b32.xlu0 %v3223, 20
        %v3294 = vpop.permute.xlu0 %3293
        %3295 = vrot.lane.b32.xlu0 %v3226, 20
        %v3296 = vpop.permute.xlu0 %3295
        %3297 = vrot.lane.b32.xlu0 %v3230, 20
        %v3298 = vpop.permute.xlu0 %3297
        %3299 = vrot.lane.b32.xlu0 %v3233, 20
        %v3300 = vpop.permute.xlu0 %3299
        %3301 = vrot.lane.b32.xlu0 %v3237, 20
        %v3302 = vpop.permute.xlu0 %3301
        %3303 = vrot.lane.b32.xlu0 %v3240, 20
        %v3304 = vpop.permute.xlu0 %3303
        %vm3337 = vcmask 191648
        %3338 = vst.msk [vmem:[#allocation3] sm:$0xf] %vm3337, %v3242
        %3339 = vst.msk [vmem:[#allocation3 + $0x4] sm:$0xf] %vm3337, %v3244
        %3340 = vst.msk [vmem:[#allocation3 + $0x8] sm:$0xf] %vm3337, %v3246
        %3341 = vst.msk [vmem:[#allocation3 + $0xc] sm:$0xf] %vm3337, %v3248
        %3342 = vst.msk [vmem:[#allocation3 + $0x10] sm:$0xf] %vm3337, %v3250
        %3343 = vst.msk [vmem:[#allocation3 + $0x14] sm:$0xf] %vm3337, %v3252
        %3344 = vst.msk [vmem:[#allocation3 + $0x18] sm:$0xf] %vm3337, %v3254
        %3345 = vst.msk [vmem:[#allocation3 + $0x1c] sm:$0xf] %vm3337, %v3256
        %3346 = vst.msk [vmem:[#allocation3 + $0x20] sm:$0xf] %vm3337, %v3258
        %3347 = vst.msk [vmem:[#allocation3 + $0x24] sm:$0xf] %vm3337, %v3260
        %3348 = vst.msk [vmem:[#allocation3 + $0x28] sm:$0xf] %vm3337, %v3262
        %3349 = vst.msk [vmem:[#allocation3 + $0x2c] sm:$0xf] %vm3337, %v3264
        %3350 = vst.msk [vmem:[#allocation3 + $0x30] sm:$0xf] %vm3337, %v3266
        %3351 = vst.msk [vmem:[#allocation3 + $0x34] sm:$0xf] %vm3337, %v3268
        %3352 = vst.msk [vmem:[#allocation3 + $0x38] sm:$0xf] %vm3337, %v3270
        %3353 = vst.msk [vmem:[#allocation3 + $0x3c] sm:$0xf] %vm3337, %v3272
        %3354 = vst.msk [vmem:[#allocation3 + $0x40] sm:$0xf] %vm3337, %v3274
        %3355 = vst.msk [vmem:[#allocation3 + $0x44] sm:$0xf] %vm3337, %v3276
        %3356 = vst.msk [vmem:[#allocation3 + $0x48] sm:$0xf] %vm3337, %v3278
        %3357 = vst.msk [vmem:[#allocation3 + $0x4c] sm:$0xf] %vm3337, %v3280
        %3358 = vst.msk [vmem:[#allocation3 + $0x50] sm:$0xf] %vm3337, %v3282
        %3359 = vst.msk [vmem:[#allocation3 + $0x54] sm:$0xf] %vm3337, %v3284
        %3360 = vst.msk [vmem:[#allocation3 + $0x58] sm:$0xf] %vm3337, %v3286
        %3361 = vst.msk [vmem:[#allocation3 + $0x5c] sm:$0xf] %vm3337, %v3288
        %3362 = vst.msk [vmem:[#allocation3 + $0x60] sm:$0xf] %vm3337, %v3290
        %3363 = vst.msk [vmem:[#allocation3 + $0x64] sm:$0xf] %vm3337, %v3292
        %3364 = vst.msk [vmem:[#allocation3 + $0x68] sm:$0xf] %vm3337, %v3294
        %3365 = vst.msk [vmem:[#allocation3 + $0x6c] sm:$0xf] %vm3337, %v3296
        %3366 = vst.msk [vmem:[#allocation3 + $0x70] sm:$0xf] %vm3337, %v3298
        %3367 = vst.msk [vmem:[#allocation3 + $0x74] sm:$0xf] %vm3337, %v3300
        %3368 = vst.msk [vmem:[#allocation3 + $0x78] sm:$0xf] %vm3337, %v3302
        %3369 = vst.msk [vmem:[#allocation3 + $0x7c] sm:$0xf] %vm3337, %v3304
        %s3370 = scalar_lea.vmem [#allocation2], 24
        %v3371 = vld [vmem:[%s3370] sm:$0xf]
        %v3372 = vld [vmem:[%s3370 + $0x4] sm:$0xf]
        %v3373 = vld [vmem:[%s3370 + $0xc] sm:$0xf]
        %v3374 = vld [vmem:[%s3370 + $0x10] sm:$0xf]
        %v3375 = vld [vmem:[%s3370 + $0x18] sm:$0xf]
        %v3376 = vld [vmem:[%s3370 + $0x1c] sm:$0xf]
        %v3377 = vld [vmem:[%s3370 + $0x24] sm:$0xf]
        %v3378 = vld [vmem:[%s3370 + $0x28] sm:$0xf]
        %v3379 = vld [vmem:[%s3370 + $0x30] sm:$0xf]
        %v3380 = vld [vmem:[%s3370 + $0x34] sm:$0xf]
        %v3381 = vld [vmem:[%s3370 + $0x3c] sm:$0xf]
        %v3382 = vld [vmem:[%s3370 + $0x40] sm:$0xf]
        %v3383 = vld [vmem:[%s3370 + $0x48] sm:$0xf]
        %v3384 = vld [vmem:[%s3370 + $0x4c] sm:$0xf]
        %v3385 = vld [vmem:[%s3370 + $0x54] sm:$0xf]
        %v3386 = vld [vmem:[%s3370 + $0x58] sm:$0xf]
        %v3387 = vld [vmem:[%s3370 + $0x60] sm:$0xf]
        %v3388 = vld [vmem:[%s3370 + $0x64] sm:$0xf]
        %v3389 = vld [vmem:[%s3370 + $0x6c] sm:$0xf]
        %v3390 = vld [vmem:[%s3370 + $0x70] sm:$0xf]
        %v3391 = vld [vmem:[%s3370 + $0x78] sm:$0xf]
        %v3392 = vld [vmem:[%s3370 + $0x7c] sm:$0xf]
        %v3393 = vld [vmem:[%s3370 + $0x84] sm:$0xf]
        %v3394 = vld [vmem:[%s3370 + $0x88] sm:$0xf]
        %v3395 = vld [vmem:[%s3370 + $0x90] sm:$0xf]
        %v3396 = vld [vmem:[%s3370 + $0x94] sm:$0xf]
        %v3397 = vld [vmem:[%s3370 + $0x9c] sm:$0xf]
        %v3398 = vld [vmem:[%s3370 + $0xa0] sm:$0xf]
        %v3399 = vld [vmem:[%s3370 + $0xa8] sm:$0xf]
        %v3400 = vld [vmem:[%s3370 + $0xac] sm:$0xf]
        %v3401 = vld [vmem:[%s3370 + $0xb4] sm:$0xf]
        %v3402 = vld [vmem:[%s3370 + $0xb8] sm:$0xf]
        %3435 = vrot.lane.b32.xlu0 %v3371, 24
        %v3436 = vpop.permute.xlu0 %3435
        %3437 = vrot.lane.b32.xlu0 %v3372, 24
        %v3438 = vpop.permute.xlu0 %3437
        %3439 = vrot.lane.b32.xlu0 %v3373, 24
        %v3440 = vpop.permute.xlu0 %3439
        %3441 = vrot.lane.b32.xlu0 %v3374, 24
        %v3442 = vpop.permute.xlu0 %3441
        %3443 = vrot.lane.b32.xlu0 %v3375, 24
        %v3444 = vpop.permute.xlu0 %3443
        %3445 = vrot.lane.b32.xlu0 %v3376, 24
        %v3446 = vpop.permute.xlu0 %3445
        %3447 = vrot.lane.b32.xlu0 %v3377, 24
        %v3448 = vpop.permute.xlu0 %3447
        %3449 = vrot.lane.b32.xlu0 %v3378, 24
        %v3450 = vpop.permute.xlu0 %3449
        %3451 = vrot.lane.b32.xlu0 %v3379, 24
        %v3452 = vpop.permute.xlu0 %3451
        %3453 = vrot.lane.b32.xlu0 %v3380, 24
        %v3454 = vpop.permute.xlu0 %3453
        %3455 = vrot.lane.b32.xlu0 %v3381, 24
        %v3456 = vpop.permute.xlu0 %3455
        %3457 = vrot.lane.b32.xlu0 %v3382, 24
        %v3458 = vpop.permute.xlu0 %3457
        %3459 = vrot.lane.b32.xlu0 %v3383, 24
        %v3460 = vpop.permute.xlu0 %3459
        %3461 = vrot.lane.b32.xlu0 %v3384, 24
        %v3462 = vpop.permute.xlu0 %3461
        %3463 = vrot.lane.b32.xlu0 %v3385, 24
        %v3464 = vpop.permute.xlu0 %3463
        %3465 = vrot.lane.b32.xlu0 %v3386, 24
        %v3466 = vpop.permute.xlu0 %3465
        %3467 = vrot.lane.b32.xlu0 %v3387, 24
        %v3468 = vpop.permute.xlu0 %3467
        %3469 = vrot.lane.b32.xlu0 %v3388, 24
        %v3470 = vpop.permute.xlu0 %3469
        %3471 = vrot.lane.b32.xlu0 %v3389, 24
        %v3472 = vpop.permute.xlu0 %3471
        %3473 = vrot.lane.b32.xlu0 %v3390, 24
        %v3474 = vpop.permute.xlu0 %3473
        %3475 = vrot.lane.b32.xlu0 %v3391, 24
        %v3476 = vpop.permute.xlu0 %3475
        %3477 = vrot.lane.b32.xlu0 %v3392, 24
        %v3478 = vpop.permute.xlu0 %3477
        %3479 = vrot.lane.b32.xlu0 %v3393, 24
        %v3480 = vpop.permute.xlu0 %3479
        %3481 = vrot.lane.b32.xlu0 %v3394, 24
        %v3482 = vpop.permute.xlu0 %3481
        %3483 = vrot.lane.b32.xlu0 %v3395, 24
        %v3484 = vpop.permute.xlu0 %3483
        %3485 = vrot.lane.b32.xlu0 %v3396, 24
        %v3486 = vpop.permute.xlu0 %3485
        %3487 = vrot.lane.b32.xlu0 %v3397, 24
        %v3488 = vpop.permute.xlu0 %3487
        %3489 = vrot.lane.b32.xlu0 %v3398, 24
        %v3490 = vpop.permute.xlu0 %3489
        %3491 = vrot.lane.b32.xlu0 %v3399, 24
        %v3492 = vpop.permute.xlu0 %3491
        %3493 = vrot.lane.b32.xlu0 %v3400, 24
        %v3494 = vpop.permute.xlu0 %3493
        %3495 = vrot.lane.b32.xlu0 %v3401, 24
        %v3496 = vpop.permute.xlu0 %3495
        %3497 = vrot.lane.b32.xlu0 %v3402, 24
        %v3498 = vpop.permute.xlu0 %3497
        %vm3531 = vcmask 224448
        %3532 = vst.msk [vmem:[#allocation3] sm:$0xf] %vm3531, %v3436
        %3533 = vst.msk [vmem:[#allocation3 + $0x4] sm:$0xf] %vm3531, %v3438
        %3534 = vst.msk [vmem:[#allocation3 + $0x8] sm:$0xf] %vm3531, %v3440
        %3535 = vst.msk [vmem:[#allocation3 + $0xc] sm:$0xf] %vm3531, %v3442
        %3536 = vst.msk [vmem:[#allocation3 + $0x10] sm:$0xf] %vm3531, %v3444
        %3537 = vst.msk [vmem:[#allocation3 + $0x14] sm:$0xf] %vm3531, %v3446
        %3538 = vst.msk [vmem:[#allocation3 + $0x18] sm:$0xf] %vm3531, %v3448
        %3539 = vst.msk [vmem:[#allocation3 + $0x1c] sm:$0xf] %vm3531, %v3450
        %3540 = vst.msk [vmem:[#allocation3 + $0x20] sm:$0xf] %vm3531, %v3452
        %3541 = vst.msk [vmem:[#allocation3 + $0x24] sm:$0xf] %vm3531, %v3454
        %3542 = vst.msk [vmem:[#allocation3 + $0x28] sm:$0xf] %vm3531, %v3456
        %3543 = vst.msk [vmem:[#allocation3 + $0x2c] sm:$0xf] %vm3531, %v3458
        %3544 = vst.msk [vmem:[#allocation3 + $0x30] sm:$0xf] %vm3531, %v3460
        %3545 = vst.msk [vmem:[#allocation3 + $0x34] sm:$0xf] %vm3531, %v3462
        %3546 = vst.msk [vmem:[#allocation3 + $0x38] sm:$0xf] %vm3531, %v3464
        %3547 = vst.msk [vmem:[#allocation3 + $0x3c] sm:$0xf] %vm3531, %v3466
        %3548 = vst.msk [vmem:[#allocation3 + $0x40] sm:$0xf] %vm3531, %v3468
        %3549 = vst.msk [vmem:[#allocation3 + $0x44] sm:$0xf] %vm3531, %v3470
        %3550 = vst.msk [vmem:[#allocation3 + $0x48] sm:$0xf] %vm3531, %v3472
        %3551 = vst.msk [vmem:[#allocation3 + $0x4c] sm:$0xf] %vm3531, %v3474
        %3552 = vst.msk [vmem:[#allocation3 + $0x50] sm:$0xf] %vm3531, %v3476
        %3553 = vst.msk [vmem:[#allocation3 + $0x54] sm:$0xf] %vm3531, %v3478
        %3554 = vst.msk [vmem:[#allocation3 + $0x58] sm:$0xf] %vm3531, %v3480
        %3555 = vst.msk [vmem:[#allocation3 + $0x5c] sm:$0xf] %vm3531, %v3482
        %3556 = vst.msk [vmem:[#allocation3 + $0x60] sm:$0xf] %vm3531, %v3484
        %3557 = vst.msk [vmem:[#allocation3 + $0x64] sm:$0xf] %vm3531, %v3486
        %3558 = vst.msk [vmem:[#allocation3 + $0x68] sm:$0xf] %vm3531, %v3488
        %3559 = vst.msk [vmem:[#allocation3 + $0x6c] sm:$0xf] %vm3531, %v3490
        %3560 = vst.msk [vmem:[#allocation3 + $0x70] sm:$0xf] %vm3531, %v3492
        %3561 = vst.msk [vmem:[#allocation3 + $0x74] sm:$0xf] %vm3531, %v3494
        %3562 = vst.msk [vmem:[#allocation3 + $0x78] sm:$0xf] %vm3531, %v3496
        %3563 = vst.msk [vmem:[#allocation3 + $0x7c] sm:$0xf] %vm3531, %v3498
        %v3564 = vld [vmem:[%s3370] sm:$0xf]
        %v3565 = vld [vmem:[%s3370 + $0x4] sm:$0xf]
        %v3566 = vld [vmem:[%s3370 + $0x8] sm:$0x1]
        %v3567 = vld [vmem:[%s3370 + $0xc] sm:$0xf]
        %v3568 = vld [vmem:[%s3370 + $0x10] sm:$0xf]
        %v3569 = vld [vmem:[%s3370 + $0x14] sm:$0x1]
        %v3570 = vld [vmem:[%s3370 + $0x18] sm:$0xf]
        %v3571 = vld [vmem:[%s3370 + $0x1c] sm:$0xf]
        %v3572 = vld [vmem:[%s3370 + $0x20] sm:$0x1]
        %v3573 = vld [vmem:[%s3370 + $0x24] sm:$0xf]
        %v3574 = vld [vmem:[%s3370 + $0x28] sm:$0xf]
        %v3575 = vld [vmem:[%s3370 + $0x2c] sm:$0x1]
        %v3576 = vld [vmem:[%s3370 + $0x30] sm:$0xf]
        %v3577 = vld [vmem:[%s3370 + $0x34] sm:$0xf]
        %v3578 = vld [vmem:[%s3370 + $0x38] sm:$0x1]
        %v3579 = vld [vmem:[%s3370 + $0x3c] sm:$0xf]
        %v3580 = vld [vmem:[%s3370 + $0x40] sm:$0xf]
        %v3581 = vld [vmem:[%s3370 + $0x44] sm:$0x1]
        %v3582 = vld [vmem:[%s3370 + $0x48] sm:$0xf]
        %v3583 = vld [vmem:[%s3370 + $0x4c] sm:$0xf]
        %v3584 = vld [vmem:[%s3370 + $0x50] sm:$0x1]
        %v3585 = vld [vmem:[%s3370 + $0x54] sm:$0xf]
        %v3586 = vld [vmem:[%s3370 + $0x58] sm:$0xf]
        %v3587 = vld [vmem:[%s3370 + $0x5c] sm:$0x1]
        %v3588 = vld [vmem:[%s3370 + $0x60] sm:$0xf]
        %v3589 = vld [vmem:[%s3370 + $0x64] sm:$0xf]
        %v3590 = vld [vmem:[%s3370 + $0x68] sm:$0x1]
        %v3591 = vld [vmem:[%s3370 + $0x6c] sm:$0xf]
        %v3592 = vld [vmem:[%s3370 + $0x70] sm:$0xf]
        %v3593 = vld [vmem:[%s3370 + $0x74] sm:$0x1]
        %v3594 = vld [vmem:[%s3370 + $0x78] sm:$0xf]
        %v3595 = vld [vmem:[%s3370 + $0x7c] sm:$0xf]
        %v3596 = vld [vmem:[%s3370 + $0x80] sm:$0x1]
        %v3597 = vld [vmem:[%s3370 + $0x84] sm:$0xf]
        %v3598 = vld [vmem:[%s3370 + $0x88] sm:$0xf]
        %v3599 = vld [vmem:[%s3370 + $0x8c] sm:$0x1]
        %v3600 = vld [vmem:[%s3370 + $0x90] sm:$0xf]
        %v3601 = vld [vmem:[%s3370 + $0x94] sm:$0xf]
        %v3602 = vld [vmem:[%s3370 + $0x98] sm:$0x1]
        %v3603 = vld [vmem:[%s3370 + $0x9c] sm:$0xf]
        %v3604 = vld [vmem:[%s3370 + $0xa0] sm:$0xf]
        %v3605 = vld [vmem:[%s3370 + $0xa4] sm:$0x1]
        %v3606 = vld [vmem:[%s3370 + $0xa8] sm:$0xf]
        %v3607 = vld [vmem:[%s3370 + $0xac] sm:$0xf]
        %v3608 = vld [vmem:[%s3370 + $0xb0] sm:$0x1]
        %v3609 = vld [vmem:[%s3370 + $0xb4] sm:$0xf]
        %v3610 = vld [vmem:[%s3370 + $0xb8] sm:$0xf]
        %v3611 = vld [vmem:[%s3370 + $0xbc] sm:$0x1]
        %v3613 = vshrl.u32 %v3564, 16
        %v3615 = vrot.slane %v3613, 4
        %v3616 = vshll.u32 %v3564, 16
        %v3618 = vrot.slane %v3616, 5
        %v3619 = vor.u32 %v3615, %v3618
        %v3620 = vrot.slane %v3619, 4
        %v3622 = vshll.u32 %v3565, 16
        %v3624 = vrot.slane %v3622, 5
        %v3625 = vsel %vm1425, %v3620, %v3624
        %v3626 = vshrl.u32 %v3565, 16
        %v3628 = vrot.slane %v3626, 4
        %v3629 = vor.u32 %v3628, %v3624
        %v3630 = vrot.slane %v3629, 4
        %v3632 = vshll.u32 %v3566, 16
        %v3634 = vrot.slane %v3632, 5
        %v3635 = vsel %vm1425, %v3630, %v3634
        %v3637 = vshrl.u32 %v3567, 16
        %v3639 = vrot.slane %v3637, 4
        %v3640 = vshll.u32 %v3567, 16
        %v3642 = vrot.slane %v3640, 5
        %v3643 = vor.u32 %v3639, %v3642
        %v3644 = vrot.slane %v3643, 4
        %v3646 = vshll.u32 %v3568, 16
        %v3648 = vrot.slane %v3646, 5
        %v3649 = vsel %vm1425, %v3644, %v3648
        %v3650 = vshrl.u32 %v3568, 16
        %v3652 = vrot.slane %v3650, 4
        %v3653 = vor.u32 %v3652, %v3648
        %v3654 = vrot.slane %v3653, 4
        %v3656 = vshll.u32 %v3569, 16
        %v3658 = vrot.slane %v3656, 5
        %v3659 = vsel %vm1425, %v3654, %v3658
        %v3661 = vshrl.u32 %v3570, 16
        %v3663 = vrot.slane %v3661, 4
        %v3664 = vshll.u32 %v3570, 16
        %v3666 = vrot.slane %v3664, 5
        %v3667 = vor.u32 %v3663, %v3666
        %v3668 = vrot.slane %v3667, 4
        %v3670 = vshll.u32 %v3571, 16
        %v3672 = vrot.slane %v3670, 5
        %v3673 = vsel %vm1425, %v3668, %v3672
        %v3674 = vshrl.u32 %v3571, 16
        %v3676 = vrot.slane %v3674, 4
        %v3677 = vor.u32 %v3676, %v3672
        %v3678 = vrot.slane %v3677, 4
        %v3680 = vshll.u32 %v3572, 16
        %v3682 = vrot.slane %v3680, 5
        %v3683 = vsel %vm1425, %v3678, %v3682
        %v3685 = vshrl.u32 %v3573, 16
        %v3687 = vrot.slane %v3685, 4
        %v3688 = vshll.u32 %v3573, 16
        %v3690 = vrot.slane %v3688, 5
        %v3691 = vor.u32 %v3687, %v3690
        %v3692 = vrot.slane %v3691, 4
        %v3694 = vshll.u32 %v3574, 16
        %v3696 = vrot.slane %v3694, 5
        %v3697 = vsel %vm1425, %v3692, %v3696
        %v3698 = vshrl.u32 %v3574, 16
        %v3700 = vrot.slane %v3698, 4
        %v3701 = vor.u32 %v3700, %v3696
        %v3702 = vrot.slane %v3701, 4
        %v3704 = vshll.u32 %v3575, 16
        %v3706 = vrot.slane %v3704, 5
        %v3707 = vsel %vm1425, %v3702, %v3706
        %v3709 = vshrl.u32 %v3576, 16
        %v3711 = vrot.slane %v3709, 4
        %v3712 = vshll.u32 %v3576, 16
        %v3714 = vrot.slane %v3712, 5
        %v3715 = vor.u32 %v3711, %v3714
        %v3716 = vrot.slane %v3715, 4
        %v3718 = vshll.u32 %v3577, 16
        %v3720 = vrot.slane %v3718, 5
        %v3721 = vsel %vm1425, %v3716, %v3720
        %v3722 = vshrl.u32 %v3577, 16
        %v3724 = vrot.slane %v3722, 4
        %v3725 = vor.u32 %v3724, %v3720
        %v3726 = vrot.slane %v3725, 4
        %v3728 = vshll.u32 %v3578, 16
        %v3730 = vrot.slane %v3728, 5
        %v3731 = vsel %vm1425, %v3726, %v3730
        %v3733 = vshrl.u32 %v3579, 16
        %v3735 = vrot.slane %v3733, 4
        %v3736 = vshll.u32 %v3579, 16
        %v3738 = vrot.slane %v3736, 5
        %v3739 = vor.u32 %v3735, %v3738
        %v3740 = vrot.slane %v3739, 4
        %v3742 = vshll.u32 %v3580, 16
        %v3744 = vrot.slane %v3742, 5
        %v3745 = vsel %vm1425, %v3740, %v3744
        %v3746 = vshrl.u32 %v3580, 16
        %v3748 = vrot.slane %v3746, 4
        %v3749 = vor.u32 %v3748, %v3744
        %v3750 = vrot.slane %v3749, 4
        %v3752 = vshll.u32 %v3581, 16
        %v3754 = vrot.slane %v3752, 5
        %v3755 = vsel %vm1425, %v3750, %v3754
        %v3757 = vshrl.u32 %v3582, 16
        %v3759 = vrot.slane %v3757, 4
        %v3760 = vshll.u32 %v3582, 16
        %v3762 = vrot.slane %v3760, 5
        %v3763 = vor.u32 %v3759, %v3762
        %v3764 = vrot.slane %v3763, 4
        %v3766 = vshll.u32 %v3583, 16
        %v3768 = vrot.slane %v3766, 5
        %v3769 = vsel %vm1425, %v3764, %v3768
        %v3770 = vshrl.u32 %v3583, 16
        %v3772 = vrot.slane %v3770, 4
        %v3773 = vor.u32 %v3772, %v3768
        %v3774 = vrot.slane %v3773, 4
        %v3776 = vshll.u32 %v3584, 16
        %v3778 = vrot.slane %v3776, 5
        %v3779 = vsel %vm1425, %v3774, %v3778
        %v3781 = vshrl.u32 %v3585, 16
        %v3783 = vrot.slane %v3781, 4
        %v3784 = vshll.u32 %v3585, 16
        %v3786 = vrot.slane %v3784, 5
        %v3787 = vor.u32 %v3783, %v3786
        %v3788 = vrot.slane %v3787, 4
        %v3790 = vshll.u32 %v3586, 16
        %v3792 = vrot.slane %v3790, 5
        %v3793 = vsel %vm1425, %v3788, %v3792
        %v3794 = vshrl.u32 %v3586, 16
        %v3796 = vrot.slane %v3794, 4
        %v3797 = vor.u32 %v3796, %v3792
        %v3798 = vrot.slane %v3797, 4
        %v3800 = vshll.u32 %v3587, 16
        %v3802 = vrot.slane %v3800, 5
        %v3803 = vsel %vm1425, %v3798, %v3802
        %v3805 = vshrl.u32 %v3588, 16
        %v3807 = vrot.slane %v3805, 4
        %v3808 = vshll.u32 %v3588, 16
        %v3810 = vrot.slane %v3808, 5
        %v3811 = vor.u32 %v3807, %v3810
        %v3812 = vrot.slane %v3811, 4
        %v3814 = vshll.u32 %v3589, 16
        %v3816 = vrot.slane %v3814, 5
        %v3817 = vsel %vm1425, %v3812, %v3816
        %v3818 = vshrl.u32 %v3589, 16
        %v3820 = vrot.slane %v3818, 4
        %v3821 = vor.u32 %v3820, %v3816
        %v3822 = vrot.slane %v3821, 4
        %v3824 = vshll.u32 %v3590, 16
        %v3826 = vrot.slane %v3824, 5
        %v3827 = vsel %vm1425, %v3822, %v3826
        %v3829 = vshrl.u32 %v3591, 16
        %v3831 = vrot.slane %v3829, 4
        %v3832 = vshll.u32 %v3591, 16
        %v3834 = vrot.slane %v3832, 5
        %v3835 = vor.u32 %v3831, %v3834
        %v3836 = vrot.slane %v3835, 4
        %v3838 = vshll.u32 %v3592, 16
        %v3840 = vrot.slane %v3838, 5
        %v3841 = vsel %vm1425, %v3836, %v3840
        %v3842 = vshrl.u32 %v3592, 16
        %v3844 = vrot.slane %v3842, 4
        %v3845 = vor.u32 %v3844, %v3840
        %v3846 = vrot.slane %v3845, 4
        %v3848 = vshll.u32 %v3593, 16
        %v3850 = vrot.slane %v3848, 5
        %v3851 = vsel %vm1425, %v3846, %v3850
        %v3853 = vshrl.u32 %v3594, 16
        %v3855 = vrot.slane %v3853, 4
        %v3856 = vshll.u32 %v3594, 16
        %v3858 = vrot.slane %v3856, 5
        %v3859 = vor.u32 %v3855, %v3858
        %v3860 = vrot.slane %v3859, 4
        %v3862 = vshll.u32 %v3595, 16
        %v3864 = vrot.slane %v3862, 5
        %v3865 = vsel %vm1425, %v3860, %v3864
        %v3866 = vshrl.u32 %v3595, 16
        %v3868 = vrot.slane %v3866, 4
        %v3869 = vor.u32 %v3868, %v3864
        %v3870 = vrot.slane %v3869, 4
        %v3872 = vshll.u32 %v3596, 16
        %v3874 = vrot.slane %v3872, 5
        %v3875 = vsel %vm1425, %v3870, %v3874
        %v3877 = vshrl.u32 %v3597, 16
        %v3879 = vrot.slane %v3877, 4
        %v3880 = vshll.u32 %v3597, 16
        %v3882 = vrot.slane %v3880, 5
        %v3883 = vor.u32 %v3879, %v3882
        %v3884 = vrot.slane %v3883, 4
        %v3886 = vshll.u32 %v3598, 16
        %v3888 = vrot.slane %v3886, 5
        %v3889 = vsel %vm1425, %v3884, %v3888
        %v3890 = vshrl.u32 %v3598, 16
        %v3892 = vrot.slane %v3890, 4
        %v3893 = vor.u32 %v3892, %v3888
        %v3894 = vrot.slane %v3893, 4
        %v3896 = vshll.u32 %v3599, 16
        %v3898 = vrot.slane %v3896, 5
        %v3899 = vsel %vm1425, %v3894, %v3898
        %v3901 = vshrl.u32 %v3600, 16
        %v3903 = vrot.slane %v3901, 4
        %v3904 = vshll.u32 %v3600, 16
        %v3906 = vrot.slane %v3904, 5
        %v3907 = vor.u32 %v3903, %v3906
        %v3908 = vrot.slane %v3907, 4
        %v3910 = vshll.u32 %v3601, 16
        %v3912 = vrot.slane %v3910, 5
        %v3913 = vsel %vm1425, %v3908, %v3912
        %v3914 = vshrl.u32 %v3601, 16
        %v3916 = vrot.slane %v3914, 4
        %v3917 = vor.u32 %v3916, %v3912
        %v3918 = vrot.slane %v3917, 4
        %v3920 = vshll.u32 %v3602, 16
        %v3922 = vrot.slane %v3920, 5
        %v3923 = vsel %vm1425, %v3918, %v3922
        %v3925 = vshrl.u32 %v3603, 16
        %v3927 = vrot.slane %v3925, 4
        %v3928 = vshll.u32 %v3603, 16
        %v3930 = vrot.slane %v3928, 5
        %v3931 = vor.u32 %v3927, %v3930
        %v3932 = vrot.slane %v3931, 4
        %v3934 = vshll.u32 %v3604, 16
        %v3936 = vrot.slane %v3934, 5
        %v3937 = vsel %vm1425, %v3932, %v3936
        %v3938 = vshrl.u32 %v3604, 16
        %v3940 = vrot.slane %v3938, 4
        %v3941 = vor.u32 %v3940, %v3936
        %v3942 = vrot.slane %v3941, 4
        %v3944 = vshll.u32 %v3605, 16
        %v3946 = vrot.slane %v3944, 5
        %v3947 = vsel %vm1425, %v3942, %v3946
        %v3949 = vshrl.u32 %v3606, 16
        %v3951 = vrot.slane %v3949, 4
        %v3952 = vshll.u32 %v3606, 16
        %v3954 = vrot.slane %v3952, 5
        %v3955 = vor.u32 %v3951, %v3954
        %v3956 = vrot.slane %v3955, 4
        %v3958 = vshll.u32 %v3607, 16
        %v3960 = vrot.slane %v3958, 5
        %v3961 = vsel %vm1425, %v3956, %v3960
        %v3962 = vshrl.u32 %v3607, 16
        %v3964 = vrot.slane %v3962, 4
        %v3965 = vor.u32 %v3964, %v3960
        %v3966 = vrot.slane %v3965, 4
        %v3968 = vshll.u32 %v3608, 16
        %v3970 = vrot.slane %v3968, 5
        %v3971 = vsel %vm1425, %v3966, %v3970
        %v3973 = vshrl.u32 %v3609, 16
        %v3975 = vrot.slane %v3973, 4
        %v3976 = vshll.u32 %v3609, 16
        %v3978 = vrot.slane %v3976, 5
        %v3979 = vor.u32 %v3975, %v3978
        %v3980 = vrot.slane %v3979, 4
        %v3982 = vshll.u32 %v3610, 16
        %v3984 = vrot.slane %v3982, 5
        %v3985 = vsel %vm1425, %v3980, %v3984
        %v3986 = vshrl.u32 %v3610, 16
        %v3988 = vrot.slane %v3986, 4
        %v3989 = vor.u32 %v3988, %v3984
        %v3990 = vrot.slane %v3989, 4
        %v3992 = vshll.u32 %v3611, 16
        %v3994 = vrot.slane %v3992, 5
        %v3995 = vsel %vm1425, %v3990, %v3994
        %3996 = vrot.lane.b32.xlu0 %v3625, 28
        %v3997 = vpop.permute.xlu0 %3996
        %3998 = vrot.lane.b32.xlu0 %v3635, 28
        %v3999 = vpop.permute.xlu0 %3998
        %4000 = vrot.lane.b32.xlu0 %v3649, 28
        %v4001 = vpop.permute.xlu0 %4000
        %4002 = vrot.lane.b32.xlu0 %v3659, 28
        %v4003 = vpop.permute.xlu0 %4002
        %4004 = vrot.lane.b32.xlu0 %v3673, 28
        %v4005 = vpop.permute.xlu0 %4004
        %4006 = vrot.lane.b32.xlu0 %v3683, 28
        %v4007 = vpop.permute.xlu0 %4006
        %4008 = vrot.lane.b32.xlu0 %v3697, 28
        %v4009 = vpop.permute.xlu0 %4008
        %4010 = vrot.lane.b32.xlu0 %v3707, 28
        %v4011 = vpop.permute.xlu0 %4010
        %4012 = vrot.lane.b32.xlu0 %v3721, 28
        %v4013 = vpop.permute.xlu0 %4012
        %4014 = vrot.lane.b32.xlu0 %v3731, 28
        %v4015 = vpop.permute.xlu0 %4014
        %4016 = vrot.lane.b32.xlu0 %v3745, 28
        %v4017 = vpop.permute.xlu0 %4016
        %4018 = vrot.lane.b32.xlu0 %v3755, 28
        %v4019 = vpop.permute.xlu0 %4018
        %4020 = vrot.lane.b32.xlu0 %v3769, 28
        %v4021 = vpop.permute.xlu0 %4020
        %4022 = vrot.lane.b32.xlu0 %v3779, 28
        %v4023 = vpop.permute.xlu0 %4022
        %4024 = vrot.lane.b32.xlu0 %v3793, 28
        %v4025 = vpop.permute.xlu0 %4024
        %4026 = vrot.lane.b32.xlu0 %v3803, 28
        %v4027 = vpop.permute.xlu0 %4026
        %4028 = vrot.lane.b32.xlu0 %v3817, 28
        %v4029 = vpop.permute.xlu0 %4028
        %4030 = vrot.lane.b32.xlu0 %v3827, 28
        %v4031 = vpop.permute.xlu0 %4030
        %4032 = vrot.lane.b32.xlu0 %v3841, 28
        %v4033 = vpop.permute.xlu0 %4032
        %4034 = vrot.lane.b32.xlu0 %v3851, 28
        %v4035 = vpop.permute.xlu0 %4034
        %4036 = vrot.lane.b32.xlu0 %v3865, 28
        %v4037 = vpop.permute.xlu0 %4036
        %4038 = vrot.lane.b32.xlu0 %v3875, 28
        %v4039 = vpop.permute.xlu0 %4038
        %4040 = vrot.lane.b32.xlu0 %v3889, 28
        %v4041 = vpop.permute.xlu0 %4040
        %4042 = vrot.lane.b32.xlu0 %v3899, 28
        %v4043 = vpop.permute.xlu0 %4042
        %4044 = vrot.lane.b32.xlu0 %v3913, 28
        %v4045 = vpop.permute.xlu0 %4044
        %4046 = vrot.lane.b32.xlu0 %v3923, 28
        %v4047 = vpop.permute.xlu0 %4046
        %4048 = vrot.lane.b32.xlu0 %v3937, 28
        %v4049 = vpop.permute.xlu0 %4048
        %4050 = vrot.lane.b32.xlu0 %v3947, 28
        %v4051 = vpop.permute.xlu0 %4050
        %4052 = vrot.lane.b32.xlu0 %v3961, 28
        %v4053 = vpop.permute.xlu0 %4052
        %4054 = vrot.lane.b32.xlu0 %v3971, 28
        %v4055 = vpop.permute.xlu0 %4054
        %4056 = vrot.lane.b32.xlu0 %v3985, 28
        %v4057 = vpop.permute.xlu0 %4056
        %4058 = vrot.lane.b32.xlu0 %v3995, 28
        %v4059 = vpop.permute.xlu0 %4058
        %vm4092 = vcmask 257248
        %4093 = vst.msk [vmem:[#allocation3] sm:$0xf] %vm4092, %v3997
        %4094 = vst.msk [vmem:[#allocation3 + $0x4] sm:$0xf] %vm4092, %v3999
        %4095 = vst.msk [vmem:[#allocation3 + $0x8] sm:$0xf] %vm4092, %v4001
        %4096 = vst.msk [vmem:[#allocation3 + $0xc] sm:$0xf] %vm4092, %v4003
        %4097 = vst.msk [vmem:[#allocation3 + $0x10] sm:$0xf] %vm4092, %v4005
        %4098 = vst.msk [vmem:[#allocation3 + $0x14] sm:$0xf] %vm4092, %v4007
        %4099 = vst.msk [vmem:[#allocation3 + $0x18] sm:$0xf] %vm4092, %v4009
        %4100 = vst.msk [vmem:[#allocation3 + $0x1c] sm:$0xf] %vm4092, %v4011
        %4101 = vst.msk [vmem:[#allocation3 + $0x20] sm:$0xf] %vm4092, %v4013
        %4102 = vst.msk [vmem:[#allocation3 + $0x24] sm:$0xf] %vm4092, %v4015
        %4103 = vst.msk [vmem:[#allocation3 + $0x28] sm:$0xf] %vm4092, %v4017
        %4104 = vst.msk [vmem:[#allocation3 + $0x2c] sm:$0xf] %vm4092, %v4019
        %4105 = vst.msk [vmem:[#allocation3 + $0x30] sm:$0xf] %vm4092, %v4021
        %4106 = vst.msk [vmem:[#allocation3 + $0x34] sm:$0xf] %vm4092, %v4023
        %4107 = vst.msk [vmem:[#allocation3 + $0x38] sm:$0xf] %vm4092, %v4025
        %4108 = vst.msk [vmem:[#allocation3 + $0x3c] sm:$0xf] %vm4092, %v4027
        %4109 = vst.msk [vmem:[#allocation3 + $0x40] sm:$0xf] %vm4092, %v4029
        %4110 = vst.msk [vmem:[#allocation3 + $0x44] sm:$0xf] %vm4092, %v4031
        %4111 = vst.msk [vmem:[#allocation3 + $0x48] sm:$0xf] %vm4092, %v4033
        %4112 = vst.msk [vmem:[#allocation3 + $0x4c] sm:$0xf] %vm4092, %v4035
        %4113 = vst.msk [vmem:[#allocation3 + $0x50] sm:$0xf] %vm4092, %v4037
        %4114 = vst.msk [vmem:[#allocation3 + $0x54] sm:$0xf] %vm4092, %v4039
        %4115 = vst.msk [vmem:[#allocation3 + $0x58] sm:$0xf] %vm4092, %v4041
        %4116 = vst.msk [vmem:[#allocation3 + $0x5c] sm:$0xf] %vm4092, %v4043
        %4117 = vst.msk [vmem:[#allocation3 + $0x60] sm:$0xf] %vm4092, %v4045
        %4118 = vst.msk [vmem:[#allocation3 + $0x64] sm:$0xf] %vm4092, %v4047
        %4119 = vst.msk [vmem:[#allocation3 + $0x68] sm:$0xf] %vm4092, %v4049
        %4120 = vst.msk [vmem:[#allocation3 + $0x6c] sm:$0xf] %vm4092, %v4051
        %4121 = vst.msk [vmem:[#allocation3 + $0x70] sm:$0xf] %vm4092, %v4053
        %4122 = vst.msk [vmem:[#allocation3 + $0x74] sm:$0xf] %vm4092, %v4055
        %4123 = vst.msk [vmem:[#allocation3 + $0x78] sm:$0xf] %vm4092, %v4057
        %4124 = vst.msk [vmem:[#allocation3 + $0x7c] sm:$0xf] %vm4092, %v4059
        %v4125 = vld [vmem:[%s3370] sm:$0xe]
        %v4126 = vld [vmem:[%s3370 + $0x4] sm:$0xf]
        %v4127 = vld [vmem:[%s3370 + $0x8] sm:$0x1]
        %v4128 = vld [vmem:[%s3370 + $0xc] sm:$0xe]
        %v4129 = vld [vmem:[%s3370 + $0x10] sm:$0xf]
        %v4130 = vld [vmem:[%s3370 + $0x14] sm:$0x1]
        %v4131 = vld [vmem:[%s3370 + $0x18] sm:$0xe]
        %v4132 = vld [vmem:[%s3370 + $0x1c] sm:$0xf]
        %v4133 = vld [vmem:[%s3370 + $0x20] sm:$0x1]
        %v4134 = vld [vmem:[%s3370 + $0x24] sm:$0xe]
        %v4135 = vld [vmem:[%s3370 + $0x28] sm:$0xf]
        %v4136 = vld [vmem:[%s3370 + $0x2c] sm:$0x1]
        %v4137 = vld [vmem:[%s3370 + $0x30] sm:$0xe]
        %v4138 = vld [vmem:[%s3370 + $0x34] sm:$0xf]
        %v4139 = vld [vmem:[%s3370 + $0x38] sm:$0x1]
        %v4140 = vld [vmem:[%s3370 + $0x3c] sm:$0xe]
        %v4141 = vld [vmem:[%s3370 + $0x40] sm:$0xf]
        %v4142 = vld [vmem:[%s3370 + $0x44] sm:$0x1]
        %v4143 = vld [vmem:[%s3370 + $0x48] sm:$0xe]
        %v4144 = vld [vmem:[%s3370 + $0x4c] sm:$0xf]
        %v4145 = vld [vmem:[%s3370 + $0x50] sm:$0x1]
        %v4146 = vld [vmem:[%s3370 + $0x54] sm:$0xe]
        %v4147 = vld [vmem:[%s3370 + $0x58] sm:$0xf]
        %v4148 = vld [vmem:[%s3370 + $0x5c] sm:$0x1]
        %v4149 = vld [vmem:[%s3370 + $0x60] sm:$0xe]
        %v4150 = vld [vmem:[%s3370 + $0x64] sm:$0xf]
        %v4151 = vld [vmem:[%s3370 + $0x68] sm:$0x1]
        %v4152 = vld [vmem:[%s3370 + $0x6c] sm:$0xe]
        %v4153 = vld [vmem:[%s3370 + $0x70] sm:$0xf]
        %v4154 = vld [vmem:[%s3370 + $0x74] sm:$0x1]
        %v4155 = vld [vmem:[%s3370 + $0x78] sm:$0xe]
        %v4156 = vld [vmem:[%s3370 + $0x7c] sm:$0xf]
        %v4157 = vld [vmem:[%s3370 + $0x80] sm:$0x1]
        %v4158 = vld [vmem:[%s3370 + $0x84] sm:$0xe]
        %v4159 = vld [vmem:[%s3370 + $0x88] sm:$0xf]
        %v4160 = vld [vmem:[%s3370 + $0x8c] sm:$0x1]
        %v4161 = vld [vmem:[%s3370 + $0x90] sm:$0xe]
        %v4162 = vld [vmem:[%s3370 + $0x94] sm:$0xf]
        %v4163 = vld [vmem:[%s3370 + $0x98] sm:$0x1]
        %v4164 = vld [vmem:[%s3370 + $0x9c] sm:$0xe]
        %v4165 = vld [vmem:[%s3370 + $0xa0] sm:$0xf]
        %v4166 = vld [vmem:[%s3370 + $0xa4] sm:$0x1]
        %v4167 = vld [vmem:[%s3370 + $0xa8] sm:$0xe]
        %v4168 = vld [vmem:[%s3370 + $0xac] sm:$0xf]
        %v4169 = vld [vmem:[%s3370 + $0xb0] sm:$0x1]
        %v4170 = vld [vmem:[%s3370 + $0xb4] sm:$0xe]
        %v4171 = vld [vmem:[%s3370 + $0xb8] sm:$0xf]
        %v4172 = vld [vmem:[%s3370 + $0xbc] sm:$0x1]
        %v4221 = vrot.slane %v4125, 5
        %v4222 = vrot.slane %v4221, 4
        %v4223 = vrot.slane %v4126, 5
        %v4224 = vsel %vm2037, %v4222, %v4223
        %v4225 = vrot.slane %v4223, 4
        %v4226 = vrot.slane %v4127, 5
        %v4227 = vsel %vm2037, %v4225, %v4226
        %v4228 = vrot.slane %v4128, 5
        %v4229 = vrot.slane %v4228, 4
        %v4230 = vrot.slane %v4129, 5
        %v4231 = vsel %vm2037, %v4229, %v4230
        %v4232 = vrot.slane %v4230, 4
        %v4233 = vrot.slane %v4130, 5
        %v4234 = vsel %vm2037, %v4232, %v4233
        %v4235 = vrot.slane %v4131, 5
        %v4236 = vrot.slane %v4235, 4
        %v4237 = vrot.slane %v4132, 5
        %v4238 = vsel %vm2037, %v4236, %v4237
        %v4239 = vrot.slane %v4237, 4
        %v4240 = vrot.slane %v4133, 5
        %v4241 = vsel %vm2037, %v4239, %v4240
        %v4242 = vrot.slane %v4134, 5
        %v4243 = vrot.slane %v4242, 4
        %v4244 = vrot.slane %v4135, 5
        %v4245 = vsel %vm2037, %v4243, %v4244
        %v4246 = vrot.slane %v4244, 4
        %v4247 = vrot.slane %v4136, 5
        %v4248 = vsel %vm2037, %v4246, %v4247
        %v4249 = vrot.slane %v4137, 5
        %v4250 = vrot.slane %v4249, 4
        %v4251 = vrot.slane %v4138, 5
        %v4252 = vsel %vm2037, %v4250, %v4251
        %v4253 = vrot.slane %v4251, 4
        %v4254 = vrot.slane %v4139, 5
        %v4255 = vsel %vm2037, %v4253, %v4254
        %v4256 = vrot.slane %v4140, 5
        %v4257 = vrot.slane %v4256, 4
        %v4258 = vrot.slane %v4141, 5
        %v4259 = vsel %vm2037, %v4257, %v4258
        %v4260 = vrot.slane %v4258, 4
        %v4261 = vrot.slane %v4142, 5
        %v4262 = vsel %vm2037, %v4260, %v4261
        %v4263 = vrot.slane %v4143, 5
        %v4264 = vrot.slane %v4263, 4
        %v4265 = vrot.slane %v4144, 5
        %v4266 = vsel %vm2037, %v4264, %v4265
        %v4267 = vrot.slane %v4265, 4
        %v4268 = vrot.slane %v4145, 5
        %v4269 = vsel %vm2037, %v4267, %v4268
        %v4270 = vrot.slane %v4146, 5
        %v4271 = vrot.slane %v4270, 4
        %v4272 = vrot.slane %v4147, 5
        %v4273 = vsel %vm2037, %v4271, %v4272
        %v4274 = vrot.slane %v4272, 4
        %v4275 = vrot.slane %v4148, 5
        %v4276 = vsel %vm2037, %v4274, %v4275
        %v4277 = vrot.slane %v4149, 5
        %v4278 = vrot.slane %v4277, 4
        %v4279 = vrot.slane %v4150, 5
        %v4280 = vsel %vm2037, %v4278, %v4279
        %v4281 = vrot.slane %v4279, 4
        %v4282 = vrot.slane %v4151, 5
        %v4283 = vsel %vm2037, %v4281, %v4282
        %v4284 = vrot.slane %v4152, 5
        %v4285 = vrot.slane %v4284, 4
        %v4286 = vrot.slane %v4153, 5
        %v4287 = vsel %vm2037, %v4285, %v4286
        %v4288 = vrot.slane %v4286, 4
        %v4289 = vrot.slane %v4154, 5
        %v4290 = vsel %vm2037, %v4288, %v4289
        %v4291 = vrot.slane %v4155, 5
        %v4292 = vrot.slane %v4291, 4
        %v4293 = vrot.slane %v4156, 5
        %v4294 = vsel %vm2037, %v4292, %v4293
        %v4295 = vrot.slane %v4293, 4
        %v4296 = vrot.slane %v4157, 5
        %v4297 = vsel %vm2037, %v4295, %v4296
        %v4298 = vrot.slane %v4158, 5
        %v4299 = vrot.slane %v4298, 4
        %v4300 = vrot.slane %v4159, 5
        %v4301 = vsel %vm2037, %v4299, %v4300
        %v4302 = vrot.slane %v4300, 4
        %v4303 = vrot.slane %v4160, 5
        %v4304 = vsel %vm2037, %v4302, %v4303
        %v4305 = vrot.slane %v4161, 5
        %v4306 = vrot.slane %v4305, 4
        %v4307 = vrot.slane %v4162, 5
        %v4308 = vsel %vm2037, %v4306, %v4307
        %v4309 = vrot.slane %v4307, 4
        %v4310 = vrot.slane %v4163, 5
        %v4311 = vsel %vm2037, %v4309, %v4310
        %v4312 = vrot.slane %v4164, 5
        %v4313 = vrot.slane %v4312, 4
        %v4314 = vrot.slane %v4165, 5
        %v4315 = vsel %vm2037, %v4313, %v4314
        %v4316 = vrot.slane %v4314, 4
        %v4317 = vrot.slane %v4166, 5
        %v4318 = vsel %vm2037, %v4316, %v4317
        %v4319 = vrot.slane %v4167, 5
        %v4320 = vrot.slane %v4319, 4
        %v4321 = vrot.slane %v4168, 5
        %v4322 = vsel %vm2037, %v4320, %v4321
        %v4323 = vrot.slane %v4321, 4
        %v4324 = vrot.slane %v4169, 5
        %v4325 = vsel %vm2037, %v4323, %v4324
        %v4326 = vrot.slane %v4170, 5
        %v4327 = vrot.slane %v4326, 4
        %v4328 = vrot.slane %v4171, 5
        %v4329 = vsel %vm2037, %v4327, %v4328
        %v4330 = vrot.slane %v4328, 4
        %v4331 = vrot.slane %v4172, 5
        %v4332 = vsel %vm2037, %v4330, %v4331
        %4333 = vrot.lane.b32.xlu0 %v4224, 32
        %v4334 = vpop.permute.xlu0 %4333
        %4335 = vrot.lane.b32.xlu0 %v4227, 32
        %v4336 = vpop.permute.xlu0 %4335
        %4337 = vrot.lane.b32.xlu0 %v4231, 32
        %v4338 = vpop.permute.xlu0 %4337
        %4339 = vrot.lane.b32.xlu0 %v4234, 32
        %v4340 = vpop.permute.xlu0 %4339
        %4341 = vrot.lane.b32.xlu0 %v4238, 32
        %v4342 = vpop.permute.xlu0 %4341
        %4343 = vrot.lane.b32.xlu0 %v4241, 32
        %v4344 = vpop.permute.xlu0 %4343
        %4345 = vrot.lane.b32.xlu0 %v4245, 32
        %v4346 = vpop.permute.xlu0 %4345
        %4347 = vrot.lane.b32.xlu0 %v4248, 32
        %v4348 = vpop.permute.xlu0 %4347
        %4349 = vrot.lane.b32.xlu0 %v4252, 32
        %v4350 = vpop.permute.xlu0 %4349
        %4351 = vrot.lane.b32.xlu0 %v4255, 32
        %v4352 = vpop.permute.xlu0 %4351
        %4353 = vrot.lane.b32.xlu0 %v4259, 32
        %v4354 = vpop.permute.xlu0 %4353
        %4355 = vrot.lane.b32.xlu0 %v4262, 32
        %v4356 = vpop.permute.xlu0 %4355
        %4357 = vrot.lane.b32.xlu0 %v4266, 32
        %v4358 = vpop.permute.xlu0 %4357
        %4359 = vrot.lane.b32.xlu0 %v4269, 32
        %v4360 = vpop.permute.xlu0 %4359
        %4361 = vrot.lane.b32.xlu0 %v4273, 32
        %v4362 = vpop.permute.xlu0 %4361
        %4363 = vrot.lane.b32.xlu0 %v4276, 32
        %v4364 = vpop.permute.xlu0 %4363
        %4365 = vrot.lane.b32.xlu0 %v4280, 32
        %v4366 = vpop.permute.xlu0 %4365
        %4367 = vrot.lane.b32.xlu0 %v4283, 32
        %v4368 = vpop.permute.xlu0 %4367
        %4369 = vrot.lane.b32.xlu0 %v4287, 32
        %v4370 = vpop.permute.xlu0 %4369
        %4371 = vrot.lane.b32.xlu0 %v4290, 32
        %v4372 = vpop.permute.xlu0 %4371
        %4373 = vrot.lane.b32.xlu0 %v4294, 32
        %v4374 = vpop.permute.xlu0 %4373
        %4375 = vrot.lane.b32.xlu0 %v4297, 32
        %v4376 = vpop.permute.xlu0 %4375
        %4377 = vrot.lane.b32.xlu0 %v4301, 32
        %v4378 = vpop.permute.xlu0 %4377
        %4379 = vrot.lane.b32.xlu0 %v4304, 32
        %v4380 = vpop.permute.xlu0 %4379
        %4381 = vrot.lane.b32.xlu0 %v4308, 32
        %v4382 = vpop.permute.xlu0 %4381
        %4383 = vrot.lane.b32.xlu0 %v4311, 32
        %v4384 = vpop.permute.xlu0 %4383
        %4385 = vrot.lane.b32.xlu0 %v4315, 32
        %v4386 = vpop.permute.xlu0 %4385
        %4387 = vrot.lane.b32.xlu0 %v4318, 32
        %v4388 = vpop.permute.xlu0 %4387
        %4389 = vrot.lane.b32.xlu0 %v4322, 32
        %v4390 = vpop.permute.xlu0 %4389
        %4391 = vrot.lane.b32.xlu0 %v4325, 32
        %v4392 = vpop.permute.xlu0 %4391
        %4393 = vrot.lane.b32.xlu0 %v4329, 32
        %v4394 = vpop.permute.xlu0 %4393
        %4395 = vrot.lane.b32.xlu0 %v4332, 32
        %v4396 = vpop.permute.xlu0 %4395
        %vm4429 = vcmask 290048
        %4430 = vst.msk [vmem:[#allocation3] sm:$0xf] %vm4429, %v4334
        %4431 = vst.msk [vmem:[#allocation3 + $0x4] sm:$0xf] %vm4429, %v4336
        %4432 = vst.msk [vmem:[#allocation3 + $0x8] sm:$0xf] %vm4429, %v4338
        %4433 = vst.msk [vmem:[#allocation3 + $0xc] sm:$0xf] %vm4429, %v4340
        %4434 = vst.msk [vmem:[#allocation3 + $0x10] sm:$0xf] %vm4429, %v4342
        %4435 = vst.msk [vmem:[#allocation3 + $0x14] sm:$0xf] %vm4429, %v4344
        %4436 = vst.msk [vmem:[#allocation3 + $0x18] sm:$0xf] %vm4429, %v4346
        %4437 = vst.msk [vmem:[#allocation3 + $0x1c] sm:$0xf] %vm4429, %v4348
        %4438 = vst.msk [vmem:[#allocation3 + $0x20] sm:$0xf] %vm4429, %v4350
        %4439 = vst.msk [vmem:[#allocation3 + $0x24] sm:$0xf] %vm4429, %v4352
        %4440 = vst.msk [vmem:[#allocation3 + $0x28] sm:$0xf] %vm4429, %v4354
        %4441 = vst.msk [vmem:[#allocation3 + $0x2c] sm:$0xf] %vm4429, %v4356
        %4442 = vst.msk [vmem:[#allocation3 + $0x30] sm:$0xf] %vm4429, %v4358
        %4443 = vst.msk [vmem:[#allocation3 + $0x34] sm:$0xf] %vm4429, %v4360
        %4444 = vst.msk [vmem:[#allocation3 + $0x38] sm:$0xf] %vm4429, %v4362
        %4445 = vst.msk [vmem:[#allocation3 + $0x3c] sm:$0xf] %vm4429, %v4364
        %4446 = vst.msk [vmem:[#allocation3 + $0x40] sm:$0xf] %vm4429, %v4366
        %4447 = vst.msk [vmem:[#allocation3 + $0x44] sm:$0xf] %vm4429, %v4368
        %4448 = vst.msk [vmem:[#allocation3 + $0x48] sm:$0xf] %vm4429, %v4370
        %4449 = vst.msk [vmem:[#allocation3 + $0x4c] sm:$0xf] %vm4429, %v4372
        %4450 = vst.msk [vmem:[#allocation3 + $0x50] sm:$0xf] %vm4429, %v4374
        %4451 = vst.msk [vmem:[#allocation3 + $0x54] sm:$0xf] %vm4429, %v4376
        %4452 = vst.msk [vmem:[#allocation3 + $0x58] sm:$0xf] %vm4429, %v4378
        %4453 = vst.msk [vmem:[#allocation3 + $0x5c] sm:$0xf] %vm4429, %v4380
        %4454 = vst.msk [vmem:[#allocation3 + $0x60] sm:$0xf] %vm4429, %v4382
        %4455 = vst.msk [vmem:[#allocation3 + $0x64] sm:$0xf] %vm4429, %v4384
        %4456 = vst.msk [vmem:[#allocation3 + $0x68] sm:$0xf] %vm4429, %v4386
        %4457 = vst.msk [vmem:[#allocation3 + $0x6c] sm:$0xf] %vm4429, %v4388
        %4458 = vst.msk [vmem:[#allocation3 + $0x70] sm:$0xf] %vm4429, %v4390
        %4459 = vst.msk [vmem:[#allocation3 + $0x74] sm:$0xf] %vm4429, %v4392
        %4460 = vst.msk [vmem:[#allocation3 + $0x78] sm:$0xf] %vm4429, %v4394
        %4461 = vst.msk [vmem:[#allocation3 + $0x7c] sm:$0xf] %vm4429, %v4396
        %v4462 = vld [vmem:[#allocation3] sm:$0xf]
        %v4463 = vld [vmem:[#allocation3 + $0x4] sm:$0xf]
        %v4464 = vld [vmem:[#allocation3 + $0x8] sm:$0xf]
        %v4465 = vld [vmem:[#allocation3 + $0xc] sm:$0xf]
        %v4466 = vld [vmem:[#allocation3 + $0x10] sm:$0xf]
        %v4467 = vld [vmem:[#allocation3 + $0x14] sm:$0xf]
        %v4468 = vld [vmem:[#allocation3 + $0x18] sm:$0xf]
        %v4469 = vld [vmem:[#allocation3 + $0x1c] sm:$0xf]
        %v4470 = vld [vmem:[#allocation3 + $0x20] sm:$0xf]
        %v4471 = vld [vmem:[#allocation3 + $0x24] sm:$0xf]
        %v4472 = vld [vmem:[#allocation3 + $0x28] sm:$0xf]
        %v4473 = vld [vmem:[#allocation3 + $0x2c] sm:$0xf]
        %v4474 = vld [vmem:[#allocation3 + $0x30] sm:$0xf]
        %v4475 = vld [vmem:[#allocation3 + $0x34] sm:$0xf]
        %v4476 = vld [vmem:[#allocation3 + $0x38] sm:$0xf]
        %v4477 = vld [vmem:[#allocation3 + $0x3c] sm:$0xf]
        %v4478 = vld [vmem:[#allocation3 + $0x40] sm:$0xf]
        %v4479 = vld [vmem:[#allocation3 + $0x44] sm:$0xf]
        %v4480 = vld [vmem:[#allocation3 + $0x48] sm:$0xf]
        %v4481 = vld [vmem:[#allocation3 + $0x4c] sm:$0xf]
        %v4482 = vld [vmem:[#allocation3 + $0x50] sm:$0xf]
        %v4483 = vld [vmem:[#allocation3 + $0x54] sm:$0xf]
        %v4484 = vld [vmem:[#allocation3 + $0x58] sm:$0xf]
        %v4485 = vld [vmem:[#allocation3 + $0x5c] sm:$0xf]
        %v4486 = vld [vmem:[#allocation3 + $0x60] sm:$0xf]
        %v4487 = vld [vmem:[#allocation3 + $0x64] sm:$0xf]
        %v4488 = vld [vmem:[#allocation3 + $0x68] sm:$0xf]
        %v4489 = vld [vmem:[#allocation3 + $0x6c] sm:$0xf]
        %v4490 = vld [vmem:[#allocation3 + $0x70] sm:$0xf]
        %v4491 = vld [vmem:[#allocation3 + $0x74] sm:$0xf]
        %v4492 = vld [vmem:[#allocation3 + $0x78] sm:$0xf]
        %v4493 = vld [vmem:[#allocation3 + $0x7c] sm:$0xf]
        %v4494 = vld [vmem:[%s3] sm:$0xf]
        %v4495 = vld [vmem:[%s3 + $0x4] sm:$0xf]
        %v4496 = vld [vmem:[%s3 + $0x8] sm:$0xf]
        %v4497 = vld [vmem:[%s3 + $0xc] sm:$0xf]
        %v4498 = vld [vmem:[%s3 + $0x10] sm:$0x3]
        %v4499 = vld [vmem:[%s4] sm:$0x1]
        %v4501 = vperm.slane %v4499, 0
        %v4535 = vunpack.c.l.b16 %v4462
        %v4536 = vunpack.c.l.b16 %v4463
        %v4537 = vunpack.c.l.b16 %v4464
        %v4538 = vunpack.c.l.b16 %v4465
        %v4539 = vunpack.c.l.b16 %v4466
        %v4540 = vunpack.c.l.b16 %v4467
        %v4541 = vunpack.c.l.b16 %v4468
        %v4542 = vunpack.c.l.b16 %v4469
        %v4543 = vunpack.c.l.b16 %v4470
        %v4544 = vunpack.c.l.b16 %v4471
        %v4545 = vunpack.c.l.b16 %v4472
        %v4546 = vunpack.c.l.b16 %v4473
        %v4547 = vunpack.c.l.b16 %v4474
        %v4548 = vunpack.c.l.b16 %v4475
        %v4549 = vunpack.c.l.b16 %v4476
        %v4550 = vunpack.c.l.b16 %v4477
        %v4551 = vunpack.c.l.b16 %v4478
        %v4552 = vunpack.c.l.b16 %v4479
        %v4553 = vunpack.c.l.b16 %v4480
        %v4554 = vunpack.c.l.b16 %v4481
        %v4555 = vunpack.c.l.b16 %v4482
        %v4556 = vunpack.c.l.b16 %v4483
        %v4557 = vunpack.c.l.b16 %v4484
        %v4558 = vunpack.c.l.b16 %v4485
        %v4559 = vunpack.c.l.b16 %v4486
        %v4560 = vunpack.c.l.b16 %v4487
        %v4561 = vunpack.c.l.b16 %v4488
        %v4562 = vunpack.c.l.b16 %v4489
        %v4563 = vunpack.c.l.b16 %v4490
        %v4564 = vunpack.c.l.b16 %v4491
        %v4565 = vunpack.c.l.b16 %v4492
        %v4566 = vunpack.c.l.b16 %v4493
        %v4567 = vpack.c.b16 %v4536, %v4535
        %v4568 = vpack.c.b16 %v4538, %v4537
        %v4569 = vpack.c.b16 %v4540, %v4539
        %v4570 = vpack.c.b16 %v4542, %v4541
        %v4571 = vpack.c.b16 %v4544, %v4543
        %v4572 = vpack.c.b16 %v4546, %v4545
        %v4573 = vpack.c.b16 %v4548, %v4547
        %v4574 = vpack.c.b16 %v4550, %v4549
        %v4575 = vpack.c.b16 %v4552, %v4551
        %v4576 = vpack.c.b16 %v4554, %v4553
        %v4577 = vpack.c.b16 %v4556, %v4555
        %v4578 = vpack.c.b16 %v4558, %v4557
        %v4579 = vpack.c.b16 %v4560, %v4559
        %v4580 = vpack.c.b16 %v4562, %v4561
        %v4581 = vpack.c.b16 %v4564, %v4563
        %v4582 = vpack.c.b16 %v4566, %v4565
        %v4588 = vunpack.c.l.b16 %v4494
        %v4589 = vunpack.c.l.b16 %v4495
        %v4590 = vunpack.c.l.b16 %v4496
        %v4591 = vunpack.c.l.b16 %v4497
        %v4592 = vunpack.c.l.b16 %v4498
        %v4593 = vpack.c.b16 %v4589, %v4588
        %v4594 = vpack.c.b16 %v4591, %v4590
        %v4595 = vpack.c.b16 %v4592, %v4592
        %vm4598 = vcmask 293888
        %v4600 = vsel %vm4598, %v4567, 0
        %v4603 = vsel %vm4598, %v4568, 0
        %v4606 = vsel %vm4598, %v4569, 0
        %v4609 = vsel %vm4598, %v4570, 0
        %v4612 = vsel %vm4598, %v4571, 0
        %v4615 = vsel %vm4598, %v4572, 0
        %v4618 = vsel %vm4598, %v4573, 0
        %v4621 = vsel %vm4598, %v4574, 0
        %v4624 = vsel %vm4598, %v4575, 0
        %v4627 = vsel %vm4598, %v4576, 0
        %v4630 = vsel %vm4598, %v4577, 0
        %v4633 = vsel %vm4598, %v4578, 0
        %v4636 = vsel %vm4598, %v4579, 0
        %v4639 = vsel %vm4598, %v4580, 0
        %v4642 = vsel %vm4598, %v4581, 0
        %v4645 = vsel %vm4598, %v4582, 0
        %v4648 = vsel %vm498, %v4595, 0
        %4650 = vmatpush.bf16.msra.mxu0 0
        %4651 = vmatpush.bf16.msra.mxu0 0
        %4652 = vmatpush.bf16.msra.mxu0 0
        %4653 = vmatpush.bf16.msra.mxu0 0
        %4654 = vmatpush.bf16.msra.mxu0 0
        %4655 = vmatpush.bf16.msra.mxu0 %v4648
        %4656 = vmatpush.bf16.msra.mxu0 %v4594
        %4657 = vmatpush.bf16.msra.mxu0 %v4593
        %4658 = vmatmul.bf16.gmra.mxu0 %v4600
        %v4659 = vpop.f32.mrf.mxu0
        %v4660 = vadd.f32 %v4501, %v4659
        %v4661 = vpop.f32.mrf.mxu0
        %v4662 = vadd.f32 %v4501, %v4661
        %4663 = vmatmul.bf16.gmra.mxu0 %v4603
        %v4664 = vpop.f32.mrf.mxu0
        %v4665 = vadd.f32 %v4501, %v4664
        %v4666 = vpop.f32.mrf.mxu0
        %v4667 = vadd.f32 %v4501, %v4666
        %4668 = vmatmul.bf16.gmra.mxu0 %v4606
        %v4669 = vpop.f32.mrf.mxu0
        %v4670 = vadd.f32 %v4501, %v4669
        %v4671 = vpop.f32.mrf.mxu0
        %v4672 = vadd.f32 %v4501, %v4671
        %4673 = vmatmul.bf16.gmra.mxu0 %v4609
        %v4674 = vpop.f32.mrf.mxu0
        %v4675 = vadd.f32 %v4501, %v4674
        %v4676 = vpop.f32.mrf.mxu0
        %v4677 = vadd.f32 %v4501, %v4676
        %4678 = vmatmul.bf16.gmra.mxu0 %v4612
        %v4679 = vpop.f32.mrf.mxu0
        %v4680 = vadd.f32 %v4501, %v4679
        %v4681 = vpop.f32.mrf.mxu0
        %v4682 = vadd.f32 %v4501, %v4681
        %4683 = vmatmul.bf16.gmra.mxu0 %v4615
        %v4684 = vpop.f32.mrf.mxu0
        %v4685 = vadd.f32 %v4501, %v4684
        %v4686 = vpop.f32.mrf.mxu0
        %v4687 = vadd.f32 %v4501, %v4686
        %4688 = vmatmul.bf16.gmra.mxu0 %v4618
        %v4689 = vpop.f32.mrf.mxu0
        %v4690 = vadd.f32 %v4501, %v4689
        %v4691 = vpop.f32.mrf.mxu0
        %v4692 = vadd.f32 %v4501, %v4691
        %4693 = vmatmul.bf16.gmra.mxu0 %v4621
        %v4694 = vpop.f32.mrf.mxu0
        %v4695 = vadd.f32 %v4501, %v4694
        %v4696 = vpop.f32.mrf.mxu0
        %v4697 = vadd.f32 %v4501, %v4696
        %4698 = vmatmul.bf16.gmra.mxu0 %v4624
        %v4699 = vpop.f32.mrf.mxu0
        %v4700 = vadd.f32 %v4501, %v4699
        %v4701 = vpop.f32.mrf.mxu0
        %v4702 = vadd.f32 %v4501, %v4701
        %4703 = vmatmul.bf16.gmra.mxu0 %v4627
        %v4704 = vpop.f32.mrf.mxu0
        %v4705 = vadd.f32 %v4501, %v4704
        %v4706 = vpop.f32.mrf.mxu0
        %v4707 = vadd.f32 %v4501, %v4706
        %4708 = vmatmul.bf16.gmra.mxu0 %v4630
        %v4709 = vpop.f32.mrf.mxu0
        %v4710 = vadd.f32 %v4501, %v4709
        %v4711 = vpop.f32.mrf.mxu0
        %v4712 = vadd.f32 %v4501, %v4711
        %4713 = vmatmul.bf16.gmra.mxu0 %v4633
        %v4714 = vpop.f32.mrf.mxu0
        %v4715 = vadd.f32 %v4501, %v4714
        %v4716 = vpop.f32.mrf.mxu0
        %v4717 = vadd.f32 %v4501, %v4716
        %4718 = vmatmul.bf16.gmra.mxu0 %v4636
        %v4719 = vpop.f32.mrf.mxu0
        %v4720 = vadd.f32 %v4501, %v4719
        %v4721 = vpop.f32.mrf.mxu0
        %v4722 = vadd.f32 %v4501, %v4721
        %4723 = vmatmul.bf16.gmra.mxu0 %v4639
        %v4724 = vpop.f32.mrf.mxu0
        %v4725 = vadd.f32 %v4501, %v4724
        %v4726 = vpop.f32.mrf.mxu0
        %v4727 = vadd.f32 %v4501, %v4726
        %4728 = vmatmul.bf16.gmra.mxu0 %v4642
        %v4729 = vpop.f32.mrf.mxu0
        %v4730 = vadd.f32 %v4501, %v4729
        %v4731 = vpop.f32.mrf.mxu0
        %v4732 = vadd.f32 %v4501, %v4731
        %4733 = vmatmul.bf16.gmra.mxu0 %v4645
        %v4734 = vpop.f32.mrf.mxu0
        %v4735 = vadd.f32 %v4501, %v4734
        %v4736 = vpop.f32.mrf.mxu0
        %v4737 = vadd.f32 %v4501, %v4736
        %4738 = vdwg.mxu0
        %v4739 = vmax.f32 %v4660, 0.0
        %v4740 = vmax.f32 %v4662, 0.0
        %v4741 = vmax.f32 %v4665, 0.0
        %v4742 = vmax.f32 %v4667, 0.0
        %v4743 = vmax.f32 %v4670, 0.0
        %v4744 = vmax.f32 %v4672, 0.0
        %v4745 = vmax.f32 %v4675, 0.0
        %v4746 = vmax.f32 %v4677, 0.0
        %v4747 = vmax.f32 %v4680, 0.0
        %v4748 = vmax.f32 %v4682, 0.0
        %v4749 = vmax.f32 %v4685, 0.0
        %v4750 = vmax.f32 %v4687, 0.0
        %v4751 = vmax.f32 %v4690, 0.0
        %v4752 = vmax.f32 %v4692, 0.0
        %v4753 = vmax.f32 %v4695, 0.0
        %v4754 = vmax.f32 %v4697, 0.0
        %v4755 = vmax.f32 %v4700, 0.0
        %v4756 = vmax.f32 %v4702, 0.0
        %v4757 = vmax.f32 %v4705, 0.0
        %v4758 = vmax.f32 %v4707, 0.0
        %v4759 = vmax.f32 %v4710, 0.0
        %v4760 = vmax.f32 %v4712, 0.0
        %v4761 = vmax.f32 %v4715, 0.0
        %v4762 = vmax.f32 %v4717, 0.0
        %v4763 = vmax.f32 %v4720, 0.0
        %v4764 = vmax.f32 %v4722, 0.0
        %v4765 = vmax.f32 %v4725, 0.0
        %v4766 = vmax.f32 %v4727, 0.0
        %v4767 = vmax.f32 %v4730, 0.0
        %v4768 = vmax.f32 %v4732, 0.0
        %v4769 = vmax.f32 %v4735, 0.0
        %v4770 = vmax.f32 %v4737, 0.0
        %v4771 = vpack.c.bf16 %v4740, %v4739
        %v4772 = vpack.c.bf16 %v4742, %v4741
        %v4773 = vpack.c.bf16 %v4744, %v4743
        %v4774 = vpack.c.bf16 %v4746, %v4745
        %v4775 = vpack.c.bf16 %v4748, %v4747
        %v4776 = vpack.c.bf16 %v4750, %v4749
        %v4777 = vpack.c.bf16 %v4752, %v4751
        %v4778 = vpack.c.bf16 %v4754, %v4753
        %v4779 = vpack.c.bf16 %v4756, %v4755
        %v4780 = vpack.c.bf16 %v4758, %v4757
        %v4781 = vpack.c.bf16 %v4760, %v4759
        %v4782 = vpack.c.bf16 %v4762, %v4761
        %v4783 = vpack.c.bf16 %v4764, %v4763
        %v4784 = vpack.c.bf16 %v4766, %v4765
        %v4785 = vpack.c.bf16 %v4768, %v4767
        %v4786 = vpack.c.bf16 %v4770, %v4769
        %v4787 = vld [vmem:[%s5] sm:$0x3]
        %v4788 = vld [vmem:[%s6] sm:$0x1]
        %v4790 = vperm.slane %v4788, 0
        %v4793 = vsel %vm449, %v4771, 0
        %v4796 = vsel %vm449, %v4772, 0
        %v4799 = vsel %vm449, %v4773, 0
        %v4802 = vsel %vm449, %v4774, 0
        %v4805 = vsel %vm449, %v4775, 0
        %v4808 = vsel %vm449, %v4776, 0
        %v4811 = vsel %vm449, %v4777, 0
        %v4814 = vsel %vm449, %v4778, 0
        %v4817 = vsel %vm449, %v4779, 0
        %v4820 = vsel %vm449, %v4780, 0
        %v4823 = vsel %vm449, %v4781, 0
        %v4826 = vsel %vm449, %v4782, 0
        %v4829 = vsel %vm449, %v4783, 0
        %v4832 = vsel %vm449, %v4784, 0
        %v4835 = vsel %vm449, %v4785, 0
        %v4838 = vsel %vm449, %v4786, 0
        %v4841 = vsel %vm498, %v4787, 0
        %4843 = vmatpush.bf16.msra.mxu0 0
        %4844 = vmatpush.bf16.msra.mxu0 0
        %4845 = vmatpush.bf16.msra.mxu0 0
        %4846 = vmatpush.bf16.msra.mxu0 0
        %4847 = vmatpush.bf16.msra.mxu0 0
        %4848 = vmatpush.bf16.msra.mxu0 0
        %4849 = vmatpush.bf16.msra.mxu0 0
        %4850 = vmatpush.bf16.msra.mxu0 %v4841
        %4851 = vmatmul.bf16.gmra.mxu0 %v4793
        %v4852 = vpop.f32.mrf.mxu0
        %v4853 = vadd.f32 %v4790, %v4852
        %v4854 = vpop.f32.mrf.mxu0
        %v4855 = vadd.f32 %v4790, %v4854
        %4856 = vmatmul.bf16.gmra.mxu0 %v4796
        %v4857 = vpop.f32.mrf.mxu0
        %v4858 = vadd.f32 %v4790, %v4857
        %v4859 = vpop.f32.mrf.mxu0
        %v4860 = vadd.f32 %v4790, %v4859
        %4861 = vmatmul.bf16.gmra.mxu0 %v4799
        %v4862 = vpop.f32.mrf.mxu0
        %v4863 = vadd.f32 %v4790, %v4862
        %v4864 = vpop.f32.mrf.mxu0
        %v4865 = vadd.f32 %v4790, %v4864
        %4866 = vmatmul.bf16.gmra.mxu0 %v4802
        %v4867 = vpop.f32.mrf.mxu0
        %v4868 = vadd.f32 %v4790, %v4867
        %v4869 = vpop.f32.mrf.mxu0
        %v4870 = vadd.f32 %v4790, %v4869
        %4871 = vmatmul.bf16.gmra.mxu0 %v4805
        %v4872 = vpop.f32.mrf.mxu0
        %v4873 = vadd.f32 %v4790, %v4872
        %v4874 = vpop.f32.mrf.mxu0
        %v4875 = vadd.f32 %v4790, %v4874
        %4876 = vmatmul.bf16.gmra.mxu0 %v4808
        %v4877 = vpop.f32.mrf.mxu0
        %v4878 = vadd.f32 %v4790, %v4877
        %v4879 = vpop.f32.mrf.mxu0
        %v4880 = vadd.f32 %v4790, %v4879
        %4881 = vmatmul.bf16.gmra.mxu0 %v4811
        %v4882 = vpop.f32.mrf.mxu0
        %v4883 = vadd.f32 %v4790, %v4882
        %v4884 = vpop.f32.mrf.mxu0
        %v4885 = vadd.f32 %v4790, %v4884
        %4886 = vmatmul.bf16.gmra.mxu0 %v4814
        %v4887 = vpop.f32.mrf.mxu0
        %v4888 = vadd.f32 %v4790, %v4887
        %v4889 = vpop.f32.mrf.mxu0
        %v4890 = vadd.f32 %v4790, %v4889
        %4891 = vmatmul.bf16.gmra.mxu0 %v4817
        %v4892 = vpop.f32.mrf.mxu0
        %v4893 = vadd.f32 %v4790, %v4892
        %v4894 = vpop.f32.mrf.mxu0
        %v4895 = vadd.f32 %v4790, %v4894
        %4896 = vmatmul.bf16.gmra.mxu0 %v4820
        %v4897 = vpop.f32.mrf.mxu0
        %v4898 = vadd.f32 %v4790, %v4897
        %v4899 = vpop.f32.mrf.mxu0
        %v4900 = vadd.f32 %v4790, %v4899
        %4901 = vmatmul.bf16.gmra.mxu0 %v4823
        %v4902 = vpop.f32.mrf.mxu0
        %v4903 = vadd.f32 %v4790, %v4902
        %v4904 = vpop.f32.mrf.mxu0
        %v4905 = vadd.f32 %v4790, %v4904
        %4906 = vmatmul.bf16.gmra.mxu0 %v4826
        %v4907 = vpop.f32.mrf.mxu0
        %v4908 = vadd.f32 %v4790, %v4907
        %v4909 = vpop.f32.mrf.mxu0
        %v4910 = vadd.f32 %v4790, %v4909
        %4911 = vmatmul.bf16.gmra.mxu0 %v4829
        %v4912 = vpop.f32.mrf.mxu0
        %v4913 = vadd.f32 %v4790, %v4912
        %v4914 = vpop.f32.mrf.mxu0
        %v4915 = vadd.f32 %v4790, %v4914
        %4916 = vmatmul.bf16.gmra.mxu0 %v4832
        %v4917 = vpop.f32.mrf.mxu0
        %v4918 = vadd.f32 %v4790, %v4917
        %v4919 = vpop.f32.mrf.mxu0
        %v4920 = vadd.f32 %v4790, %v4919
        %4921 = vmatmul.bf16.gmra.mxu0 %v4835
        %v4922 = vpop.f32.mrf.mxu0
        %v4923 = vadd.f32 %v4790, %v4922
        %v4924 = vpop.f32.mrf.mxu0
        %v4925 = vadd.f32 %v4790, %v4924
        %4926 = vmatmul.bf16.gmra.mxu0 %v4838
        %v4927 = vpop.f32.mrf.mxu0
        %v4928 = vadd.f32 %v4790, %v4927
        %v4929 = vpop.f32.mrf.mxu0
        %v4930 = vadd.f32 %v4790, %v4929
        %4931 = vdwg.mxu0
        %v4932 = vadd.f32 %v4853, %v512
        %v4933 = vadd.f32 %v4855, %v514
        %v4934 = vadd.f32 %v4858, %v517
        %v4935 = vadd.f32 %v4860, %v519
        %v4936 = vadd.f32 %v4863, %v522
        %v4937 = vadd.f32 %v4865, %v524
        %v4938 = vadd.f32 %v4868, %v527
        %v4939 = vadd.f32 %v4870, %v529
        %v4940 = vadd.f32 %v4873, %v532
        %v4941 = vadd.f32 %v4875, %v534
        %v4942 = vadd.f32 %v4878, %v537
        %v4943 = vadd.f32 %v4880, %v539
        %v4944 = vadd.f32 %v4883, %v542
        %v4945 = vadd.f32 %v4885, %v544
        %v4946 = vadd.f32 %v4888, %v547
        %v4947 = vadd.f32 %v4890, %v549
        %v4948 = vadd.f32 %v4893, %v552
        %v4949 = vadd.f32 %v4895, %v554
        %v4950 = vadd.f32 %v4898, %v557
        %v4951 = vadd.f32 %v4900, %v559
        %v4952 = vadd.f32 %v4903, %v562
        %v4953 = vadd.f32 %v4905, %v564
        %v4954 = vadd.f32 %v4908, %v567
        %v4955 = vadd.f32 %v4910, %v569
        %v4956 = vadd.f32 %v4913, %v572
        %v4957 = vadd.f32 %v4915, %v574
        %v4958 = vadd.f32 %v4918, %v577
        %v4959 = vadd.f32 %v4920, %v579
        %v4960 = vadd.f32 %v4923, %v582
        %v4961 = vadd.f32 %v4925, %v584
        %v4962 = vadd.f32 %v4928, %v587
        %v4963 = vadd.f32 %v4930, %v589
        %v4964 = vmax.f32 %v4932, 0.0
        %v4965 = vmax.f32 %v4933, 0.0
        %v4966 = vmax.f32 %v4934, 0.0
        %v4967 = vmax.f32 %v4935, 0.0
        %v4968 = vmax.f32 %v4936, 0.0
        %v4969 = vmax.f32 %v4937, 0.0
        %v4970 = vmax.f32 %v4938, 0.0
        %v4971 = vmax.f32 %v4939, 0.0
        %v4972 = vmax.f32 %v4940, 0.0
        %v4973 = vmax.f32 %v4941, 0.0
        %v4974 = vmax.f32 %v4942, 0.0
        %v4975 = vmax.f32 %v4943, 0.0
        %v4976 = vmax.f32 %v4944, 0.0
        %v4977 = vmax.f32 %v4945, 0.0
        %v4978 = vmax.f32 %v4946, 0.0
        %v4979 = vmax.f32 %v4947, 0.0
        %v4980 = vmax.f32 %v4948, 0.0
        %v4981 = vmax.f32 %v4949, 0.0
        %v4982 = vmax.f32 %v4950, 0.0
        %v4983 = vmax.f32 %v4951, 0.0
        %v4984 = vmax.f32 %v4952, 0.0
        %v4985 = vmax.f32 %v4953, 0.0
        %v4986 = vmax.f32 %v4954, 0.0
        %v4987 = vmax.f32 %v4955, 0.0
        %v4988 = vmax.f32 %v4956, 0.0
        %v4989 = vmax.f32 %v4957, 0.0
        %v4990 = vmax.f32 %v4958, 0.0
        %v4991 = vmax.f32 %v4959, 0.0
        %v4992 = vmax.f32 %v4960, 0.0
        %v4993 = vmax.f32 %v4961, 0.0
        %v4994 = vmax.f32 %v4962, 0.0
        %v4995 = vmax.f32 %v4963, 0.0
        %v4996 = vpack.c.bf16 %v4964, %v4964
        %v4997 = vpack.c.bf16 %v4965, %v4965
        %v4998 = vpack.c.bf16 %v4966, %v4966
        %v4999 = vpack.c.bf16 %v4967, %v4967
        %v5000 = vpack.c.bf16 %v4968, %v4968
        %v5001 = vpack.c.bf16 %v4969, %v4969
        %v5002 = vpack.c.bf16 %v4970, %v4970
        %v5003 = vpack.c.bf16 %v4971, %v4971
        %v5004 = vpack.c.bf16 %v4972, %v4972
        %v5005 = vpack.c.bf16 %v4973, %v4973
        %v5006 = vpack.c.bf16 %v4974, %v4974
        %v5007 = vpack.c.bf16 %v4975, %v4975
        %v5008 = vpack.c.bf16 %v4976, %v4976
        %v5009 = vpack.c.bf16 %v4977, %v4977
        %v5010 = vpack.c.bf16 %v4978, %v4978
        %v5011 = vpack.c.bf16 %v4979, %v4979
        %v5012 = vpack.c.bf16 %v4980, %v4980
        %v5013 = vpack.c.bf16 %v4981, %v4981
        %v5014 = vpack.c.bf16 %v4982, %v4982
        %v5015 = vpack.c.bf16 %v4983, %v4983
        %v5016 = vpack.c.bf16 %v4984, %v4984
        %v5017 = vpack.c.bf16 %v4985, %v4985
        %v5018 = vpack.c.bf16 %v4986, %v4986
        %v5019 = vpack.c.bf16 %v4987, %v4987
        %v5020 = vpack.c.bf16 %v4988, %v4988
        %v5021 = vpack.c.bf16 %v4989, %v4989
        %v5022 = vpack.c.bf16 %v4990, %v4990
        %v5023 = vpack.c.bf16 %v4991, %v4991
        %v5024 = vpack.c.bf16 %v4992, %v4992
        %v5025 = vpack.c.bf16 %v4993, %v4993
        %v5026 = vpack.c.bf16 %v4994, %v4994
        %v5027 = vpack.c.bf16 %v4995, %v4995
        %vm5028 = vcmask 125952
        %5029 = vst.msk [vmem:[%s325] sm:$0xf] %vm5028, %v4996
        %5030 = vst.msk [vmem:[%s325 + $0x4] sm:$0xf] %vm5028, %v4997
        %5031 = vst.msk [vmem:[%s325 + $0x8] sm:$0xf] %vm5028, %v4998
        %5032 = vst.msk [vmem:[%s325 + $0xc] sm:$0xf] %vm5028, %v4999
        %5033 = vst.msk [vmem:[%s325 + $0x10] sm:$0xf] %vm5028, %v5000
        %5034 = vst.msk [vmem:[%s325 + $0x14] sm:$0xf] %vm5028, %v5001
        %5035 = vst.msk [vmem:[%s325 + $0x18] sm:$0xf] %vm5028, %v5002
        %5036 = vst.msk [vmem:[%s325 + $0x1c] sm:$0xf] %vm5028, %v5003
        %5037 = vst.msk [vmem:[%s325 + $0x20] sm:$0xf] %vm5028, %v5004
        %5038 = vst.msk [vmem:[%s325 + $0x24] sm:$0xf] %vm5028, %v5005
        %5039 = vst.msk [vmem:[%s325 + $0x28] sm:$0xf] %vm5028, %v5006
        %5040 = vst.msk [vmem:[%s325 + $0x2c] sm:$0xf] %vm5028, %v5007
        %5041 = vst.msk [vmem:[%s325 + $0x30] sm:$0xf] %vm5028, %v5008
        %5042 = vst.msk [vmem:[%s325 + $0x34] sm:$0xf] %vm5028, %v5009
        %5043 = vst.msk [vmem:[%s325 + $0x38] sm:$0xf] %vm5028, %v5010
        %5044 = vst.msk [vmem:[%s325 + $0x3c] sm:$0xf] %vm5028, %v5011
        %5045 = vst.msk [vmem:[%s325 + $0x40] sm:$0xf] %vm5028, %v5012
        %5046 = vst.msk [vmem:[%s325 + $0x44] sm:$0xf] %vm5028, %v5013
        %5047 = vst.msk [vmem:[%s325 + $0x48] sm:$0xf] %vm5028, %v5014
        %5048 = vst.msk [vmem:[%s325 + $0x4c] sm:$0xf] %vm5028, %v5015
        %5049 = vst.msk [vmem:[%s325 + $0x50] sm:$0xf] %vm5028, %v5016
        %5050 = vst.msk [vmem:[%s325 + $0x54] sm:$0xf] %vm5028, %v5017
        %5051 = vst.msk [vmem:[%s325 + $0x58] sm:$0xf] %vm5028, %v5018
        %5052 = vst.msk [vmem:[%s325 + $0x5c] sm:$0xf] %vm5028, %v5019
        %5053 = vst.msk [vmem:[%s325 + $0x60] sm:$0xf] %vm5028, %v5020
        %5054 = vst.msk [vmem:[%s325 + $0x64] sm:$0xf] %vm5028, %v5021
        %5055 = vst.msk [vmem:[%s325 + $0x68] sm:$0xf] %vm5028, %v5022
        %5056 = vst.msk [vmem:[%s325 + $0x6c] sm:$0xf] %vm5028, %v5023
        %5057 = vst.msk [vmem:[%s325 + $0x70] sm:$0xf] %vm5028, %v5024
        %5058 = vst.msk [vmem:[%s325 + $0x74] sm:$0xf] %vm5028, %v5025
        %5059 = vst.msk [vmem:[%s325 + $0x78] sm:$0xf] %vm5028, %v5026
        %5060 = vst.msk [vmem:[%s325 + $0x7c] sm:$0xf] %vm5028, %v5027
        %s5061 = sand.u32 %s225, 1
        %s5062 = scalar_lea.sflag [#allocation5], %s5061
        %s5063 = sand.u32 %s225, 1
        %s5064 = smul.addr %s5063, 128
        %s5065 = scalar_lea.vmem [#allocation4], %s5064
        // Predicated region
        $region57: #{tpu_custom_call.1} parent=55 // pred_check
          %p5066 = pneg %p235
        $region58: #{tpu_custom_call.1} parent=55 // pred_check_branch
          %5068 = sbr.rel (%p5066) target = $region60
        $region59: #{tpu_custom_call.1} parent=55 // pred_region
          %5070 = vsyncadd %s5062, 0
          %s5071 = smul.addr %s23, 32
          %s5072 = smul.addr %s5071, 4
          %s5073 = scalar_lea.hbm %s9, %s5072
          %s5074 = sshll.u32 %s5065, 4
          %s5075 = int_to_ptr.vmem [resolvable:$true] %s5074
          %s5076 = sshll.u32 %s5073, 4
          %s5077 = int_to_ptr.hbm [resolvable:$true] %s5076
          %5082 = dma.vmem_to_hbm [thread:$0]  %s5075, 2048, %s5077, %s5062, 64, 64, 4
        $region60: #{tpu_custom_call.1} parent=55 // pred_fallthru
          _
      $region56: #{tpu_custom_call.1} parent=5 // pred_fallthru
        _
      %p5083 = scmp.le.s32.totalorder 2, %s18
      // Predicated region
      $region61: #{tpu_custom_call.1} parent=5 // pred_check
        %p5084 = pneg %p5083
      $region62: #{tpu_custom_call.1} parent=5 // pred_check_branch
        %5086 = sbr.rel (%p5084) target = $region64
      $region63: #{tpu_custom_call.1} parent=5 // pred_region
        %s5087 = ssub.s32 %s18, 2
        // Predicated region
        $region65: #{tpu_custom_call.1} parent=63 // pred_check
          %p5088 = pneg %p241
        $region66: #{tpu_custom_call.1} parent=63 // pred_check_branch
          %5090 = sbr.rel (%p5088) target = $region68
        $region67: #{tpu_custom_call.1} parent=63 // pred_region
          %s5091 = sand.u32 %s226, 1
          %s5092 = scalar_lea.sflag [#allocation5], %s5091
          %s5093 = sand.u32 %s226, 1
          %s5094 = smul.addr %s5093, 128
          %s5095 = scalar_lea.vmem [#allocation4], %s5094
          %5097 = dma.done %s5092, 2048
        $region68: #{tpu_custom_call.1} parent=63 // pred_fallthru
          _
      $region64: #{tpu_custom_call.1} parent=5 // pred_fallthru
        _
    $region6: #{tpu_custom_call.1} parent=1 // loop_footer
      %s22 = sadd.s32 1, %s18
    $region7: #{tpu_custom_call.1} parent=1 // loop_footer_branch
      %17 = sbr.rel target = $region3
    $region8: #{tpu_custom_call.1} parent=1 // loop_exit
      _
    %5098 = vsyncpa [#allocation5], 1
    %s5099 = scalar_lea.sflag [#allocation5], 1
    %5100 = vsyncpa %s5099, 1

</llo_original>
